<compile_context>
chip_gen: v5e
topology: v5e:2x2
jax: 0.10.0
libtpu: 0.0.40
codegen_flags: <defaults>
</compile_context>

<pallas_src>
import jax
import jax.numpy as jnp
from jax.experimental import pallas as pl
from jax.experimental.pallas import tpu as pltpu


def decoder_kernel(z_ref,
                   w1_ref, b1_ref,
                   w2_ref, b2_ref,
                   w3_ref, b3_ref,
                   w4_ref, b4_ref,
                   o_ref):
    cdt = w1_ref.dtype  # bf16 compute dtype for MXU inputs

    # fc5 + ReLU (bias add in f32, cast to bf16 immediately -> smaller live intermediate)
    h = jnp.dot(z_ref[...], w1_ref[...], preferred_element_type=jnp.float32)
    h = jnp.maximum(h + b1_ref[...], 0.0).astype(cdt)
    # fc6 + ReLU
    h = jnp.dot(h, w2_ref[...], preferred_element_type=jnp.float32)
    h = jnp.maximum(h + b2_ref[...], 0.0).astype(cdt)
    # fc7 + ReLU
    h = jnp.dot(h, w3_ref[...], preferred_element_type=jnp.float32)
    h = jnp.maximum(h + b3_ref[...], 0.0).astype(cdt)
    # fc8 + sigmoid: single EUP op (tanh); the mul/adds ride the VPU slot (has slack).
    logits = jnp.dot(h, w4_ref[...], preferred_element_type=jnp.float32) + b4_ref[...]
    o_ref[...] = (0.5 * (jnp.tanh(0.5 * logits) + 1.0)).astype(o_ref.dtype)


def _round_up(x: int, m: int) -> int:
    return ((x + m - 1) // m) * m


def _choose_batch_tile(B: int) -> int:
    """MXU-height-filling tile.

    - B <= 256: single grid step, tile = B rounded up to a multiple of 16
      (bf16 LHS packs 16 rows per vreg); the wrapper pads the batch.
    - B  > 256: prefer 256-tall tiles (fills v6e/v7x MXU); fall back to 128 if that
      avoids substantial batch padding (also the natural v5e MXU height).
    """
    if B <= 8:
        return 8
    if B <= 256:
        return min(256, _round_up(B, 16))
    return 256 if _round_up(B, 256) == _round_up(B, 128) else 128


def _vmem_limit_bytes(tb, z_dim, out_features, weight_bytes):
    # Honest per-step footprint: resident (single-buffered) weights + bf16 hidden
    # intermediates + f32 logits + double-buffered z (bf16) / out (f32) tiles,
    # with 2x headroom. Capped at 48 MiB (leaves headroom on v7x's 64 MiB VMEM).
    act_bytes = tb * (256 + 512 + 1024) * 2 + tb * out_features * 4
    io_bytes = 2 * tb * (z_dim * 2 + out_features * 4)
    total = weight_bytes + act_bytes + io_bytes
    return int(min(max(2 * total, 4 * 1024 * 1024), 48 * 1024 * 1024))


def _buffered_supported() -> bool:
    """Narrow feature check for BlockSpec(pipeline_mode=pl.Buffered(1))."""
    if not hasattr(pl, "Buffered"):
        return False
    try:
        pl.BlockSpec((8, 128), lambda i: (0, 0), pipeline_mode=pl.Buffered(1))
        return True
    except TypeError:
        return False


def _decoder_pallas_call(z, flat_params, *, batch_tile):
    w1, b1, w2, b2, w3, b3, w4, b4 = flat_params
    B, z_dim = z.shape
    out_features = w4.shape[1]
    tb = batch_tile
    assert B % tb == 0

    use_buffered = _buffered_supported()

    def rep_spec(arr):
        # Constant index_map => same block every grid step; single buffer suffices and
        # halves the VMEM held by the resident weights.
        if use_buffered:
            return pl.BlockSpec(arr.shape, lambda i: (0, 0),
                                pipeline_mode=pl.Buffered(1))
        return pl.BlockSpec(arr.shape, lambda i: (0, 0))

    weight_bytes = sum(int(a.size) * a.dtype.itemsize
                       for a in (w1, b1, w2, b2, w3, b3, w4, b4))
    cost = pl.CostEstimate(
        flops=2 * B * (z_dim * 256 + 256 * 512 + 512 * 1024 + 1024 * out_features),
        transcendentals=B * out_features,            # one tanh per output element
        bytes_accessed=weight_bytes + z.size * 2 + B * out_features * 4,
    )

    grid_spec = pltpu.PrefetchScalarGridSpec(
        num_scalar_prefetch=0,
        grid=(B // tb,),
        in_specs=[pl.BlockSpec((tb, z_dim), lambda i: (i, 0))]
                + [rep_spec(a) for a in (w1, b1, w2, b2, w3, b3, w4, b4)],
        out_specs=pl.BlockSpec((tb, out_features), lambda i: (i, 0)),
    )

    return pl.pallas_call(
        decoder_kernel,
        out_shape=jax.ShapeDtypeStruct((B, out_features), jnp.float32),
        grid_spec=grid_spec,
        compiler_params=pltpu.CompilerParams(
            dimension_semantics=("parallel",),
            vmem_limit_bytes=_vmem_limit_bytes(tb, z_dim, out_features, weight_bytes),
        ),
        cost_estimate=cost,
    )(z, w1, b1, w2, b2, w3, b3, w4, b4)


def decoder_forward(z, params, *, batch_tile=None):
    """z: [B, z_dim] float32 -> recon_x: [B, out_dim * nc] float32."""
    (w1, b1), (w2, b2), (w3, b3), (w4, b4) = params
    B, z_dim = z.shape
    N = w4.shape[1]

    # Lane-dense output / fc8 N-dim: pad to a multiple of 128 (unmasked stores),
    # slice back after the call. Zero-padded weight/bias columns are discarded.
    N_pad = _round_up(N, 128)
    if N_pad != N:
        w4 = jnp.pad(w4, ((0, 0), (0, N_pad - N)))
        b4 = jnp.pad(b4, ((0, 0), (0, N_pad - N)))

    # bf16 weights + bf16 z: halves the dominant HBM traffic; f32 accumulate in-kernel.
    flat = (w1.astype(jnp.bfloat16), b1.astype(jnp.float32),
            w2.astype(jnp.bfloat16), b2.astype(jnp.float32),
            w3.astype(jnp.bfloat16), b3.astype(jnp.float32),
            w4.astype(jnp.bfloat16), b4.astype(jnp.float32))

    tb = _choose_batch_tile(B) if batch_tile is None else batch_tile
    B_pad = _round_up(B, tb)
    z_in = z.astype(jnp.bfloat16)
    if B_pad != B:
        z_in = jnp.pad(z_in, ((0, B_pad - B), (0, 0)))

    out = _decoder_pallas_call(z_in, flat, batch_tile=tb)
    return out[:B, :N]


def init_decoder_params(key, z_dim, out_dim, nc):
    """Deterministic init mimicking nn.Linear (uniform +-1/sqrt(fan_in)); f32 masters."""
    dims = [(z_dim, 256), (256, 512), (512, 1024), (1024, out_dim * nc)]
    params = []
    for fan_in, fan_out in dims:
        key, kw, kb = jax.random.split(key, 3)
        bound = 1.0 / (fan_in ** 0.5)
        w = jax.random.uniform(kw, (fan_in, fan_out), jnp.float32, -bound, bound)
        b = jax.random.uniform(kb, (1, fan_out), jnp.float32, -bound, bound)
        params.append((w, b))
    return params


def decoder_reference_f32(z, params):
    (w1, b1), (w2, b2), (w3, b3), (w4, b4) = params
    h = jnp.maximum(z @ w1 + b1, 0.0)
    h = jnp.maximum(h @ w2 + b2, 0.0)
    h = jnp.maximum(h @ w3 + b3, 0.0)
    return jax.nn.sigmoid(h @ w4 + b4)


def decoder_reference_bf16(z, params):
    """Mirrors the kernel's numerics (bf16 matmul inputs, f32 accumulate/epilogue)."""
    def mm(x, w):
        return jnp.dot(x.astype(jnp.bfloat16), w.astype(jnp.bfloat16),
                       preferred_element_type=jnp.float32)
    (w1, b1), (w2, b2), (w3, b3), (w4, b4) = params
    h = jnp.maximum(mm(z, w1) + b1, 0.0)
    h = jnp.maximum(mm(h, w2) + b2, 0.0)
    h = jnp.maximum(mm(h, w3) + b3, 0.0)
    return jax.nn.sigmoid(mm(h, w4) + b4)


if __name__ == "__main__":
    # Small, module-consistent shapes: batch=8, z_dim=32, out_dim=64, nc=4
    B, Z_DIM, OUT_DIM, NC = 8, 32, 64, 4

    key = jax.random.PRNGKey(0)
    key, kz = jax.random.split(key)
    z = jax.random.normal(kz, (B, Z_DIM), dtype=jnp.float32)
    params = init_decoder_params(key, Z_DIM, OUT_DIM, NC)

    recon_x = jax.block_until_ready(decoder_forward(z, params))
    assert recon_x.shape == (B, OUT_DIM * NC)
    assert bool(jnp.all(jnp.isfinite(recon_x)))

    # Matched-precision check (bf16 matmul inputs, f32 accumulate) — tight tolerance.
    ref_bf16 = decoder_reference_bf16(z, params)
    assert jnp.allclose(recon_x, ref_bf16, atol=5e-3, rtol=5e-3)

    # Full-f32 PyTorch-semantics check — tolerance loosened for the bf16 weight cast.
    ref_f32 = decoder_reference_f32(z, params)
    assert jnp.allclose(recon_x, ref_f32, atol=3e-2, rtol=3e-2)

    # Padding path: non-128-multiple output dim (48*4 = 192 -> padded to 256) and an
    # awkward batch (24 -> tile 32 with batch padding).
    params2 = init_decoder_params(jax.random.PRNGKey(2), Z_DIM, 48, 4)
    z2 = jax.random.normal(jax.random.PRNGKey(1), (24, Z_DIM), dtype=jnp.float32)
    out2 = jax.block_until_ready(decoder_forward(z2, params2))
    assert out2.shape == (24, 192)
    assert jnp.allclose(out2, decoder_reference_bf16(z2, params2), atol=5e-3, rtol=5e-3)

    # Multi-tile grid path: B=512 -> two 256-tall, MXU-filling tiles.
    z3 = jax.random.normal(jax.random.PRNGKey(3), (512, Z_DIM), dtype=jnp.float32)
    out3 = jax.block_until_ready(decoder_forward(z3, params))
    assert out3.shape == (512, OUT_DIM * NC)
    assert jnp.allclose(out3, decoder_reference_bf16(z3, params), atol=5e-3, rtol=5e-3)

    print("KERNEL_OK")
</pallas_src>

<mosaic_0001>
module attributes {stable_mosaic.version = 11 : i64} {
  func.func @decoder_kernel(%arg0: i32, %arg1: memref<8x32xbf16, #tpu.memory_space<vmem>>, %arg2: memref<32x256xbf16, #tpu.memory_space<vmem>>, %arg3: memref<1x256xf32, #tpu.memory_space<vmem>>, %arg4: memref<256x512xbf16, #tpu.memory_space<vmem>>, %arg5: memref<1x512xf32, #tpu.memory_space<vmem>>, %arg6: memref<512x1024xbf16, #tpu.memory_space<vmem>>, %arg7: memref<1x1024xf32, #tpu.memory_space<vmem>>, %arg8: memref<1024x256xbf16, #tpu.memory_space<vmem>>, %arg9: memref<1x256xf32, #tpu.memory_space<vmem>>, %arg10: memref<8x256xf32, #tpu.memory_space<vmem>>) attributes {dimension_semantics = [#tpu.dimension_semantics<parallel>], iteration_bounds = array<i64: 1>, scalar_prefetch = 0 : i64, scratch_operands = 0 : i64, tpu.core_type = #tpu.core_type<tc>, window_params = [{transform_indices = @transform_0, window_bounds = array<i64: 8, 32>}, {pipeline_mode = #tpu.pipeline_mode<synchronous>, transform_indices = @transform_1, window_bounds = array<i64: 32, 256>}, {pipeline_mode = #tpu.pipeline_mode<synchronous>, transform_indices = @transform_2, window_bounds = array<i64: 1, 256>}, {pipeline_mode = #tpu.pipeline_mode<synchronous>, transform_indices = @transform_3, window_bounds = array<i64: 256, 512>}, {pipeline_mode = #tpu.pipeline_mode<synchronous>, transform_indices = @transform_4, window_bounds = array<i64: 1, 512>}, {pipeline_mode = #tpu.pipeline_mode<synchronous>, transform_indices = @transform_5, window_bounds = array<i64: 512, 1024>}, {pipeline_mode = #tpu.pipeline_mode<synchronous>, transform_indices = @transform_6, window_bounds = array<i64: 1, 1024>}, {pipeline_mode = #tpu.pipeline_mode<synchronous>, transform_indices = @transform_7, window_bounds = array<i64: 1024, 256>}, {pipeline_mode = #tpu.pipeline_mode<synchronous>, transform_indices = @transform_8, window_bounds = array<i64: 1, 256>}, {transform_indices = @transform_9, window_bounds = array<i64: 8, 256>}]} {
    %c0 = arith.constant 0 : index
    %c0_0 = arith.constant 0 : index
    %0 = vector.load %arg1[%c0, %c0_0] : memref<8x32xbf16, #tpu.memory_space<vmem>>, vector<8x32xbf16>
    %c0_1 = arith.constant 0 : index
    %c0_2 = arith.constant 0 : index
    %1 = vector.load %arg2[%c0_1, %c0_2] : memref<32x256xbf16, #tpu.memory_space<vmem>>, vector<32x256xbf16>
    %cst = arith.constant dense<0.000000e+00> : vector<8x256xf32>
    %2 = tpu.matmul %0, %1, %cst {dimension_numbers = #tpu.dot_dimension_numbers<[1], [0], [0], [1], [0, 0, 1, 1], [], []>} : vector<8x32xbf16>, vector<32x256xbf16>, vector<8x256xf32> -> vector<8x256xf32>
    %c0_3 = arith.constant 0 : index
    %c0_4 = arith.constant 0 : index
    %3 = vector.load %arg3[%c0_3, %c0_4] : memref<1x256xf32, #tpu.memory_space<vmem>>, vector<1x256xf32>
    %4 = vector.broadcast %3 : vector<1x256xf32> to vector<8x256xf32>
    %5 = arith.addf %2, %4 : vector<8x256xf32>
    %cst_5 = arith.constant 0.000000e+00 : f32
    %6 = vector.broadcast %cst_5 : f32 to vector<8x256xf32>
    %7 = arith.maximumf %5, %6 : vector<8x256xf32>
    %8 = arith.truncf %7 : vector<8x256xf32> to vector<8x256xbf16>
    %c0_6 = arith.constant 0 : index
    %c0_7 = arith.constant 0 : index
    %9 = vector.load %arg4[%c0_6, %c0_7] : memref<256x512xbf16, #tpu.memory_space<vmem>>, vector<256x512xbf16>
    %cst_8 = arith.constant dense<0.000000e+00> : vector<8x512xf32>
    %10 = tpu.matmul %8, %9, %cst_8 {dimension_numbers = #tpu.dot_dimension_numbers<[1], [0], [0], [1], [0, 0, 1, 1], [], []>} : vector<8x256xbf16>, vector<256x512xbf16>, vector<8x512xf32> -> vector<8x512xf32>
    %c0_9 = arith.constant 0 : index
    %c0_10 = arith.constant 0 : index
    %11 = vector.load %arg5[%c0_9, %c0_10] : memref<1x512xf32, #tpu.memory_space<vmem>>, vector<1x512xf32>
    %12 = vector.broadcast %11 : vector<1x512xf32> to vector<8x512xf32>
    %13 = arith.addf %10, %12 : vector<8x512xf32>
    %cst_11 = arith.constant 0.000000e+00 : f32
    %14 = vector.broadcast %cst_11 : f32 to vector<8x512xf32>
    %15 = arith.maximumf %13, %14 : vector<8x512xf32>
    %16 = arith.truncf %15 : vector<8x512xf32> to vector<8x512xbf16>
    %c0_12 = arith.constant 0 : index
    %c0_13 = arith.constant 0 : index
    %17 = vector.load %arg6[%c0_12, %c0_13] : memref<512x1024xbf16, #tpu.memory_space<vmem>>, vector<512x1024xbf16>
    %cst_14 = arith.constant dense<0.000000e+00> : vector<8x1024xf32>
    %18 = tpu.matmul %16, %17, %cst_14 {dimension_numbers = #tpu.dot_dimension_numbers<[1], [0], [0], [1], [0, 0, 1, 1], [], []>} : vector<8x512xbf16>, vector<512x1024xbf16>, vector<8x1024xf32> -> vector<8x1024xf32>
    %c0_15 = arith.constant 0 : index
    %c0_16 = arith.constant 0 : index
    %19 = vector.load %arg7[%c0_15, %c0_16] : memref<1x1024xf32, #tpu.memory_space<vmem>>, vector<1x1024xf32>
    %20 = vector.broadcast %19 : vector<1x1024xf32> to vector<8x1024xf32>
    %21 = arith.addf %18, %20 : vector<8x1024xf32>
    %cst_17 = arith.constant 0.000000e+00 : f32
    %22 = vector.broadcast %cst_17 : f32 to vector<8x1024xf32>
    %23 = arith.maximumf %21, %22 : vector<8x1024xf32>
    %24 = arith.truncf %23 : vector<8x1024xf32> to vector<8x1024xbf16>
    %c0_18 = arith.constant 0 : index
    %c0_19 = arith.constant 0 : index
    %25 = vector.load %arg8[%c0_18, %c0_19] : memref<1024x256xbf16, #tpu.memory_space<vmem>>, vector<1024x256xbf16>
    %cst_20 = arith.constant dense<0.000000e+00> : vector<8x256xf32>
    %26 = tpu.matmul %24, %25, %cst_20 {dimension_numbers = #tpu.dot_dimension_numbers<[1], [0], [0], [1], [0, 0, 1, 1], [], []>} : vector<8x1024xbf16>, vector<1024x256xbf16>, vector<8x256xf32> -> vector<8x256xf32>
    %c0_21 = arith.constant 0 : index
    %c0_22 = arith.constant 0 : index
    %27 = vector.load %arg9[%c0_21, %c0_22] : memref<1x256xf32, #tpu.memory_space<vmem>>, vector<1x256xf32>
    %28 = vector.broadcast %27 : vector<1x256xf32> to vector<8x256xf32>
    %29 = arith.addf %26, %28 : vector<8x256xf32>
    %cst_23 = arith.constant 5.000000e-01 : f32
    %30 = vector.broadcast %cst_23 : f32 to vector<8x256xf32>
    %31 = arith.mulf %30, %29 : vector<8x256xf32>
    %32 = math.tanh %31 : vector<8x256xf32>
    %cst_24 = arith.constant 1.000000e+00 : f32
    %33 = vector.broadcast %cst_24 : f32 to vector<8x256xf32>
    %34 = arith.addf %32, %33 : vector<8x256xf32>
    %cst_25 = arith.constant 5.000000e-01 : f32
    %35 = vector.broadcast %cst_25 : f32 to vector<8x256xf32>
    %36 = arith.mulf %35, %34 : vector<8x256xf32>
    %c0_26 = arith.constant 0 : index
    %c0_27 = arith.constant 0 : index
    %37 = vector.load %arg10[%c0_26, %c0_27] : memref<8x256xf32, #tpu.memory_space<vmem>>, vector<8x256xf32>
    tpu.vector_store %arg10[%c0_26, %c0_27], %36 {strides = array<i32>} : memref<8x256xf32, #tpu.memory_space<vmem>>, vector<8x256xf32>,
    return
  }
  func.func @transform_0(%arg0: i32) -> (i32, i32) {
    %c0_i32 = arith.constant 0 : i32
    %c0_i32_0 = arith.constant 0 : i32
    return %arg0, %c0_i32 : i32, i32
  }
  func.func @transform_1(%arg0: i32) -> (i32, i32) {
    %c0_i32 = arith.constant 0 : i32
    %c0_i32_0 = arith.constant 0 : i32
    %c0_i32_1 = arith.constant 0 : i32
    return %c0_i32, %c0_i32_0 : i32, i32
  }
  func.func @transform_2(%arg0: i32) -> (i32, i32) {
    %c0_i32 = arith.constant 0 : i32
    %c0_i32_0 = arith.constant 0 : i32
    %c0_i32_1 = arith.constant 0 : i32
    return %c0_i32, %c0_i32_0 : i32, i32
  }
  func.func @transform_3(%arg0: i32) -> (i32, i32) {
    %c0_i32 = arith.constant 0 : i32
    %c0_i32_0 = arith.constant 0 : i32
    %c0_i32_1 = arith.constant 0 : i32
    return %c0_i32, %c0_i32_0 : i32, i32
  }
  func.func @transform_4(%arg0: i32) -> (i32, i32) {
    %c0_i32 = arith.constant 0 : i32
    %c0_i32_0 = arith.constant 0 : i32
    %c0_i32_1 = arith.constant 0 : i32
    return %c0_i32, %c0_i32_0 : i32, i32
  }
  func.func @transform_5(%arg0: i32) -> (i32, i32) {
    %c0_i32 = arith.constant 0 : i32
    %c0_i32_0 = arith.constant 0 : i32
    %c0_i32_1 = arith.constant 0 : i32
    return %c0_i32, %c0_i32_0 : i32, i32
  }
  func.func @transform_6(%arg0: i32) -> (i32, i32) {
    %c0_i32 = arith.constant 0 : i32
    %c0_i32_0 = arith.constant 0 : i32
    %c0_i32_1 = arith.constant 0 : i32
    return %c0_i32, %c0_i32_0 : i32, i32
  }
  func.func @transform_7(%arg0: i32) -> (i32, i32) {
    %c0_i32 = arith.constant 0 : i32
    %c0_i32_0 = arith.constant 0 : i32
    %c0_i32_1 = arith.constant 0 : i32
    return %c0_i32, %c0_i32_0 : i32, i32
  }
  func.func @transform_8(%arg0: i32) -> (i32, i32) {
    %c0_i32 = arith.constant 0 : i32
    %c0_i32_0 = arith.constant 0 : i32
    %c0_i32_1 = arith.constant 0 : i32
    return %c0_i32, %c0_i32_0 : i32, i32
  }
  func.func @transform_9(%arg0: i32) -> (i32, i32) {
    %c0_i32 = arith.constant 0 : i32
    %c0_i32_0 = arith.constant 0 : i32
    return %arg0, %c0_i32 : i32, i32
  }
}

</mosaic_0001>

<llo_original>
// kernel: tpu_custom_call.1
$region0: #{tpu_custom_call.1}
  #allocation0 [shape = 'u32[]', space=smem, size = 0x4, offset = 0x4, fixed_abs, tag = 'smem constant byte address 0x4 - core index']
  #allocation1 [shape = 'u32[72,128]{1,0:T(1,128)}', space=vmem, size = 0x9000, scoped, tag = 'internal scratch']
  %s0 = inlined_call_operand.hbm [shape: bf16[8,32], index: 0, kind: input, shape index: {}]
  %s1 = inlined_call_operand.hbm [shape: bf16[32,256], index: 1, kind: input, shape index: {}]
  %s2 = inlined_call_operand.hbm [shape: f32[1,256], index: 2, kind: input, shape index: {}]
  %s3 = inlined_call_operand.hbm [shape: bf16[256,512], index: 3, kind: input, shape index: {}]
  %s4 = inlined_call_operand.hbm [shape: f32[1,512], index: 4, kind: input, shape index: {}]
  %s5 = inlined_call_operand.hbm [shape: bf16[512,1024], index: 5, kind: input, shape index: {}]
  %s6 = inlined_call_operand.hbm [shape: f32[1,1024], index: 6, kind: input, shape index: {}]
  %s7 = inlined_call_operand.hbm [shape: bf16[1024,256], index: 7, kind: input, shape index: {}]
  %s8 = inlined_call_operand.vmem [shape: f32[1,256], index: 8, kind: input, shape index: {}]
  %s9 = inlined_call_operand.hbm [shape: f32[8,256], index: 9, kind: output, shape index: {}]
  %s10 = sld [smem:[#allocation0]]
  $region78: #{tpu_custom_call.1} parent=0
    _
  %s12 = ssub.s32 1, %s10
  %s13 = scalar_select 0, %s12, %s10
  $region1: #{tpu_custom_call.1} parent=0
    #allocation2 [shape = 'u8[2048]{0}', space=vmem, size = 0x800, scoped, tag = 'input window, operand 0, single buffered']
    #allocation3 [shape = 's32[1]{0}', space=sflag, size = 0x4, scoped, tag = 'scoped memory for tpu_custom_call.1']
    #allocation4 [shape = 's32[1]{0}', space=sflag, size = 0x4, scoped, tag = 'scoped memory for tpu_custom_call.1']
    #allocation5 [shape = 'u8[16384]{0}', space=vmem, size = 0x4000, scoped, tag = 'input window, operand 1, single buffered']
    #allocation6 [shape = 's32[1]{0}', space=sflag, size = 0x4, scoped, tag = 'scoped memory for tpu_custom_call.1']
    #allocation7 [shape = 'u8[1024]{0}', space=vmem, size = 0x400, scoped, tag = 'input window, operand 2, single buffered']
    #allocation8 [shape = 'u8[262144]{0}', space=vmem, size = 0x40000, scoped, tag = 'input window, operand 3, single buffered']
    #allocation9 [shape = 's32[1]{0}', space=sflag, size = 0x4, scoped, tag = 'scoped memory for tpu_custom_call.1']
    #allocation10 [shape = 'u8[2048]{0}', space=vmem, size = 0x800, scoped, tag = 'input window, operand 4, single buffered']
    #allocation11 [shape = 'u8[1048576]{0}', space=vmem, size = 0x100000, scoped, tag = 'input window, operand 5, single buffered']
    #allocation12 [shape = 's32[1]{0}', space=sflag, size = 0x4, scoped, tag = 'scoped memory for tpu_custom_call.1']
    #allocation13 [shape = 'u8[4096]{0}', space=vmem, size = 0x1000, scoped, tag = 'input window, operand 6, single buffered']
    #allocation14 [shape = 'u8[524288]{0}', space=vmem, size = 0x80000, scoped, tag = 'input window, operand 7, single buffered']
    #allocation15 [shape = 's32[1]{0}', space=sflag, size = 0x4, scoped, tag = 'scoped memory for tpu_custom_call.1']
    #allocation16 [shape = 'u8[8192]{0}', space=vmem, size = 0x2000, scoped, tag = 'output window, operand 0, single buffered']
    %14 = vsyncpa [#allocation3], 0
    %15 = vsyncpa [#allocation6], 0
    %16 = vsyncpa [#allocation9], 0
    %17 = vsyncpa [#allocation12], 0
    %18 = vsyncpa [#allocation15], 0
    %19 = vsyncpa [#allocation4], 0
    // Predicated region
    $region2: #{tpu_custom_call.1} parent=1 // pred_check
      _
    $region3: #{tpu_custom_call.1} parent=1 // pred_check_branch
      %21 = sbr.rel (0) target = $region5
    $region4: #{tpu_custom_call.1} parent=1 // pred_region
      %23 = vsyncadd [#allocation3], 0
      %s25 = sshll.u32 %s0, 4
      %s26 = int_to_ptr.hbm [resolvable:$true] %s25
      %s27 = sshll.u32 [#allocation2], 4
      %s28 = int_to_ptr.vmem [resolvable:$true] %s27
      %30 = dma.hbm_to_vmem [thread:$0]  %s26, 64, %s28, [#allocation3]
    $region5: #{tpu_custom_call.1} parent=1 // pred_fallthru
      _
    // Predicated region
    $region6: #{tpu_custom_call.1} parent=1 // pred_check
      _
    $region7: #{tpu_custom_call.1} parent=1 // pred_check_branch
      %32 = sbr.rel (0) target = $region9
    $region8: #{tpu_custom_call.1} parent=1 // pred_region
      %34 = vsyncadd [#allocation6], 0
      %s35 = sshll.u32 %s1, 4
      %s36 = int_to_ptr.hbm [resolvable:$true] %s35
      %s37 = sshll.u32 [#allocation5], 4
      %s38 = int_to_ptr.vmem [resolvable:$true] %s37
      %43 = dma.hbm_to_vmem [thread:$0]  %s36, 512, %s38, [#allocation6], 128, 128, 8
    $region9: #{tpu_custom_call.1} parent=1 // pred_fallthru
      _
    // Predicated region
    $region10: #{tpu_custom_call.1} parent=1 // pred_check
      _
    $region11: #{tpu_custom_call.1} parent=1 // pred_check_branch
      %45 = sbr.rel (0) target = $region13
    $region12: #{tpu_custom_call.1} parent=1 // pred_region
      %47 = vsyncadd [#allocation6], 0
      %s49 = sshll.u32 %s2, 4
      %s50 = int_to_ptr.hbm [resolvable:$true] %s49
      %s51 = sshll.u32 [#allocation7], 4
      %s52 = int_to_ptr.vmem [resolvable:$true] %s51
      %54 = dma.hbm_to_vmem [thread:$0]  %s50, 32, %s52, [#allocation6]
    $region13: #{tpu_custom_call.1} parent=1 // pred_fallthru
      _
    // Predicated region
    $region14: #{tpu_custom_call.1} parent=1 // pred_check
      _
    $region15: #{tpu_custom_call.1} parent=1 // pred_check_branch
      %56 = sbr.rel (0) target = $region17
    $region16: #{tpu_custom_call.1} parent=1 // pred_region
      %58 = vsyncadd [#allocation9], 0
      %s59 = sshll.u32 %s3, 4
      %s60 = int_to_ptr.hbm [resolvable:$true] %s59
      %s61 = sshll.u32 [#allocation8], 4
      %s62 = int_to_ptr.vmem [resolvable:$true] %s61
      %67 = dma.hbm_to_vmem [thread:$0]  %s60, 8192, %s62, [#allocation9], 256, 256, 16
    $region17: #{tpu_custom_call.1} parent=1 // pred_fallthru
      _
    // Predicated region
    $region18: #{tpu_custom_call.1} parent=1 // pred_check
      _
    $region19: #{tpu_custom_call.1} parent=1 // pred_check_branch
      %69 = sbr.rel (0) target = $region21
    $region20: #{tpu_custom_call.1} parent=1 // pred_region
      %71 = vsyncadd [#allocation9], 0
      %s73 = sshll.u32 %s4, 4
      %s74 = int_to_ptr.hbm [resolvable:$true] %s73
      %s75 = sshll.u32 [#allocation10], 4
      %s76 = int_to_ptr.vmem [resolvable:$true] %s75
      %78 = dma.hbm_to_vmem [thread:$0]  %s74, 64, %s76, [#allocation9]
    $region21: #{tpu_custom_call.1} parent=1 // pred_fallthru
      _
    // Predicated region
    $region22: #{tpu_custom_call.1} parent=1 // pred_check
      _
    $region23: #{tpu_custom_call.1} parent=1 // pred_check_branch
      %80 = sbr.rel (0) target = $region25
    $region24: #{tpu_custom_call.1} parent=1 // pred_region
      %82 = vsyncadd [#allocation12], 0
      %s83 = sshll.u32 %s5, 4
      %s84 = int_to_ptr.hbm [resolvable:$true] %s83
      %s85 = sshll.u32 [#allocation11], 4
      %s86 = int_to_ptr.vmem [resolvable:$true] %s85
      %91 = dma.hbm_to_vmem [thread:$0]  %s84, 32768, %s86, [#allocation12], 512, 512, 32
    $region25: #{tpu_custom_call.1} parent=1 // pred_fallthru
      _
    // Predicated region
    $region26: #{tpu_custom_call.1} parent=1 // pred_check
      _
    $region27: #{tpu_custom_call.1} parent=1 // pred_check_branch
      %93 = sbr.rel (0) target = $region29
    $region28: #{tpu_custom_call.1} parent=1 // pred_region
      %95 = vsyncadd [#allocation12], 0
      %s97 = sshll.u32 %s6, 4
      %s98 = int_to_ptr.hbm [resolvable:$true] %s97
      %s99 = sshll.u32 [#allocation13], 4
      %s100 = int_to_ptr.vmem [resolvable:$true] %s99
      %102 = dma.hbm_to_vmem [thread:$0]  %s98, 128, %s100, [#allocation12]
    $region29: #{tpu_custom_call.1} parent=1 // pred_fallthru
      _
    // Predicated region
    $region30: #{tpu_custom_call.1} parent=1 // pred_check
      _
    $region31: #{tpu_custom_call.1} parent=1 // pred_check_branch
      %104 = sbr.rel (0) target = $region33
    $region32: #{tpu_custom_call.1} parent=1 // pred_region
      %106 = vsyncadd [#allocation15], 0
      %s107 = sshll.u32 %s7, 4
      %s108 = int_to_ptr.hbm [resolvable:$true] %s107
      %s109 = sshll.u32 [#allocation14], 4
      %s110 = int_to_ptr.vmem [resolvable:$true] %s109
      %115 = dma.hbm_to_vmem [thread:$0]  %s108, 16384, %s110, [#allocation15], 128, 128, 8
    $region33: #{tpu_custom_call.1} parent=1 // pred_fallthru
      _
    // Predicated region
    $region34: #{tpu_custom_call.1} parent=1 // pred_check
      _
    $region35: #{tpu_custom_call.1} parent=1 // pred_check_branch
      %117 = sbr.rel (0) target = $region37
    $region36: #{tpu_custom_call.1} parent=1 // pred_region
      _
    $region37: #{tpu_custom_call.1} parent=1 // pred_fallthru
      _
    // Predicated region
    $region38: #{tpu_custom_call.1} parent=1 // pred_check
      _
    $region39: #{tpu_custom_call.1} parent=1 // pred_check_branch
      %119 = sbr.rel (0) target = $region41
    $region40: #{tpu_custom_call.1} parent=1 // pred_region
      %121 = dma.done [#allocation3], 64
    $region41: #{tpu_custom_call.1} parent=1 // pred_fallthru
      _
    // Predicated region
    $region42: #{tpu_custom_call.1} parent=1 // pred_check
      _
    $region43: #{tpu_custom_call.1} parent=1 // pred_check_branch
      %123 = sbr.rel (0) target = $region45
    $region44: #{tpu_custom_call.1} parent=1 // pred_region
      %125 = dma.done [#allocation6], 512
    $region45: #{tpu_custom_call.1} parent=1 // pred_fallthru
      _
    // Predicated region
    $region46: #{tpu_custom_call.1} parent=1 // pred_check
      _
    $region47: #{tpu_custom_call.1} parent=1 // pred_check_branch
      %127 = sbr.rel (0) target = $region49
    $region48: #{tpu_custom_call.1} parent=1 // pred_region
      %129 = dma.done [#allocation6], 32
    $region49: #{tpu_custom_call.1} parent=1 // pred_fallthru
      _
    // Predicated region
    $region50: #{tpu_custom_call.1} parent=1 // pred_check
      _
    $region51: #{tpu_custom_call.1} parent=1 // pred_check_branch
      %131 = sbr.rel (0) target = $region53
    $region52: #{tpu_custom_call.1} parent=1 // pred_region
      %133 = dma.done [#allocation9], 8192
    $region53: #{tpu_custom_call.1} parent=1 // pred_fallthru
      _
    // Predicated region
    $region54: #{tpu_custom_call.1} parent=1 // pred_check
      _
    $region55: #{tpu_custom_call.1} parent=1 // pred_check_branch
      %135 = sbr.rel (0) target = $region57
    $region56: #{tpu_custom_call.1} parent=1 // pred_region
      %137 = dma.done [#allocation9], 64
    $region57: #{tpu_custom_call.1} parent=1 // pred_fallthru
      _
    // Predicated region
    $region58: #{tpu_custom_call.1} parent=1 // pred_check
      _
    $region59: #{tpu_custom_call.1} parent=1 // pred_check_branch
      %139 = sbr.rel (0) target = $region61
    $region60: #{tpu_custom_call.1} parent=1 // pred_region
      %141 = dma.done [#allocation12], 32768
    $region61: #{tpu_custom_call.1} parent=1 // pred_fallthru
      _
    // Predicated region
    $region62: #{tpu_custom_call.1} parent=1 // pred_check
      _
    $region63: #{tpu_custom_call.1} parent=1 // pred_check_branch
      %143 = sbr.rel (0) target = $region65
    $region64: #{tpu_custom_call.1} parent=1 // pred_region
      %145 = dma.done [#allocation12], 128
    $region65: #{tpu_custom_call.1} parent=1 // pred_fallthru
      _
    // Predicated region
    $region66: #{tpu_custom_call.1} parent=1 // pred_check
      _
    $region67: #{tpu_custom_call.1} parent=1 // pred_check_branch
      %147 = sbr.rel (0) target = $region69
    $region68: #{tpu_custom_call.1} parent=1 // pred_region
      %149 = dma.done [#allocation15], 16384
    $region69: #{tpu_custom_call.1} parent=1 // pred_fallthru
      _
    %v151 = vld [vmem:[#allocation2] sm:$0xf]
    %v152 = vld [vmem:[#allocation5] sm:$0xff]
    %v153 = vld [vmem:[#allocation5 + $0x8] sm:$0xff]
    %v154 = vld [vmem:[#allocation5 + $0x10] sm:$0xff]
    %v155 = vld [vmem:[#allocation5 + $0x18] sm:$0xff]
    %v156 = vld [vmem:[#allocation7] sm:$0x3]
    %v158 = vperm.slane %v156, 0
    %v159 = vperm.slane %v156, 1
    %v166 = vunpack.c.l.b16 %v152
    %v167 = vunpack.c.h.b16 %v152
    %v168 = vunpack.c.l.b16 %v153
    %v169 = vunpack.c.h.b16 %v153
    %v170 = vunpack.c.l.b16 %v154
    %v171 = vunpack.c.h.b16 %v154
    %v172 = vunpack.c.l.b16 %v155
    %v173 = vunpack.c.h.b16 %v155
    %v174 = vpack.c.b16 %v168, %v166
    %v175 = vpack.c.b16 %v169, %v167
    %v176 = vpack.c.b16 %v172, %v170
    %v177 = vpack.c.b16 %v173, %v171
    %vm182 = vcmask 261120
    %v184 = vsel %vm182, %v151, 0
    %186 = vmatpush.bf16.msra.mxu0 0
    %187 = vmatpush.bf16.msra.mxu0 0
    %188 = vmatpush.bf16.msra.mxu0 0
    %189 = vmatpush.bf16.msra.mxu0 0
    %190 = vmatpush.bf16.msra.mxu0 0
    %191 = vmatpush.bf16.msra.mxu0 0
    %192 = vmatpush.bf16.msra.mxu0 %v176
    %193 = vmatpush.bf16.msra.mxu0 %v174
    %194 = vmatmul.bf16.gmra.mxu0 %v184
    %v195 = vpop.f32.mrf.mxu0
    %v196 = vadd.f32 %v158, %v195
    %v197 = vpop.f32.mrf.mxu0
    %198 = vdwg.mxu0
    %199 = vmatpush.bf16.msra.mxu0 0
    %200 = vmatpush.bf16.msra.mxu0 0
    %201 = vmatpush.bf16.msra.mxu0 0
    %202 = vmatpush.bf16.msra.mxu0 0
    %203 = vmatpush.bf16.msra.mxu0 0
    %204 = vmatpush.bf16.msra.mxu0 0
    %205 = vmatpush.bf16.msra.mxu0 %v177
    %206 = vmatpush.bf16.msra.mxu0 %v175
    %207 = vmatmul.bf16.gmra.mxu0 %v184
    %v208 = vpop.f32.mrf.mxu0
    %v209 = vadd.f32 %v159, %v208
    %v210 = vpop.f32.mrf.mxu0
    %211 = vdwg.mxu0
    %v212 = vmax.f32 %v196, 0.0
    %v213 = vmax.f32 %v209, 0.0
    %v214 = vpack.c.bf16 %v212, %v212
    %v215 = vpack.c.bf16 %v213, %v213
    %v216 = vld [vmem:[#allocation8] sm:$0xff]
    %v217 = vld [vmem:[#allocation8 + $0x8] sm:$0xff]
    %v218 = vld [vmem:[#allocation8 + $0x10] sm:$0xff]
    %v219 = vld [vmem:[#allocation8 + $0x18] sm:$0xff]
    %v220 = vld [vmem:[#allocation8 + $0x20] sm:$0xff]
    %v221 = vld [vmem:[#allocation8 + $0x28] sm:$0xff]
    %v222 = vld [vmem:[#allocation8 + $0x30] sm:$0xff]
    %v223 = vld [vmem:[#allocation8 + $0x38] sm:$0xff]
    %v224 = vld [vmem:[#allocation8 + $0x40] sm:$0xff]
    %v225 = vld [vmem:[#allocation8 + $0x48] sm:$0xff]
    %v226 = vld [vmem:[#allocation8 + $0x50] sm:$0xff]
    %v227 = vld [vmem:[#allocation8 + $0x58] sm:$0xff]
    %v228 = vld [vmem:[#allocation8 + $0x60] sm:$0xff]
    %v229 = vld [vmem:[#allocation8 + $0x68] sm:$0xff]
    %v230 = vld [vmem:[#allocation8 + $0x70] sm:$0xff]
    %v231 = vld [vmem:[#allocation8 + $0x78] sm:$0xff]
    %v232 = vld [vmem:[#allocation8 + $0x80] sm:$0xff]
    %v233 = vld [vmem:[#allocation8 + $0x88] sm:$0xff]
    %v234 = vld [vmem:[#allocation8 + $0x90] sm:$0xff]
    %v235 = vld [vmem:[#allocation8 + $0x98] sm:$0xff]
    %v236 = vld [vmem:[#allocation8 + $0xa0] sm:$0xff]
    %v237 = vld [vmem:[#allocation8 + $0xa8] sm:$0xff]
    %v238 = vld [vmem:[#allocation8 + $0xb0] sm:$0xff]
    %v239 = vld [vmem:[#allocation8 + $0xb8] sm:$0xff]
    %v240 = vld [vmem:[#allocation8 + $0xc0] sm:$0xff]
    %v241 = vld [vmem:[#allocation8 + $0xc8] sm:$0xff]
    %v242 = vld [vmem:[#allocation8 + $0xd0] sm:$0xff]
    %v243 = vld [vmem:[#allocation8 + $0xd8] sm:$0xff]
    %v244 = vld [vmem:[#allocation8 + $0xe0] sm:$0xff]
    %v245 = vld [vmem:[#allocation8 + $0xe8] sm:$0xff]
    %v246 = vld [vmem:[#allocation8 + $0xf0] sm:$0xff]
    %v247 = vld [vmem:[#allocation8 + $0xf8] sm:$0xff]
    %v248 = vld [vmem:[#allocation8 + $0x100] sm:$0xff]
    %v249 = vld [vmem:[#allocation8 + $0x108] sm:$0xff]
    %v250 = vld [vmem:[#allocation8 + $0x110] sm:$0xff]
    %v251 = vld [vmem:[#allocation8 + $0x118] sm:$0xff]
    %v252 = vld [vmem:[#allocation8 + $0x120] sm:$0xff]
    %v253 = vld [vmem:[#allocation8 + $0x128] sm:$0xff]
    %v254 = vld [vmem:[#allocation8 + $0x130] sm:$0xff]
    %v255 = vld [vmem:[#allocation8 + $0x138] sm:$0xff]
    %v256 = vld [vmem:[#allocation8 + $0x140] sm:$0xff]
    %v257 = vld [vmem:[#allocation8 + $0x148] sm:$0xff]
    %v258 = vld [vmem:[#allocation8 + $0x150] sm:$0xff]
    %v259 = vld [vmem:[#allocation8 + $0x158] sm:$0xff]
    %v260 = vld [vmem:[#allocation8 + $0x160] sm:$0xff]
    %v261 = vld [vmem:[#allocation8 + $0x168] sm:$0xff]
    %v262 = vld [vmem:[#allocation8 + $0x170] sm:$0xff]
    %v263 = vld [vmem:[#allocation8 + $0x178] sm:$0xff]
    %v264 = vld [vmem:[#allocation8 + $0x180] sm:$0xff]
    %v265 = vld [vmem:[#allocation8 + $0x188] sm:$0xff]
    %v266 = vld [vmem:[#allocation8 + $0x190] sm:$0xff]
    %v267 = vld [vmem:[#allocation8 + $0x198] sm:$0xff]
    %v268 = vld [vmem:[#allocation8 + $0x1a0] sm:$0xff]
    %v269 = vld [vmem:[#allocation8 + $0x1a8] sm:$0xff]
    %v270 = vld [vmem:[#allocation8 + $0x1b0] sm:$0xff]
    %v271 = vld [vmem:[#allocation8 + $0x1b8] sm:$0xff]
    %v272 = vld [vmem:[#allocation8 + $0x1c0] sm:$0xff]
    %v273 = vld [vmem:[#allocation8 + $0x1c8] sm:$0xff]
    %v274 = vld [vmem:[#allocation8 + $0x1d0] sm:$0xff]
    %v275 = vld [vmem:[#allocation8 + $0x1d8] sm:$0xff]
    %v276 = vld [vmem:[#allocation8 + $0x1e0] sm:$0xff]
    %v277 = vld [vmem:[#allocation8 + $0x1e8] sm:$0xff]
    %v278 = vld [vmem:[#allocation8 + $0x1f0] sm:$0xff]
    %v279 = vld [vmem:[#allocation8 + $0x1f8] sm:$0xff]
    %v280 = vld [vmem:[#allocation10] sm:$0xf]
    %v282 = vperm.slane %v280, 0
    %v283 = vperm.slane %v280, 1
    %v284 = vperm.slane %v280, 2
    %v285 = vperm.slane %v280, 3
    %v354 = vunpack.c.l.b16 %v216
    %v355 = vunpack.c.h.b16 %v216
    %v356 = vunpack.c.l.b16 %v217
    %v357 = vunpack.c.h.b16 %v217
    %v358 = vunpack.c.l.b16 %v218
    %v359 = vunpack.c.h.b16 %v218
    %v360 = vunpack.c.l.b16 %v219
    %v361 = vunpack.c.h.b16 %v219
    %v362 = vunpack.c.l.b16 %v220
    %v363 = vunpack.c.h.b16 %v220
    %v364 = vunpack.c.l.b16 %v221
    %v365 = vunpack.c.h.b16 %v221
    %v366 = vunpack.c.l.b16 %v222
    %v367 = vunpack.c.h.b16 %v222
    %v368 = vunpack.c.l.b16 %v223
    %v369 = vunpack.c.h.b16 %v223
    %v370 = vunpack.c.l.b16 %v224
    %v371 = vunpack.c.h.b16 %v224
    %v372 = vunpack.c.l.b16 %v225
    %v373 = vunpack.c.h.b16 %v225
    %v374 = vunpack.c.l.b16 %v226
    %v375 = vunpack.c.h.b16 %v226
    %v376 = vunpack.c.l.b16 %v227
    %v377 = vunpack.c.h.b16 %v227
    %v378 = vunpack.c.l.b16 %v228
    %v379 = vunpack.c.h.b16 %v228
    %v380 = vunpack.c.l.b16 %v229
    %v381 = vunpack.c.h.b16 %v229
    %v382 = vunpack.c.l.b16 %v230
    %v383 = vunpack.c.h.b16 %v230
    %v384 = vunpack.c.l.b16 %v231
    %v385 = vunpack.c.h.b16 %v231
    %v386 = vunpack.c.l.b16 %v232
    %v387 = vunpack.c.h.b16 %v232
    %v388 = vunpack.c.l.b16 %v233
    %v389 = vunpack.c.h.b16 %v233
    %v390 = vunpack.c.l.b16 %v234
    %v391 = vunpack.c.h.b16 %v234
    %v392 = vunpack.c.l.b16 %v235
    %v393 = vunpack.c.h.b16 %v235
    %v394 = vunpack.c.l.b16 %v236
    %v395 = vunpack.c.h.b16 %v236
    %v396 = vunpack.c.l.b16 %v237
    %v397 = vunpack.c.h.b16 %v237
    %v398 = vunpack.c.l.b16 %v238
    %v399 = vunpack.c.h.b16 %v238
    %v400 = vunpack.c.l.b16 %v239
    %v401 = vunpack.c.h.b16 %v239
    %v402 = vunpack.c.l.b16 %v240
    %v403 = vunpack.c.h.b16 %v240
    %v404 = vunpack.c.l.b16 %v241
    %v405 = vunpack.c.h.b16 %v241
    %v406 = vunpack.c.l.b16 %v242
    %v407 = vunpack.c.h.b16 %v242
    %v408 = vunpack.c.l.b16 %v243
    %v409 = vunpack.c.h.b16 %v243
    %v410 = vunpack.c.l.b16 %v244
    %v411 = vunpack.c.h.b16 %v244
    %v412 = vunpack.c.l.b16 %v245
    %v413 = vunpack.c.h.b16 %v245
    %v414 = vunpack.c.l.b16 %v246
    %v415 = vunpack.c.h.b16 %v246
    %v416 = vunpack.c.l.b16 %v247
    %v417 = vunpack.c.h.b16 %v247
    %v418 = vunpack.c.l.b16 %v248
    %v419 = vunpack.c.h.b16 %v248
    %v420 = vunpack.c.l.b16 %v249
    %v421 = vunpack.c.h.b16 %v249
    %v422 = vunpack.c.l.b16 %v250
    %v423 = vunpack.c.h.b16 %v250
    %v424 = vunpack.c.l.b16 %v251
    %v425 = vunpack.c.h.b16 %v251
    %v426 = vunpack.c.l.b16 %v252
    %v427 = vunpack.c.h.b16 %v252
    %v428 = vunpack.c.l.b16 %v253
    %v429 = vunpack.c.h.b16 %v253
    %v430 = vunpack.c.l.b16 %v254
    %v431 = vunpack.c.h.b16 %v254
    %v432 = vunpack.c.l.b16 %v255
    %v433 = vunpack.c.h.b16 %v255
    %v434 = vunpack.c.l.b16 %v256
    %v435 = vunpack.c.h.b16 %v256
    %v436 = vunpack.c.l.b16 %v257
    %v437 = vunpack.c.h.b16 %v257
    %v438 = vunpack.c.l.b16 %v258
    %v439 = vunpack.c.h.b16 %v258
    %v440 = vunpack.c.l.b16 %v259
    %v441 = vunpack.c.h.b16 %v259
    %v442 = vunpack.c.l.b16 %v260
    %v443 = vunpack.c.h.b16 %v260
    %v444 = vunpack.c.l.b16 %v261
    %v445 = vunpack.c.h.b16 %v261
    %v446 = vunpack.c.l.b16 %v262
    %v447 = vunpack.c.h.b16 %v262
    %v448 = vunpack.c.l.b16 %v263
    %v449 = vunpack.c.h.b16 %v263
    %v450 = vunpack.c.l.b16 %v264
    %v451 = vunpack.c.h.b16 %v264
    %v452 = vunpack.c.l.b16 %v265
    %v453 = vunpack.c.h.b16 %v265
    %v454 = vunpack.c.l.b16 %v266
    %v455 = vunpack.c.h.b16 %v266
    %v456 = vunpack.c.l.b16 %v267
    %v457 = vunpack.c.h.b16 %v267
    %v458 = vunpack.c.l.b16 %v268
    %v459 = vunpack.c.h.b16 %v268
    %v460 = vunpack.c.l.b16 %v269
    %v461 = vunpack.c.h.b16 %v269
    %v462 = vunpack.c.l.b16 %v270
    %v463 = vunpack.c.h.b16 %v270
    %v464 = vunpack.c.l.b16 %v271
    %v465 = vunpack.c.h.b16 %v271
    %v466 = vunpack.c.l.b16 %v272
    %v467 = vunpack.c.h.b16 %v272
    %v468 = vunpack.c.l.b16 %v273
    %v469 = vunpack.c.h.b16 %v273
    %v470 = vunpack.c.l.b16 %v274
    %v471 = vunpack.c.h.b16 %v274
    %v472 = vunpack.c.l.b16 %v275
    %v473 = vunpack.c.h.b16 %v275
    %v474 = vunpack.c.l.b16 %v276
    %v475 = vunpack.c.h.b16 %v276
    %v476 = vunpack.c.l.b16 %v277
    %v477 = vunpack.c.h.b16 %v277
    %v478 = vunpack.c.l.b16 %v278
    %v479 = vunpack.c.h.b16 %v278
    %v480 = vunpack.c.l.b16 %v279
    %v481 = vunpack.c.h.b16 %v279
    %v482 = vpack.c.b16 %v358, %v354
    %v483 = vpack.c.b16 %v359, %v355
    %v484 = vpack.c.b16 %v360, %v356
    %v485 = vpack.c.b16 %v361, %v357
    %v486 = vpack.c.b16 %v366, %v362
    %v487 = vpack.c.b16 %v367, %v363
    %v488 = vpack.c.b16 %v368, %v364
    %v489 = vpack.c.b16 %v369, %v365
    %v490 = vpack.c.b16 %v374, %v370
    %v491 = vpack.c.b16 %v375, %v371
    %v492 = vpack.c.b16 %v376, %v372
    %v493 = vpack.c.b16 %v377, %v373
    %v494 = vpack.c.b16 %v382, %v378
    %v495 = vpack.c.b16 %v383, %v379
    %v496 = vpack.c.b16 %v384, %v380
    %v497 = vpack.c.b16 %v385, %v381
    %v498 = vpack.c.b16 %v390, %v386
    %v499 = vpack.c.b16 %v391, %v387
    %v500 = vpack.c.b16 %v392, %v388
    %v501 = vpack.c.b16 %v393, %v389
    %v502 = vpack.c.b16 %v398, %v394
    %v503 = vpack.c.b16 %v399, %v395
    %v504 = vpack.c.b16 %v400, %v396
    %v505 = vpack.c.b16 %v401, %v397
    %v506 = vpack.c.b16 %v406, %v402
    %v507 = vpack.c.b16 %v407, %v403
    %v508 = vpack.c.b16 %v408, %v404
    %v509 = vpack.c.b16 %v409, %v405
    %v510 = vpack.c.b16 %v414, %v410
    %v511 = vpack.c.b16 %v415, %v411
    %v512 = vpack.c.b16 %v416, %v412
    %v513 = vpack.c.b16 %v417, %v413
    %v514 = vpack.c.b16 %v422, %v418
    %v515 = vpack.c.b16 %v423, %v419
    %v516 = vpack.c.b16 %v424, %v420
    %v517 = vpack.c.b16 %v425, %v421
    %v518 = vpack.c.b16 %v430, %v426
    %v519 = vpack.c.b16 %v431, %v427
    %v520 = vpack.c.b16 %v432, %v428
    %v521 = vpack.c.b16 %v433, %v429
    %v522 = vpack.c.b16 %v438, %v434
    %v523 = vpack.c.b16 %v439, %v435
    %v524 = vpack.c.b16 %v440, %v436
    %v525 = vpack.c.b16 %v441, %v437
    %v526 = vpack.c.b16 %v446, %v442
    %v527 = vpack.c.b16 %v447, %v443
    %v528 = vpack.c.b16 %v448, %v444
    %v529 = vpack.c.b16 %v449, %v445
    %v530 = vpack.c.b16 %v454, %v450
    %v531 = vpack.c.b16 %v455, %v451
    %v532 = vpack.c.b16 %v456, %v452
    %v533 = vpack.c.b16 %v457, %v453
    %v534 = vpack.c.b16 %v462, %v458
    %v535 = vpack.c.b16 %v463, %v459
    %v536 = vpack.c.b16 %v464, %v460
    %v537 = vpack.c.b16 %v465, %v461
    %v538 = vpack.c.b16 %v470, %v466
    %v539 = vpack.c.b16 %v471, %v467
    %v540 = vpack.c.b16 %v472, %v468
    %v541 = vpack.c.b16 %v473, %v469
    %v542 = vpack.c.b16 %v478, %v474
    %v543 = vpack.c.b16 %v479, %v475
    %v544 = vpack.c.b16 %v480, %v476
    %v545 = vpack.c.b16 %v481, %v477
    %610 = vmatpush.bf16.msra.mxu0 %v510
    %611 = vmatpush.bf16.msra.mxu0 %v506
    %612 = vmatpush.bf16.msra.mxu0 %v502
    %613 = vmatpush.bf16.msra.mxu0 %v498
    %614 = vmatpush.bf16.msra.mxu0 %v494
    %615 = vmatpush.bf16.msra.mxu0 %v490
    %616 = vmatpush.bf16.msra.mxu0 %v486
    %617 = vmatpush.bf16.msra.mxu0 %v482
    %618 = vmatmul.bf16.gmra.mxu0 %v214
    %v619 = vpop.f32.mrf.mxu0
    %v620 = vadd.f32 %v282, %v619
    %v621 = vpop.f32.mrf.mxu0
    %622 = vdwg.mxu0
    %623 = vmatpush.bf16.msra.mxu0 %v542
    %624 = vmatpush.bf16.msra.mxu0 %v538
    %625 = vmatpush.bf16.msra.mxu0 %v534
    %626 = vmatpush.bf16.msra.mxu0 %v530
    %627 = vmatpush.bf16.msra.mxu0 %v526
    %628 = vmatpush.bf16.msra.mxu0 %v522
    %629 = vmatpush.bf16.msra.mxu0 %v518
    %630 = vmatpush.bf16.msra.mxu0 %v514
    %631 = vmatmul.bf16.gmra.mxu0 %v215
    %v632 = vpop.f32.mrf.mxu0
    %v633 = vadd.f32 %v620, %v632
    %v634 = vpop.f32.mrf.mxu0
    %635 = vdwg.mxu0
    %636 = vmatpush.bf16.msra.mxu0 %v511
    %637 = vmatpush.bf16.msra.mxu0 %v507
    %638 = vmatpush.bf16.msra.mxu0 %v503
    %639 = vmatpush.bf16.msra.mxu0 %v499
    %640 = vmatpush.bf16.msra.mxu0 %v495
    %641 = vmatpush.bf16.msra.mxu0 %v491
    %642 = vmatpush.bf16.msra.mxu0 %v487
    %643 = vmatpush.bf16.msra.mxu0 %v483
    %644 = vmatmul.bf16.gmra.mxu0 %v214
    %v645 = vpop.f32.mrf.mxu0
    %v646 = vadd.f32 %v283, %v645
    %v647 = vpop.f32.mrf.mxu0
    %648 = vdwg.mxu0
    %649 = vmatpush.bf16.msra.mxu0 %v543
    %650 = vmatpush.bf16.msra.mxu0 %v539
    %651 = vmatpush.bf16.msra.mxu0 %v535
    %652 = vmatpush.bf16.msra.mxu0 %v531
    %653 = vmatpush.bf16.msra.mxu0 %v527
    %654 = vmatpush.bf16.msra.mxu0 %v523
    %655 = vmatpush.bf16.msra.mxu0 %v519
    %656 = vmatpush.bf16.msra.mxu0 %v515
    %657 = vmatmul.bf16.gmra.mxu0 %v215
    %v658 = vpop.f32.mrf.mxu0
    %v659 = vadd.f32 %v646, %v658
    %v660 = vpop.f32.mrf.mxu0
    %661 = vdwg.mxu0
    %662 = vmatpush.bf16.msra.mxu0 %v512
    %663 = vmatpush.bf16.msra.mxu0 %v508
    %664 = vmatpush.bf16.msra.mxu0 %v504
    %665 = vmatpush.bf16.msra.mxu0 %v500
    %666 = vmatpush.bf16.msra.mxu0 %v496
    %667 = vmatpush.bf16.msra.mxu0 %v492
    %668 = vmatpush.bf16.msra.mxu0 %v488
    %669 = vmatpush.bf16.msra.mxu0 %v484
    %670 = vmatmul.bf16.gmra.mxu0 %v214
    %v671 = vpop.f32.mrf.mxu0
    %v672 = vadd.f32 %v284, %v671
    %v673 = vpop.f32.mrf.mxu0
    %674 = vdwg.mxu0
    %675 = vmatpush.bf16.msra.mxu0 %v544
    %676 = vmatpush.bf16.msra.mxu0 %v540
    %677 = vmatpush.bf16.msra.mxu0 %v536
    %678 = vmatpush.bf16.msra.mxu0 %v532
    %679 = vmatpush.bf16.msra.mxu0 %v528
    %680 = vmatpush.bf16.msra.mxu0 %v524
    %681 = vmatpush.bf16.msra.mxu0 %v520
    %682 = vmatpush.bf16.msra.mxu0 %v516
    %683 = vmatmul.bf16.gmra.mxu0 %v215
    %v684 = vpop.f32.mrf.mxu0
    %v685 = vadd.f32 %v672, %v684
    %v686 = vpop.f32.mrf.mxu0
    %687 = vdwg.mxu0
    %688 = vmatpush.bf16.msra.mxu0 %v513
    %689 = vmatpush.bf16.msra.mxu0 %v509
    %690 = vmatpush.bf16.msra.mxu0 %v505
    %691 = vmatpush.bf16.msra.mxu0 %v501
    %692 = vmatpush.bf16.msra.mxu0 %v497
    %693 = vmatpush.bf16.msra.mxu0 %v493
    %694 = vmatpush.bf16.msra.mxu0 %v489
    %695 = vmatpush.bf16.msra.mxu0 %v485
    %696 = vmatmul.bf16.gmra.mxu0 %v214
    %v697 = vpop.f32.mrf.mxu0
    %v698 = vadd.f32 %v285, %v697
    %v699 = vpop.f32.mrf.mxu0
    %700 = vdwg.mxu0
    %701 = vmatpush.bf16.msra.mxu0 %v545
    %702 = vmatpush.bf16.msra.mxu0 %v541
    %703 = vmatpush.bf16.msra.mxu0 %v537
    %704 = vmatpush.bf16.msra.mxu0 %v533
    %705 = vmatpush.bf16.msra.mxu0 %v529
    %706 = vmatpush.bf16.msra.mxu0 %v525
    %707 = vmatpush.bf16.msra.mxu0 %v521
    %708 = vmatpush.bf16.msra.mxu0 %v517
    %709 = vmatmul.bf16.gmra.mxu0 %v215
    %v710 = vpop.f32.mrf.mxu0
    %v711 = vadd.f32 %v698, %v710
    %v712 = vpop.f32.mrf.mxu0
    %713 = vdwg.mxu0
    %v714 = vmax.f32 %v633, 0.0
    %v715 = vmax.f32 %v659, 0.0
    %v716 = vmax.f32 %v685, 0.0
    %v717 = vmax.f32 %v711, 0.0
    %v718 = vpack.c.bf16 %v714, %v714
    %v719 = vpack.c.bf16 %v715, %v715
    %v720 = vpack.c.bf16 %v716, %v716
    %v721 = vpack.c.bf16 %v717, %v717
    %v722 = vld [vmem:[#allocation11] sm:$0xff]
    %v723 = vld [vmem:[#allocation11 + $0x8] sm:$0xff]
    %v724 = vld [vmem:[#allocation11 + $0x10] sm:$0xff]
    %v725 = vld [vmem:[#allocation11 + $0x18] sm:$0xff]
    %v726 = vld [vmem:[#allocation11 + $0x20] sm:$0xff]
    %v727 = vld [vmem:[#allocation11 + $0x28] sm:$0xff]
    %v728 = vld [vmem:[#allocation11 + $0x30] sm:$0xff]
    %v729 = vld [vmem:[#allocation11 + $0x38] sm:$0xff]
    %v730 = vld [vmem:[#allocation11 + $0x40] sm:$0xff]
    %v731 = vld [vmem:[#allocation11 + $0x48] sm:$0xff]
    %v732 = vld [vmem:[#allocation11 + $0x50] sm:$0xff]
    %v733 = vld [vmem:[#allocation11 + $0x58] sm:$0xff]
    %v734 = vld [vmem:[#allocation11 + $0x60] sm:$0xff]
    %v735 = vld [vmem:[#allocation11 + $0x68] sm:$0xff]
    %v736 = vld [vmem:[#allocation11 + $0x70] sm:$0xff]
    %v737 = vld [vmem:[#allocation11 + $0x78] sm:$0xff]
    %v738 = vld [vmem:[#allocation11 + $0x80] sm:$0xff]
    %v739 = vld [vmem:[#allocation11 + $0x88] sm:$0xff]
    %v740 = vld [vmem:[#allocation11 + $0x90] sm:$0xff]
    %v741 = vld [vmem:[#allocation11 + $0x98] sm:$0xff]
    %v742 = vld [vmem:[#allocation11 + $0xa0] sm:$0xff]
    %v743 = vld [vmem:[#allocation11 + $0xa8] sm:$0xff]
    %v744 = vld [vmem:[#allocation11 + $0xb0] sm:$0xff]
    %v745 = vld [vmem:[#allocation11 + $0xb8] sm:$0xff]
    %v746 = vld [vmem:[#allocation11 + $0xc0] sm:$0xff]
    %v747 = vld [vmem:[#allocation11 + $0xc8] sm:$0xff]
    %v748 = vld [vmem:[#allocation11 + $0xd0] sm:$0xff]
    %v749 = vld [vmem:[#allocation11 + $0xd8] sm:$0xff]
    %v750 = vld [vmem:[#allocation11 + $0xe0] sm:$0xff]
    %v751 = vld [vmem:[#allocation11 + $0xe8] sm:$0xff]
    %v752 = vld [vmem:[#allocation11 + $0xf0] sm:$0xff]
    %v753 = vld [vmem:[#allocation11 + $0xf8] sm:$0xff]
    %v754 = vld [vmem:[#allocation11 + $0x100] sm:$0xff]
    %v755 = vld [vmem:[#allocation11 + $0x108] sm:$0xff]
    %v756 = vld [vmem:[#allocation11 + $0x110] sm:$0xff]
    %v757 = vld [vmem:[#allocation11 + $0x118] sm:$0xff]
    %v758 = vld [vmem:[#allocation11 + $0x120] sm:$0xff]
    %v759 = vld [vmem:[#allocation11 + $0x128] sm:$0xff]
    %v760 = vld [vmem:[#allocation11 + $0x130] sm:$0xff]
    %v761 = vld [vmem:[#allocation11 + $0x138] sm:$0xff]
    %v762 = vld [vmem:[#allocation11 + $0x140] sm:$0xff]
    %v763 = vld [vmem:[#allocation11 + $0x148] sm:$0xff]
    %v764 = vld [vmem:[#allocation11 + $0x150] sm:$0xff]
    %v765 = vld [vmem:[#allocation11 + $0x158] sm:$0xff]
    %v766 = vld [vmem:[#allocation11 + $0x160] sm:$0xff]
    %v767 = vld [vmem:[#allocation11 + $0x168] sm:$0xff]
    %v768 = vld [vmem:[#allocation11 + $0x170] sm:$0xff]
    %v769 = vld [vmem:[#allocation11 + $0x178] sm:$0xff]
    %v770 = vld [vmem:[#allocation11 + $0x180] sm:$0xff]
    %v771 = vld [vmem:[#allocation11 + $0x188] sm:$0xff]
    %v772 = vld [vmem:[#allocation11 + $0x190] sm:$0xff]
    %v773 = vld [vmem:[#allocation11 + $0x198] sm:$0xff]
    %v774 = vld [vmem:[#allocation11 + $0x1a0] sm:$0xff]
    %v775 = vld [vmem:[#allocation11 + $0x1a8] sm:$0xff]
    %v776 = vld [vmem:[#allocation11 + $0x1b0] sm:$0xff]
    %v777 = vld [vmem:[#allocation11 + $0x1b8] sm:$0xff]
    %v778 = vld [vmem:[#allocation11 + $0x1c0] sm:$0xff]
    %v779 = vld [vmem:[#allocation11 + $0x1c8] sm:$0xff]
    %v780 = vld [vmem:[#allocation11 + $0x1d0] sm:$0xff]
    %v781 = vld [vmem:[#allocation11 + $0x1d8] sm:$0xff]
    %v782 = vld [vmem:[#allocation11 + $0x1e0] sm:$0xff]
    %v783 = vld [vmem:[#allocation11 + $0x1e8] sm:$0xff]
    %v784 = vld [vmem:[#allocation11 + $0x1f0] sm:$0xff]
    %v785 = vld [vmem:[#allocation11 + $0x1f8] sm:$0xff]
    %v786 = vld [vmem:[#allocation11 + $0x200] sm:$0xff]
    %v787 = vld [vmem:[#allocation11 + $0x208] sm:$0xff]
    %v788 = vld [vmem:[#allocation11 + $0x210] sm:$0xff]
    %v789 = vld [vmem:[#allocation11 + $0x218] sm:$0xff]
    %v790 = vld [vmem:[#allocation11 + $0x220] sm:$0xff]
    %v791 = vld [vmem:[#allocation11 + $0x228] sm:$0xff]
    %v792 = vld [vmem:[#allocation11 + $0x230] sm:$0xff]
    %v793 = vld [vmem:[#allocation11 + $0x238] sm:$0xff]
    %v794 = vld [vmem:[#allocation11 + $0x240] sm:$0xff]
    %v795 = vld [vmem:[#allocation11 + $0x248] sm:$0xff]
    %v796 = vld [vmem:[#allocation11 + $0x250] sm:$0xff]
    %v797 = vld [vmem:[#allocation11 + $0x258] sm:$0xff]
    %v798 = vld [vmem:[#allocation11 + $0x260] sm:$0xff]
    %v799 = vld [vmem:[#allocation11 + $0x268] sm:$0xff]
    %v800 = vld [vmem:[#allocation11 + $0x270] sm:$0xff]
    %v801 = vld [vmem:[#allocation11 + $0x278] sm:$0xff]
    %v802 = vld [vmem:[#allocation11 + $0x280] sm:$0xff]
    %v803 = vld [vmem:[#allocation11 + $0x288] sm:$0xff]
    %v804 = vld [vmem:[#allocation11 + $0x290] sm:$0xff]
    %v805 = vld [vmem:[#allocation11 + $0x298] sm:$0xff]
    %v806 = vld [vmem:[#allocation11 + $0x2a0] sm:$0xff]
    %v807 = vld [vmem:[#allocation11 + $0x2a8] sm:$0xff]
    %v808 = vld [vmem:[#allocation11 + $0x2b0] sm:$0xff]
    %v809 = vld [vmem:[#allocation11 + $0x2b8] sm:$0xff]
    %v810 = vld [vmem:[#allocation11 + $0x2c0] sm:$0xff]
    %v811 = vld [vmem:[#allocation11 + $0x2c8] sm:$0xff]
    %v812 = vld [vmem:[#allocation11 + $0x2d0] sm:$0xff]
    %v813 = vld [vmem:[#allocation11 + $0x2d8] sm:$0xff]
    %v814 = vld [vmem:[#allocation11 + $0x2e0] sm:$0xff]
    %v815 = vld [vmem:[#allocation11 + $0x2e8] sm:$0xff]
    %v816 = vld [vmem:[#allocation11 + $0x2f0] sm:$0xff]
    %v817 = vld [vmem:[#allocation11 + $0x2f8] sm:$0xff]
    %v818 = vld [vmem:[#allocation11 + $0x300] sm:$0xff]
    %v819 = vld [vmem:[#allocation11 + $0x308] sm:$0xff]
    %v820 = vld [vmem:[#allocation11 + $0x310] sm:$0xff]
    %v821 = vld [vmem:[#allocation11 + $0x318] sm:$0xff]
    %v822 = vld [vmem:[#allocation11 + $0x320] sm:$0xff]
    %v823 = vld [vmem:[#allocation11 + $0x328] sm:$0xff]
    %v824 = vld [vmem:[#allocation11 + $0x330] sm:$0xff]
    %v825 = vld [vmem:[#allocation11 + $0x338] sm:$0xff]
    %v826 = vld [vmem:[#allocation11 + $0x340] sm:$0xff]
    %v827 = vld [vmem:[#allocation11 + $0x348] sm:$0xff]
    %v828 = vld [vmem:[#allocation11 + $0x350] sm:$0xff]
    %v829 = vld [vmem:[#allocation11 + $0x358] sm:$0xff]
    %v830 = vld [vmem:[#allocation11 + $0x360] sm:$0xff]
    %v831 = vld [vmem:[#allocation11 + $0x368] sm:$0xff]
    %v832 = vld [vmem:[#allocation11 + $0x370] sm:$0xff]
    %v833 = vld [vmem:[#allocation11 + $0x378] sm:$0xff]
    %v834 = vld [vmem:[#allocation11 + $0x380] sm:$0xff]
    %v835 = vld [vmem:[#allocation11 + $0x388] sm:$0xff]
    %v836 = vld [vmem:[#allocation11 + $0x390] sm:$0xff]
    %v837 = vld [vmem:[#allocation11 + $0x398] sm:$0xff]
    %v838 = vld [vmem:[#allocation11 + $0x3a0] sm:$0xff]
    %v839 = vld [vmem:[#allocation11 + $0x3a8] sm:$0xff]
    %v840 = vld [vmem:[#allocation11 + $0x3b0] sm:$0xff]
    %v841 = vld [vmem:[#allocation11 + $0x3b8] sm:$0xff]
    %v842 = vld [vmem:[#allocation11 + $0x3c0] sm:$0xff]
    %v843 = vld [vmem:[#allocation11 + $0x3c8] sm:$0xff]
    %v844 = vld [vmem:[#allocation11 + $0x3d0] sm:$0xff]
    %v845 = vld [vmem:[#allocation11 + $0x3d8] sm:$0xff]
    %v846 = vld [vmem:[#allocation11 + $0x3e0] sm:$0xff]
    %v847 = vld [vmem:[#allocation11 + $0x3e8] sm:$0xff]
    %v848 = vld [vmem:[#allocation11 + $0x3f0] sm:$0xff]
    %v849 = vld [vmem:[#allocation11 + $0x3f8] sm:$0xff]
    %v850 = vld [vmem:[#allocation11 + $0x400] sm:$0xff]
    %v851 = vld [vmem:[#allocation11 + $0x408] sm:$0xff]
    %v852 = vld [vmem:[#allocation11 + $0x410] sm:$0xff]
    %v853 = vld [vmem:[#allocation11 + $0x418] sm:$0xff]
    %v854 = vld [vmem:[#allocation11 + $0x420] sm:$0xff]
    %v855 = vld [vmem:[#allocation11 + $0x428] sm:$0xff]
    %v856 = vld [vmem:[#allocation11 + $0x430] sm:$0xff]
    %v857 = vld [vmem:[#allocation11 + $0x438] sm:$0xff]
    %v858 = vld [vmem:[#allocation11 + $0x440] sm:$0xff]
    %v859 = vld [vmem:[#allocation11 + $0x448] sm:$0xff]
    %v860 = vld [vmem:[#allocation11 + $0x450] sm:$0xff]
    %v861 = vld [vmem:[#allocation11 + $0x458] sm:$0xff]
    %v862 = vld [vmem:[#allocation11 + $0x460] sm:$0xff]
    %v863 = vld [vmem:[#allocation11 + $0x468] sm:$0xff]
    %v864 = vld [vmem:[#allocation11 + $0x470] sm:$0xff]
    %v865 = vld [vmem:[#allocation11 + $0x478] sm:$0xff]
    %v866 = vld [vmem:[#allocation11 + $0x480] sm:$0xff]
    %v867 = vld [vmem:[#allocation11 + $0x488] sm:$0xff]
    %v868 = vld [vmem:[#allocation11 + $0x490] sm:$0xff]
    %v869 = vld [vmem:[#allocation11 + $0x498] sm:$0xff]
    %v870 = vld [vmem:[#allocation11 + $0x4a0] sm:$0xff]
    %v871 = vld [vmem:[#allocation11 + $0x4a8] sm:$0xff]
    %v872 = vld [vmem:[#allocation11 + $0x4b0] sm:$0xff]
    %v873 = vld [vmem:[#allocation11 + $0x4b8] sm:$0xff]
    %v874 = vld [vmem:[#allocation11 + $0x4c0] sm:$0xff]
    %v875 = vld [vmem:[#allocation11 + $0x4c8] sm:$0xff]
    %v876 = vld [vmem:[#allocation11 + $0x4d0] sm:$0xff]
    %v877 = vld [vmem:[#allocation11 + $0x4d8] sm:$0xff]
    %v878 = vld [vmem:[#allocation11 + $0x4e0] sm:$0xff]
    %v879 = vld [vmem:[#allocation11 + $0x4e8] sm:$0xff]
    %v880 = vld [vmem:[#allocation11 + $0x4f0] sm:$0xff]
    %v881 = vld [vmem:[#allocation11 + $0x4f8] sm:$0xff]
    %v882 = vld [vmem:[#allocation11 + $0x500] sm:$0xff]
    %v883 = vld [vmem:[#allocation11 + $0x508] sm:$0xff]
    %v884 = vld [vmem:[#allocation11 + $0x510] sm:$0xff]
    %v885 = vld [vmem:[#allocation11 + $0x518] sm:$0xff]
    %v886 = vld [vmem:[#allocation11 + $0x520] sm:$0xff]
    %v887 = vld [vmem:[#allocation11 + $0x528] sm:$0xff]
    %v888 = vld [vmem:[#allocation11 + $0x530] sm:$0xff]
    %v889 = vld [vmem:[#allocation11 + $0x538] sm:$0xff]
    %v890 = vld [vmem:[#allocation11 + $0x540] sm:$0xff]
    %v891 = vld [vmem:[#allocation11 + $0x548] sm:$0xff]
    %v892 = vld [vmem:[#allocation11 + $0x550] sm:$0xff]
    %v893 = vld [vmem:[#allocation11 + $0x558] sm:$0xff]
    %v894 = vld [vmem:[#allocation11 + $0x560] sm:$0xff]
    %v895 = vld [vmem:[#allocation11 + $0x568] sm:$0xff]
    %v896 = vld [vmem:[#allocation11 + $0x570] sm:$0xff]
    %v897 = vld [vmem:[#allocation11 + $0x578] sm:$0xff]
    %v898 = vld [vmem:[#allocation11 + $0x580] sm:$0xff]
    %v899 = vld [vmem:[#allocation11 + $0x588] sm:$0xff]
    %v900 = vld [vmem:[#allocation11 + $0x590] sm:$0xff]
    %v901 = vld [vmem:[#allocation11 + $0x598] sm:$0xff]
    %v902 = vld [vmem:[#allocation11 + $0x5a0] sm:$0xff]
    %v903 = vld [vmem:[#allocation11 + $0x5a8] sm:$0xff]
    %v904 = vld [vmem:[#allocation11 + $0x5b0] sm:$0xff]
    %v905 = vld [vmem:[#allocation11 + $0x5b8] sm:$0xff]
    %v906 = vld [vmem:[#allocation11 + $0x5c0] sm:$0xff]
    %v907 = vld [vmem:[#allocation11 + $0x5c8] sm:$0xff]
    %v908 = vld [vmem:[#allocation11 + $0x5d0] sm:$0xff]
    %v909 = vld [vmem:[#allocation11 + $0x5d8] sm:$0xff]
    %v910 = vld [vmem:[#allocation11 + $0x5e0] sm:$0xff]
    %v911 = vld [vmem:[#allocation11 + $0x5e8] sm:$0xff]
    %v912 = vld [vmem:[#allocation11 + $0x5f0] sm:$0xff]
    %v913 = vld [vmem:[#allocation11 + $0x5f8] sm:$0xff]
    %v914 = vld [vmem:[#allocation11 + $0x600] sm:$0xff]
    %v915 = vld [vmem:[#allocation11 + $0x608] sm:$0xff]
    %v916 = vld [vmem:[#allocation11 + $0x610] sm:$0xff]
    %v917 = vld [vmem:[#allocation11 + $0x618] sm:$0xff]
    %v918 = vld [vmem:[#allocation11 + $0x620] sm:$0xff]
    %v919 = vld [vmem:[#allocation11 + $0x628] sm:$0xff]
    %v920 = vld [vmem:[#allocation11 + $0x630] sm:$0xff]
    %v921 = vld [vmem:[#allocation11 + $0x638] sm:$0xff]
    %v922 = vld [vmem:[#allocation11 + $0x640] sm:$0xff]
    %v923 = vld [vmem:[#allocation11 + $0x648] sm:$0xff]
    %v924 = vld [vmem:[#allocation11 + $0x650] sm:$0xff]
    %v925 = vld [vmem:[#allocation11 + $0x658] sm:$0xff]
    %v926 = vld [vmem:[#allocation11 + $0x660] sm:$0xff]
    %v927 = vld [vmem:[#allocation11 + $0x668] sm:$0xff]
    %v928 = vld [vmem:[#allocation11 + $0x670] sm:$0xff]
    %v929 = vld [vmem:[#allocation11 + $0x678] sm:$0xff]
    %v930 = vld [vmem:[#allocation11 + $0x680] sm:$0xff]
    %v931 = vld [vmem:[#allocation11 + $0x688] sm:$0xff]
    %v932 = vld [vmem:[#allocation11 + $0x690] sm:$0xff]
    %v933 = vld [vmem:[#allocation11 + $0x698] sm:$0xff]
    %v934 = vld [vmem:[#allocation11 + $0x6a0] sm:$0xff]
    %v935 = vld [vmem:[#allocation11 + $0x6a8] sm:$0xff]
    %v936 = vld [vmem:[#allocation11 + $0x6b0] sm:$0xff]
    %v937 = vld [vmem:[#allocation11 + $0x6b8] sm:$0xff]
    %v938 = vld [vmem:[#allocation11 + $0x6c0] sm:$0xff]
    %v939 = vld [vmem:[#allocation11 + $0x6c8] sm:$0xff]
    %v940 = vld [vmem:[#allocation11 + $0x6d0] sm:$0xff]
    %v941 = vld [vmem:[#allocation11 + $0x6d8] sm:$0xff]
    %v942 = vld [vmem:[#allocation11 + $0x6e0] sm:$0xff]
    %v943 = vld [vmem:[#allocation11 + $0x6e8] sm:$0xff]
    %v944 = vld [vmem:[#allocation11 + $0x6f0] sm:$0xff]
    %v945 = vld [vmem:[#allocation11 + $0x6f8] sm:$0xff]
    %v946 = vld [vmem:[#allocation11 + $0x700] sm:$0xff]
    %v947 = vld [vmem:[#allocation11 + $0x708] sm:$0xff]
    %v948 = vld [vmem:[#allocation11 + $0x710] sm:$0xff]
    %v949 = vld [vmem:[#allocation11 + $0x718] sm:$0xff]
    %v950 = vld [vmem:[#allocation11 + $0x720] sm:$0xff]
    %v951 = vld [vmem:[#allocation11 + $0x728] sm:$0xff]
    %v952 = vld [vmem:[#allocation11 + $0x730] sm:$0xff]
    %v953 = vld [vmem:[#allocation11 + $0x738] sm:$0xff]
    %v954 = vld [vmem:[#allocation11 + $0x740] sm:$0xff]
    %v955 = vld [vmem:[#allocation11 + $0x748] sm:$0xff]
    %v956 = vld [vmem:[#allocation11 + $0x750] sm:$0xff]
    %v957 = vld [vmem:[#allocation11 + $0x758] sm:$0xff]
    %v958 = vld [vmem:[#allocation11 + $0x760] sm:$0xff]
    %v959 = vld [vmem:[#allocation11 + $0x768] sm:$0xff]
    %v960 = vld [vmem:[#allocation11 + $0x770] sm:$0xff]
    %v961 = vld [vmem:[#allocation11 + $0x778] sm:$0xff]
    %v962 = vld [vmem:[#allocation11 + $0x780] sm:$0xff]
    %v963 = vld [vmem:[#allocation11 + $0x788] sm:$0xff]
    %v964 = vld [vmem:[#allocation11 + $0x790] sm:$0xff]
    %v965 = vld [vmem:[#allocation11 + $0x798] sm:$0xff]
    %v966 = vld [vmem:[#allocation11 + $0x7a0] sm:$0xff]
    %v967 = vld [vmem:[#allocation11 + $0x7a8] sm:$0xff]
    %v968 = vld [vmem:[#allocation11 + $0x7b0] sm:$0xff]
    %v969 = vld [vmem:[#allocation11 + $0x7b8] sm:$0xff]
    %v970 = vld [vmem:[#allocation11 + $0x7c0] sm:$0xff]
    %v971 = vld [vmem:[#allocation11 + $0x7c8] sm:$0xff]
    %v972 = vld [vmem:[#allocation11 + $0x7d0] sm:$0xff]
    %v973 = vld [vmem:[#allocation11 + $0x7d8] sm:$0xff]
    %v974 = vld [vmem:[#allocation11 + $0x7e0] sm:$0xff]
    %v975 = vld [vmem:[#allocation11 + $0x7e8] sm:$0xff]
    %v976 = vld [vmem:[#allocation11 + $0x7f0] sm:$0xff]
    %v977 = vld [vmem:[#allocation11 + $0x7f8] sm:$0xff]
    %v978 = vld [vmem:[#allocation13] sm:$0xff]
    %v980 = vperm.slane %v978, 0
    %v981 = vperm.slane %v978, 1
    %v982 = vperm.slane %v978, 2
    %v983 = vperm.slane %v978, 3
    %v984 = vperm.slane %v978, 4
    %v985 = vperm.slane %v978, 5
    %v986 = vperm.slane %v978, 6
    %v987 = vperm.slane %v978, 7
    %v1252 = vunpack.c.l.b16 %v722
    %v1253 = vunpack.c.h.b16 %v722
    %v1254 = vunpack.c.l.b16 %v723
    %v1255 = vunpack.c.h.b16 %v723
    %v1256 = vunpack.c.l.b16 %v724
    %v1257 = vunpack.c.h.b16 %v724
    %v1258 = vunpack.c.l.b16 %v725
    %v1259 = vunpack.c.h.b16 %v725
    %v1260 = vunpack.c.l.b16 %v726
    %v1261 = vunpack.c.h.b16 %v726
    %v1262 = vunpack.c.l.b16 %v727
    %v1263 = vunpack.c.h.b16 %v727
    %v1264 = vunpack.c.l.b16 %v728
    %v1265 = vunpack.c.h.b16 %v728
    %v1266 = vunpack.c.l.b16 %v729
    %v1267 = vunpack.c.h.b16 %v729
    %v1268 = vunpack.c.l.b16 %v730
    %v1269 = vunpack.c.h.b16 %v730
    %v1270 = vunpack.c.l.b16 %v731
    %v1271 = vunpack.c.h.b16 %v731
    %v1272 = vunpack.c.l.b16 %v732
    %v1273 = vunpack.c.h.b16 %v732
    %v1274 = vunpack.c.l.b16 %v733
    %v1275 = vunpack.c.h.b16 %v733
    %v1276 = vunpack.c.l.b16 %v734
    %v1277 = vunpack.c.h.b16 %v734
    %v1278 = vunpack.c.l.b16 %v735
    %v1279 = vunpack.c.h.b16 %v735
    %v1280 = vunpack.c.l.b16 %v736
    %v1281 = vunpack.c.h.b16 %v736
    %v1282 = vunpack.c.l.b16 %v737
    %v1283 = vunpack.c.h.b16 %v737
    %v1284 = vunpack.c.l.b16 %v738
    %v1285 = vunpack.c.h.b16 %v738
    %v1286 = vunpack.c.l.b16 %v739
    %v1287 = vunpack.c.h.b16 %v739
    %v1288 = vunpack.c.l.b16 %v740
    %v1289 = vunpack.c.h.b16 %v740
    %v1290 = vunpack.c.l.b16 %v741
    %v1291 = vunpack.c.h.b16 %v741
    %v1292 = vunpack.c.l.b16 %v742
    %v1293 = vunpack.c.h.b16 %v742
    %v1294 = vunpack.c.l.b16 %v743
    %v1295 = vunpack.c.h.b16 %v743
    %v1296 = vunpack.c.l.b16 %v744
    %v1297 = vunpack.c.h.b16 %v744
    %v1298 = vunpack.c.l.b16 %v745
    %v1299 = vunpack.c.h.b16 %v745
    %v1300 = vunpack.c.l.b16 %v746
    %v1301 = vunpack.c.h.b16 %v746
    %v1302 = vunpack.c.l.b16 %v747
    %v1303 = vunpack.c.h.b16 %v747
    %v1304 = vunpack.c.l.b16 %v748
    %v1305 = vunpack.c.h.b16 %v748
    %v1306 = vunpack.c.l.b16 %v749
    %v1307 = vunpack.c.h.b16 %v749
    %v1308 = vunpack.c.l.b16 %v750
    %v1309 = vunpack.c.h.b16 %v750
    %v1310 = vunpack.c.l.b16 %v751
    %v1311 = vunpack.c.h.b16 %v751
    %v1312 = vunpack.c.l.b16 %v752
    %v1313 = vunpack.c.h.b16 %v752
    %v1314 = vunpack.c.l.b16 %v753
    %v1315 = vunpack.c.h.b16 %v753
    %v1316 = vunpack.c.l.b16 %v754
    %v1317 = vunpack.c.h.b16 %v754
    %v1318 = vunpack.c.l.b16 %v755
    %v1319 = vunpack.c.h.b16 %v755
    %v1320 = vunpack.c.l.b16 %v756
    %v1321 = vunpack.c.h.b16 %v756
    %v1322 = vunpack.c.l.b16 %v757
    %v1323 = vunpack.c.h.b16 %v757
    %v1324 = vunpack.c.l.b16 %v758
    %v1325 = vunpack.c.h.b16 %v758
    %v1326 = vunpack.c.l.b16 %v759
    %v1327 = vunpack.c.h.b16 %v759
    %v1328 = vunpack.c.l.b16 %v760
    %v1329 = vunpack.c.h.b16 %v760
    %v1330 = vunpack.c.l.b16 %v761
    %v1331 = vunpack.c.h.b16 %v761
    %v1332 = vunpack.c.l.b16 %v762
    %v1333 = vunpack.c.h.b16 %v762
    %v1334 = vunpack.c.l.b16 %v763
    %v1335 = vunpack.c.h.b16 %v763
    %v1336 = vunpack.c.l.b16 %v764
    %v1337 = vunpack.c.h.b16 %v764
    %v1338 = vunpack.c.l.b16 %v765
    %v1339 = vunpack.c.h.b16 %v765
    %v1340 = vunpack.c.l.b16 %v766
    %v1341 = vunpack.c.h.b16 %v766
    %v1342 = vunpack.c.l.b16 %v767
    %v1343 = vunpack.c.h.b16 %v767
    %v1344 = vunpack.c.l.b16 %v768
    %v1345 = vunpack.c.h.b16 %v768
    %v1346 = vunpack.c.l.b16 %v769
    %v1347 = vunpack.c.h.b16 %v769
    %v1348 = vunpack.c.l.b16 %v770
    %v1349 = vunpack.c.h.b16 %v770
    %v1350 = vunpack.c.l.b16 %v771
    %v1351 = vunpack.c.h.b16 %v771
    %v1352 = vunpack.c.l.b16 %v772
    %v1353 = vunpack.c.h.b16 %v772
    %v1354 = vunpack.c.l.b16 %v773
    %v1355 = vunpack.c.h.b16 %v773
    %v1356 = vunpack.c.l.b16 %v774
    %v1357 = vunpack.c.h.b16 %v774
    %v1358 = vunpack.c.l.b16 %v775
    %v1359 = vunpack.c.h.b16 %v775
    %v1360 = vunpack.c.l.b16 %v776
    %v1361 = vunpack.c.h.b16 %v776
    %v1362 = vunpack.c.l.b16 %v777
    %v1363 = vunpack.c.h.b16 %v777
    %v1364 = vunpack.c.l.b16 %v778
    %v1365 = vunpack.c.h.b16 %v778
    %v1366 = vunpack.c.l.b16 %v779
    %v1367 = vunpack.c.h.b16 %v779
    %v1368 = vunpack.c.l.b16 %v780
    %v1369 = vunpack.c.h.b16 %v780
    %v1370 = vunpack.c.l.b16 %v781
    %v1371 = vunpack.c.h.b16 %v781
    %v1372 = vunpack.c.l.b16 %v782
    %v1373 = vunpack.c.h.b16 %v782
    %v1374 = vunpack.c.l.b16 %v783
    %v1375 = vunpack.c.h.b16 %v783
    %v1376 = vunpack.c.l.b16 %v784
    %v1377 = vunpack.c.h.b16 %v784
    %v1378 = vunpack.c.l.b16 %v785
    %v1379 = vunpack.c.h.b16 %v785
    %v1380 = vunpack.c.l.b16 %v786
    %v1381 = vunpack.c.h.b16 %v786
    %v1382 = vunpack.c.l.b16 %v787
    %v1383 = vunpack.c.h.b16 %v787
    %v1384 = vunpack.c.l.b16 %v788
    %v1385 = vunpack.c.h.b16 %v788
    %v1386 = vunpack.c.l.b16 %v789
    %v1387 = vunpack.c.h.b16 %v789
    %v1388 = vunpack.c.l.b16 %v790
    %v1389 = vunpack.c.h.b16 %v790
    %v1390 = vunpack.c.l.b16 %v791
    %v1391 = vunpack.c.h.b16 %v791
    %v1392 = vunpack.c.l.b16 %v792
    %v1393 = vunpack.c.h.b16 %v792
    %v1394 = vunpack.c.l.b16 %v793
    %v1395 = vunpack.c.h.b16 %v793
    %v1396 = vunpack.c.l.b16 %v794
    %v1397 = vunpack.c.h.b16 %v794
    %v1398 = vunpack.c.l.b16 %v795
    %v1399 = vunpack.c.h.b16 %v795
    %v1400 = vunpack.c.l.b16 %v796
    %v1401 = vunpack.c.h.b16 %v796
    %v1402 = vunpack.c.l.b16 %v797
    %v1403 = vunpack.c.h.b16 %v797
    %v1404 = vunpack.c.l.b16 %v798
    %v1405 = vunpack.c.h.b16 %v798
    %v1406 = vunpack.c.l.b16 %v799
    %v1407 = vunpack.c.h.b16 %v799
    %v1408 = vunpack.c.l.b16 %v800
    %v1409 = vunpack.c.h.b16 %v800
    %v1410 = vunpack.c.l.b16 %v801
    %v1411 = vunpack.c.h.b16 %v801
    %v1412 = vunpack.c.l.b16 %v802
    %v1413 = vunpack.c.h.b16 %v802
    %v1414 = vunpack.c.l.b16 %v803
    %v1415 = vunpack.c.h.b16 %v803
    %v1416 = vunpack.c.l.b16 %v804
    %v1417 = vunpack.c.h.b16 %v804
    %v1418 = vunpack.c.l.b16 %v805
    %v1419 = vunpack.c.h.b16 %v805
    %v1420 = vunpack.c.l.b16 %v806
    %v1421 = vunpack.c.h.b16 %v806
    %v1422 = vunpack.c.l.b16 %v807
    %v1423 = vunpack.c.h.b16 %v807
    %v1424 = vunpack.c.l.b16 %v808
    %v1425 = vunpack.c.h.b16 %v808
    %v1426 = vunpack.c.l.b16 %v809
    %v1427 = vunpack.c.h.b16 %v809
    %v1428 = vunpack.c.l.b16 %v810
    %v1429 = vunpack.c.h.b16 %v810
    %v1430 = vunpack.c.l.b16 %v811
    %v1431 = vunpack.c.h.b16 %v811
    %v1432 = vunpack.c.l.b16 %v812
    %v1433 = vunpack.c.h.b16 %v812
    %v1434 = vunpack.c.l.b16 %v813
    %v1435 = vunpack.c.h.b16 %v813
    %v1436 = vunpack.c.l.b16 %v814
    %v1437 = vunpack.c.h.b16 %v814
    %v1438 = vunpack.c.l.b16 %v815
    %v1439 = vunpack.c.h.b16 %v815
    %v1440 = vunpack.c.l.b16 %v816
    %v1441 = vunpack.c.h.b16 %v816
    %v1442 = vunpack.c.l.b16 %v817
    %v1443 = vunpack.c.h.b16 %v817
    %v1444 = vunpack.c.l.b16 %v818
    %v1445 = vunpack.c.h.b16 %v818
    %v1446 = vunpack.c.l.b16 %v819
    %v1447 = vunpack.c.h.b16 %v819
    %v1448 = vunpack.c.l.b16 %v820
    %v1449 = vunpack.c.h.b16 %v820
    %v1450 = vunpack.c.l.b16 %v821
    %v1451 = vunpack.c.h.b16 %v821
    %v1452 = vunpack.c.l.b16 %v822
    %v1453 = vunpack.c.h.b16 %v822
    %v1454 = vunpack.c.l.b16 %v823
    %v1455 = vunpack.c.h.b16 %v823
    %v1456 = vunpack.c.l.b16 %v824
    %v1457 = vunpack.c.h.b16 %v824
    %v1458 = vunpack.c.l.b16 %v825
    %v1459 = vunpack.c.h.b16 %v825
    %v1460 = vunpack.c.l.b16 %v826
    %v1461 = vunpack.c.h.b16 %v826
    %v1462 = vunpack.c.l.b16 %v827
    %v1463 = vunpack.c.h.b16 %v827
    %v1464 = vunpack.c.l.b16 %v828
    %v1465 = vunpack.c.h.b16 %v828
    %v1466 = vunpack.c.l.b16 %v829
    %v1467 = vunpack.c.h.b16 %v829
    %v1468 = vunpack.c.l.b16 %v830
    %v1469 = vunpack.c.h.b16 %v830
    %v1470 = vunpack.c.l.b16 %v831
    %v1471 = vunpack.c.h.b16 %v831
    %v1472 = vunpack.c.l.b16 %v832
    %v1473 = vunpack.c.h.b16 %v832
    %v1474 = vunpack.c.l.b16 %v833
    %v1475 = vunpack.c.h.b16 %v833
    %v1476 = vunpack.c.l.b16 %v834
    %v1477 = vunpack.c.h.b16 %v834
    %v1478 = vunpack.c.l.b16 %v835
    %v1479 = vunpack.c.h.b16 %v835
    %v1480 = vunpack.c.l.b16 %v836
    %v1481 = vunpack.c.h.b16 %v836
    %v1482 = vunpack.c.l.b16 %v837
    %v1483 = vunpack.c.h.b16 %v837
    %v1484 = vunpack.c.l.b16 %v838
    %v1485 = vunpack.c.h.b16 %v838
    %v1486 = vunpack.c.l.b16 %v839
    %v1487 = vunpack.c.h.b16 %v839
    %v1488 = vunpack.c.l.b16 %v840
    %v1489 = vunpack.c.h.b16 %v840
    %v1490 = vunpack.c.l.b16 %v841
    %v1491 = vunpack.c.h.b16 %v841
    %v1492 = vunpack.c.l.b16 %v842
    %v1493 = vunpack.c.h.b16 %v842
    %v1494 = vunpack.c.l.b16 %v843
    %v1495 = vunpack.c.h.b16 %v843
    %v1496 = vunpack.c.l.b16 %v844
    %v1497 = vunpack.c.h.b16 %v844
    %v1498 = vunpack.c.l.b16 %v845
    %v1499 = vunpack.c.h.b16 %v845
    %v1500 = vunpack.c.l.b16 %v846
    %v1501 = vunpack.c.h.b16 %v846
    %v1502 = vunpack.c.l.b16 %v847
    %v1503 = vunpack.c.h.b16 %v847
    %v1504 = vunpack.c.l.b16 %v848
    %v1505 = vunpack.c.h.b16 %v848
    %v1506 = vunpack.c.l.b16 %v849
    %v1507 = vunpack.c.h.b16 %v849
    %v1508 = vunpack.c.l.b16 %v850
    %v1509 = vunpack.c.h.b16 %v850
    %v1510 = vunpack.c.l.b16 %v851
    %v1511 = vunpack.c.h.b16 %v851
    %v1512 = vunpack.c.l.b16 %v852
    %v1513 = vunpack.c.h.b16 %v852
    %v1514 = vunpack.c.l.b16 %v853
    %v1515 = vunpack.c.h.b16 %v853
    %v1516 = vunpack.c.l.b16 %v854
    %v1517 = vunpack.c.h.b16 %v854
    %v1518 = vunpack.c.l.b16 %v855
    %v1519 = vunpack.c.h.b16 %v855
    %v1520 = vunpack.c.l.b16 %v856
    %v1521 = vunpack.c.h.b16 %v856
    %v1522 = vunpack.c.l.b16 %v857
    %v1523 = vunpack.c.h.b16 %v857
    %v1524 = vunpack.c.l.b16 %v858
    %v1525 = vunpack.c.h.b16 %v858
    %v1526 = vunpack.c.l.b16 %v859
    %v1527 = vunpack.c.h.b16 %v859
    %v1528 = vunpack.c.l.b16 %v860
    %v1529 = vunpack.c.h.b16 %v860
    %v1530 = vunpack.c.l.b16 %v861
    %v1531 = vunpack.c.h.b16 %v861
    %v1532 = vunpack.c.l.b16 %v862
    %v1533 = vunpack.c.h.b16 %v862
    %v1534 = vunpack.c.l.b16 %v863
    %v1535 = vunpack.c.h.b16 %v863
    %v1536 = vunpack.c.l.b16 %v864
    %v1537 = vunpack.c.h.b16 %v864
    %v1538 = vunpack.c.l.b16 %v865
    %v1539 = vunpack.c.h.b16 %v865
    %v1540 = vunpack.c.l.b16 %v866
    %v1541 = vunpack.c.h.b16 %v866
    %v1542 = vunpack.c.l.b16 %v867
    %v1543 = vunpack.c.h.b16 %v867
    %v1544 = vunpack.c.l.b16 %v868
    %v1545 = vunpack.c.h.b16 %v868
    %v1546 = vunpack.c.l.b16 %v869
    %v1547 = vunpack.c.h.b16 %v869
    %v1548 = vunpack.c.l.b16 %v870
    %v1549 = vunpack.c.h.b16 %v870
    %v1550 = vunpack.c.l.b16 %v871
    %v1551 = vunpack.c.h.b16 %v871
    %v1552 = vunpack.c.l.b16 %v872
    %v1553 = vunpack.c.h.b16 %v872
    %v1554 = vunpack.c.l.b16 %v873
    %v1555 = vunpack.c.h.b16 %v873
    %v1556 = vunpack.c.l.b16 %v874
    %v1557 = vunpack.c.h.b16 %v874
    %v1558 = vunpack.c.l.b16 %v875
    %v1559 = vunpack.c.h.b16 %v875
    %v1560 = vunpack.c.l.b16 %v876
    %v1561 = vunpack.c.h.b16 %v876
    %v1562 = vunpack.c.l.b16 %v877
    %v1563 = vunpack.c.h.b16 %v877
    %v1564 = vunpack.c.l.b16 %v878
    %v1565 = vunpack.c.h.b16 %v878
    %v1566 = vunpack.c.l.b16 %v879
    %v1567 = vunpack.c.h.b16 %v879
    %v1568 = vunpack.c.l.b16 %v880
    %v1569 = vunpack.c.h.b16 %v880
    %v1570 = vunpack.c.l.b16 %v881
    %v1571 = vunpack.c.h.b16 %v881
    %v1572 = vunpack.c.l.b16 %v882
    %v1573 = vunpack.c.h.b16 %v882
    %v1574 = vunpack.c.l.b16 %v883
    %v1575 = vunpack.c.h.b16 %v883
    %v1576 = vunpack.c.l.b16 %v884
    %v1577 = vunpack.c.h.b16 %v884
    %v1578 = vunpack.c.l.b16 %v885
    %v1579 = vunpack.c.h.b16 %v885
    %v1580 = vunpack.c.l.b16 %v886
    %v1581 = vunpack.c.h.b16 %v886
    %v1582 = vunpack.c.l.b16 %v887
    %v1583 = vunpack.c.h.b16 %v887
    %v1584 = vunpack.c.l.b16 %v888
    %v1585 = vunpack.c.h.b16 %v888
    %v1586 = vunpack.c.l.b16 %v889
    %v1587 = vunpack.c.h.b16 %v889
    %v1588 = vunpack.c.l.b16 %v890
    %v1589 = vunpack.c.h.b16 %v890
    %v1590 = vunpack.c.l.b16 %v891
    %v1591 = vunpack.c.h.b16 %v891
    %v1592 = vunpack.c.l.b16 %v892
    %v1593 = vunpack.c.h.b16 %v892
    %v1594 = vunpack.c.l.b16 %v893
    %v1595 = vunpack.c.h.b16 %v893
    %v1596 = vunpack.c.l.b16 %v894
    %v1597 = vunpack.c.h.b16 %v894
    %v1598 = vunpack.c.l.b16 %v895
    %v1599 = vunpack.c.h.b16 %v895
    %v1600 = vunpack.c.l.b16 %v896
    %v1601 = vunpack.c.h.b16 %v896
    %v1602 = vunpack.c.l.b16 %v897
    %v1603 = vunpack.c.h.b16 %v897
    %v1604 = vunpack.c.l.b16 %v898
    %v1605 = vunpack.c.h.b16 %v898
    %v1606 = vunpack.c.l.b16 %v899
    %v1607 = vunpack.c.h.b16 %v899
    %v1608 = vunpack.c.l.b16 %v900
    %v1609 = vunpack.c.h.b16 %v900
    %v1610 = vunpack.c.l.b16 %v901
    %v1611 = vunpack.c.h.b16 %v901
    %v1612 = vunpack.c.l.b16 %v902
    %v1613 = vunpack.c.h.b16 %v902
    %v1614 = vunpack.c.l.b16 %v903
    %v1615 = vunpack.c.h.b16 %v903
    %v1616 = vunpack.c.l.b16 %v904
    %v1617 = vunpack.c.h.b16 %v904
    %v1618 = vunpack.c.l.b16 %v905
    %v1619 = vunpack.c.h.b16 %v905
    %v1620 = vunpack.c.l.b16 %v906
    %v1621 = vunpack.c.h.b16 %v906
    %v1622 = vunpack.c.l.b16 %v907
    %v1623 = vunpack.c.h.b16 %v907
    %v1624 = vunpack.c.l.b16 %v908
    %v1625 = vunpack.c.h.b16 %v908
    %v1626 = vunpack.c.l.b16 %v909
    %v1627 = vunpack.c.h.b16 %v909
    %v1628 = vunpack.c.l.b16 %v910
    %v1629 = vunpack.c.h.b16 %v910
    %v1630 = vunpack.c.l.b16 %v911
    %v1631 = vunpack.c.h.b16 %v911
    %v1632 = vunpack.c.l.b16 %v912
    %v1633 = vunpack.c.h.b16 %v912
    %v1634 = vunpack.c.l.b16 %v913
    %v1635 = vunpack.c.h.b16 %v913
    %v1636 = vunpack.c.l.b16 %v914
    %v1637 = vunpack.c.h.b16 %v914
    %v1638 = vunpack.c.l.b16 %v915
    %v1639 = vunpack.c.h.b16 %v915
    %v1640 = vunpack.c.l.b16 %v916
    %v1641 = vunpack.c.h.b16 %v916
    %v1642 = vunpack.c.l.b16 %v917
    %v1643 = vunpack.c.h.b16 %v917
    %v1644 = vunpack.c.l.b16 %v918
    %v1645 = vunpack.c.h.b16 %v918
    %v1646 = vunpack.c.l.b16 %v919
    %v1647 = vunpack.c.h.b16 %v919
    %v1648 = vunpack.c.l.b16 %v920
    %v1649 = vunpack.c.h.b16 %v920
    %v1650 = vunpack.c.l.b16 %v921
    %v1651 = vunpack.c.h.b16 %v921
    %v1652 = vunpack.c.l.b16 %v922
    %v1653 = vunpack.c.h.b16 %v922
    %v1654 = vunpack.c.l.b16 %v923
    %v1655 = vunpack.c.h.b16 %v923
    %v1656 = vunpack.c.l.b16 %v924
    %v1657 = vunpack.c.h.b16 %v924
    %v1658 = vunpack.c.l.b16 %v925
    %v1659 = vunpack.c.h.b16 %v925
    %v1660 = vunpack.c.l.b16 %v926
    %v1661 = vunpack.c.h.b16 %v926
    %v1662 = vunpack.c.l.b16 %v927
    %v1663 = vunpack.c.h.b16 %v927
    %v1664 = vunpack.c.l.b16 %v928
    %v1665 = vunpack.c.h.b16 %v928
    %v1666 = vunpack.c.l.b16 %v929
    %v1667 = vunpack.c.h.b16 %v929
    %v1668 = vunpack.c.l.b16 %v930
    %v1669 = vunpack.c.h.b16 %v930
    %v1670 = vunpack.c.l.b16 %v931
    %v1671 = vunpack.c.h.b16 %v931
    %v1672 = vunpack.c.l.b16 %v932
    %v1673 = vunpack.c.h.b16 %v932
    %v1674 = vunpack.c.l.b16 %v933
    %v1675 = vunpack.c.h.b16 %v933
    %v1676 = vunpack.c.l.b16 %v934
    %v1677 = vunpack.c.h.b16 %v934
    %v1678 = vunpack.c.l.b16 %v935
    %v1679 = vunpack.c.h.b16 %v935
    %v1680 = vunpack.c.l.b16 %v936
    %v1681 = vunpack.c.h.b16 %v936
    %v1682 = vunpack.c.l.b16 %v937
    %v1683 = vunpack.c.h.b16 %v937
    %v1684 = vunpack.c.l.b16 %v938
    %v1685 = vunpack.c.h.b16 %v938
    %v1686 = vunpack.c.l.b16 %v939
    %v1687 = vunpack.c.h.b16 %v939
    %v1688 = vunpack.c.l.b16 %v940
    %v1689 = vunpack.c.h.b16 %v940
    %v1690 = vunpack.c.l.b16 %v941
    %v1691 = vunpack.c.h.b16 %v941
    %v1692 = vunpack.c.l.b16 %v942
    %v1693 = vunpack.c.h.b16 %v942
    %v1694 = vunpack.c.l.b16 %v943
    %v1695 = vunpack.c.h.b16 %v943
    %v1696 = vunpack.c.l.b16 %v944
    %v1697 = vunpack.c.h.b16 %v944
    %v1698 = vunpack.c.l.b16 %v945
    %v1699 = vunpack.c.h.b16 %v945
    %v1700 = vunpack.c.l.b16 %v946
    %v1701 = vunpack.c.h.b16 %v946
    %v1702 = vunpack.c.l.b16 %v947
    %v1703 = vunpack.c.h.b16 %v947
    %v1704 = vunpack.c.l.b16 %v948
    %v1705 = vunpack.c.h.b16 %v948
    %v1706 = vunpack.c.l.b16 %v949
    %v1707 = vunpack.c.h.b16 %v949
    %v1708 = vunpack.c.l.b16 %v950
    %v1709 = vunpack.c.h.b16 %v950
    %v1710 = vunpack.c.l.b16 %v951
    %v1711 = vunpack.c.h.b16 %v951
    %v1712 = vunpack.c.l.b16 %v952
    %v1713 = vunpack.c.h.b16 %v952
    %v1714 = vunpack.c.l.b16 %v953
    %v1715 = vunpack.c.h.b16 %v953
    %v1716 = vunpack.c.l.b16 %v954
    %v1717 = vunpack.c.h.b16 %v954
    %v1718 = vunpack.c.l.b16 %v955
    %v1719 = vunpack.c.h.b16 %v955
    %v1720 = vunpack.c.l.b16 %v956
    %v1721 = vunpack.c.h.b16 %v956
    %v1722 = vunpack.c.l.b16 %v957
    %v1723 = vunpack.c.h.b16 %v957
    %v1724 = vunpack.c.l.b16 %v958
    %v1725 = vunpack.c.h.b16 %v958
    %v1726 = vunpack.c.l.b16 %v959
    %v1727 = vunpack.c.h.b16 %v959
    %v1728 = vunpack.c.l.b16 %v960
    %v1729 = vunpack.c.h.b16 %v960
    %v1730 = vunpack.c.l.b16 %v961
    %v1731 = vunpack.c.h.b16 %v961
    %v1732 = vunpack.c.l.b16 %v962
    %v1733 = vunpack.c.h.b16 %v962
    %v1734 = vunpack.c.l.b16 %v963
    %v1735 = vunpack.c.h.b16 %v963
    %v1736 = vunpack.c.l.b16 %v964
    %v1737 = vunpack.c.h.b16 %v964
    %v1738 = vunpack.c.l.b16 %v965
    %v1739 = vunpack.c.h.b16 %v965
    %v1740 = vunpack.c.l.b16 %v966
    %v1741 = vunpack.c.h.b16 %v966
    %v1742 = vunpack.c.l.b16 %v967
    %v1743 = vunpack.c.h.b16 %v967
    %v1744 = vunpack.c.l.b16 %v968
    %v1745 = vunpack.c.h.b16 %v968
    %v1746 = vunpack.c.l.b16 %v969
    %v1747 = vunpack.c.h.b16 %v969
    %v1748 = vunpack.c.l.b16 %v970
    %v1749 = vunpack.c.h.b16 %v970
    %v1750 = vunpack.c.l.b16 %v971
    %v1751 = vunpack.c.h.b16 %v971
    %v1752 = vunpack.c.l.b16 %v972
    %v1753 = vunpack.c.h.b16 %v972
    %v1754 = vunpack.c.l.b16 %v973
    %v1755 = vunpack.c.h.b16 %v973
    %v1756 = vunpack.c.l.b16 %v974
    %v1757 = vunpack.c.h.b16 %v974
    %v1758 = vunpack.c.l.b16 %v975
    %v1759 = vunpack.c.h.b16 %v975
    %v1760 = vunpack.c.l.b16 %v976
    %v1761 = vunpack.c.h.b16 %v976
    %v1762 = vunpack.c.l.b16 %v977
    %v1763 = vunpack.c.h.b16 %v977
    %v1764 = vpack.c.b16 %v1260, %v1252
    %v1765 = vpack.c.b16 %v1261, %v1253
    %v1766 = vpack.c.b16 %v1262, %v1254
    %v1767 = vpack.c.b16 %v1263, %v1255
    %v1768 = vpack.c.b16 %v1264, %v1256
    %v1769 = vpack.c.b16 %v1265, %v1257
    %v1770 = vpack.c.b16 %v1266, %v1258
    %v1771 = vpack.c.b16 %v1267, %v1259
    %v1772 = vpack.c.b16 %v1276, %v1268
    %v1773 = vpack.c.b16 %v1277, %v1269
    %v1774 = vpack.c.b16 %v1278, %v1270
    %v1775 = vpack.c.b16 %v1279, %v1271
    %v1776 = vpack.c.b16 %v1280, %v1272
    %v1777 = vpack.c.b16 %v1281, %v1273
    %v1778 = vpack.c.b16 %v1282, %v1274
    %v1779 = vpack.c.b16 %v1283, %v1275
    %v1780 = vpack.c.b16 %v1292, %v1284
    %v1781 = vpack.c.b16 %v1293, %v1285
    %v1782 = vpack.c.b16 %v1294, %v1286
    %v1783 = vpack.c.b16 %v1295, %v1287
    %v1784 = vpack.c.b16 %v1296, %v1288
    %v1785 = vpack.c.b16 %v1297, %v1289
    %v1786 = vpack.c.b16 %v1298, %v1290
    %v1787 = vpack.c.b16 %v1299, %v1291
    %v1788 = vpack.c.b16 %v1308, %v1300
    %v1789 = vpack.c.b16 %v1309, %v1301
    %v1790 = vpack.c.b16 %v1310, %v1302
    %v1791 = vpack.c.b16 %v1311, %v1303
    %v1792 = vpack.c.b16 %v1312, %v1304
    %v1793 = vpack.c.b16 %v1313, %v1305
    %v1794 = vpack.c.b16 %v1314, %v1306
    %v1795 = vpack.c.b16 %v1315, %v1307
    %v1796 = vpack.c.b16 %v1324, %v1316
    %v1797 = vpack.c.b16 %v1325, %v1317
    %v1798 = vpack.c.b16 %v1326, %v1318
    %v1799 = vpack.c.b16 %v1327, %v1319
    %v1800 = vpack.c.b16 %v1328, %v1320
    %v1801 = vpack.c.b16 %v1329, %v1321
    %v1802 = vpack.c.b16 %v1330, %v1322
    %v1803 = vpack.c.b16 %v1331, %v1323
    %v1804 = vpack.c.b16 %v1340, %v1332
    %v1805 = vpack.c.b16 %v1341, %v1333
    %v1806 = vpack.c.b16 %v1342, %v1334
    %v1807 = vpack.c.b16 %v1343, %v1335
    %v1808 = vpack.c.b16 %v1344, %v1336
    %v1809 = vpack.c.b16 %v1345, %v1337
    %v1810 = vpack.c.b16 %v1346, %v1338
    %v1811 = vpack.c.b16 %v1347, %v1339
    %v1812 = vpack.c.b16 %v1356, %v1348
    %v1813 = vpack.c.b16 %v1357, %v1349
    %v1814 = vpack.c.b16 %v1358, %v1350
    %v1815 = vpack.c.b16 %v1359, %v1351
    %v1816 = vpack.c.b16 %v1360, %v1352
    %v1817 = vpack.c.b16 %v1361, %v1353
    %v1818 = vpack.c.b16 %v1362, %v1354
    %v1819 = vpack.c.b16 %v1363, %v1355
    %v1820 = vpack.c.b16 %v1372, %v1364
    %v1821 = vpack.c.b16 %v1373, %v1365
    %v1822 = vpack.c.b16 %v1374, %v1366
    %v1823 = vpack.c.b16 %v1375, %v1367
    %v1824 = vpack.c.b16 %v1376, %v1368
    %v1825 = vpack.c.b16 %v1377, %v1369
    %v1826 = vpack.c.b16 %v1378, %v1370
    %v1827 = vpack.c.b16 %v1379, %v1371
    %v1828 = vpack.c.b16 %v1388, %v1380
    %v1829 = vpack.c.b16 %v1389, %v1381
    %v1830 = vpack.c.b16 %v1390, %v1382
    %v1831 = vpack.c.b16 %v1391, %v1383
    %v1832 = vpack.c.b16 %v1392, %v1384
    %v1833 = vpack.c.b16 %v1393, %v1385
    %v1834 = vpack.c.b16 %v1394, %v1386
    %v1835 = vpack.c.b16 %v1395, %v1387
    %v1836 = vpack.c.b16 %v1404, %v1396
    %v1837 = vpack.c.b16 %v1405, %v1397
    %v1838 = vpack.c.b16 %v1406, %v1398
    %v1839 = vpack.c.b16 %v1407, %v1399
    %v1840 = vpack.c.b16 %v1408, %v1400
    %v1841 = vpack.c.b16 %v1409, %v1401
    %v1842 = vpack.c.b16 %v1410, %v1402
    %v1843 = vpack.c.b16 %v1411, %v1403
    %v1844 = vpack.c.b16 %v1420, %v1412
    %v1845 = vpack.c.b16 %v1421, %v1413
    %v1846 = vpack.c.b16 %v1422, %v1414
    %v1847 = vpack.c.b16 %v1423, %v1415
    %v1848 = vpack.c.b16 %v1424, %v1416
    %v1849 = vpack.c.b16 %v1425, %v1417
    %v1850 = vpack.c.b16 %v1426, %v1418
    %v1851 = vpack.c.b16 %v1427, %v1419
    %v1852 = vpack.c.b16 %v1436, %v1428
    %v1853 = vpack.c.b16 %v1437, %v1429
    %v1854 = vpack.c.b16 %v1438, %v1430
    %v1855 = vpack.c.b16 %v1439, %v1431
    %v1856 = vpack.c.b16 %v1440, %v1432
    %v1857 = vpack.c.b16 %v1441, %v1433
    %v1858 = vpack.c.b16 %v1442, %v1434
    %v1859 = vpack.c.b16 %v1443, %v1435
    %v1860 = vpack.c.b16 %v1452, %v1444
    %v1861 = vpack.c.b16 %v1453, %v1445
    %v1862 = vpack.c.b16 %v1454, %v1446
    %v1863 = vpack.c.b16 %v1455, %v1447
    %v1864 = vpack.c.b16 %v1456, %v1448
    %v1865 = vpack.c.b16 %v1457, %v1449
    %v1866 = vpack.c.b16 %v1458, %v1450
    %v1867 = vpack.c.b16 %v1459, %v1451
    %v1868 = vpack.c.b16 %v1468, %v1460
    %v1869 = vpack.c.b16 %v1469, %v1461
    %v1870 = vpack.c.b16 %v1470, %v1462
    %v1871 = vpack.c.b16 %v1471, %v1463
    %v1872 = vpack.c.b16 %v1472, %v1464
    %v1873 = vpack.c.b16 %v1473, %v1465
    %v1874 = vpack.c.b16 %v1474, %v1466
    %v1875 = vpack.c.b16 %v1475, %v1467
    %v1876 = vpack.c.b16 %v1484, %v1476
    %v1877 = vpack.c.b16 %v1485, %v1477
    %v1878 = vpack.c.b16 %v1486, %v1478
    %v1879 = vpack.c.b16 %v1487, %v1479
    %v1880 = vpack.c.b16 %v1488, %v1480
    %v1881 = vpack.c.b16 %v1489, %v1481
    %v1882 = vpack.c.b16 %v1490, %v1482
    %v1883 = vpack.c.b16 %v1491, %v1483
    %v1884 = vpack.c.b16 %v1500, %v1492
    %v1885 = vpack.c.b16 %v1501, %v1493
    %v1886 = vpack.c.b16 %v1502, %v1494
    %v1887 = vpack.c.b16 %v1503, %v1495
    %v1888 = vpack.c.b16 %v1504, %v1496
    %v1889 = vpack.c.b16 %v1505, %v1497
    %v1890 = vpack.c.b16 %v1506, %v1498
    %v1891 = vpack.c.b16 %v1507, %v1499
    %v1892 = vpack.c.b16 %v1516, %v1508
    %v1893 = vpack.c.b16 %v1517, %v1509
    %v1894 = vpack.c.b16 %v1518, %v1510
    %v1895 = vpack.c.b16 %v1519, %v1511
    %v1896 = vpack.c.b16 %v1520, %v1512
    %v1897 = vpack.c.b16 %v1521, %v1513
    %v1898 = vpack.c.b16 %v1522, %v1514
    %v1899 = vpack.c.b16 %v1523, %v1515
    %v1900 = vpack.c.b16 %v1532, %v1524
    %v1901 = vpack.c.b16 %v1533, %v1525
    %v1902 = vpack.c.b16 %v1534, %v1526
    %v1903 = vpack.c.b16 %v1535, %v1527
    %v1904 = vpack.c.b16 %v1536, %v1528
    %v1905 = vpack.c.b16 %v1537, %v1529
    %v1906 = vpack.c.b16 %v1538, %v1530
    %v1907 = vpack.c.b16 %v1539, %v1531
    %v1908 = vpack.c.b16 %v1548, %v1540
    %v1909 = vpack.c.b16 %v1549, %v1541
    %v1910 = vpack.c.b16 %v1550, %v1542
    %v1911 = vpack.c.b16 %v1551, %v1543
    %v1912 = vpack.c.b16 %v1552, %v1544
    %v1913 = vpack.c.b16 %v1553, %v1545
    %v1914 = vpack.c.b16 %v1554, %v1546
    %v1915 = vpack.c.b16 %v1555, %v1547
    %v1916 = vpack.c.b16 %v1564, %v1556
    %v1917 = vpack.c.b16 %v1565, %v1557
    %v1918 = vpack.c.b16 %v1566, %v1558
    %v1919 = vpack.c.b16 %v1567, %v1559
    %v1920 = vpack.c.b16 %v1568, %v1560
    %v1921 = vpack.c.b16 %v1569, %v1561
    %v1922 = vpack.c.b16 %v1570, %v1562
    %v1923 = vpack.c.b16 %v1571, %v1563
    %v1924 = vpack.c.b16 %v1580, %v1572
    %v1925 = vpack.c.b16 %v1581, %v1573
    %v1926 = vpack.c.b16 %v1582, %v1574
    %v1927 = vpack.c.b16 %v1583, %v1575
    %v1928 = vpack.c.b16 %v1584, %v1576
    %v1929 = vpack.c.b16 %v1585, %v1577
    %v1930 = vpack.c.b16 %v1586, %v1578
    %v1931 = vpack.c.b16 %v1587, %v1579
    %v1932 = vpack.c.b16 %v1596, %v1588
    %v1933 = vpack.c.b16 %v1597, %v1589
    %v1934 = vpack.c.b16 %v1598, %v1590
    %v1935 = vpack.c.b16 %v1599, %v1591
    %v1936 = vpack.c.b16 %v1600, %v1592
    %v1937 = vpack.c.b16 %v1601, %v1593
    %v1938 = vpack.c.b16 %v1602, %v1594
    %v1939 = vpack.c.b16 %v1603, %v1595
    %v1940 = vpack.c.b16 %v1612, %v1604
    %v1941 = vpack.c.b16 %v1613, %v1605
    %v1942 = vpack.c.b16 %v1614, %v1606
    %v1943 = vpack.c.b16 %v1615, %v1607
    %v1944 = vpack.c.b16 %v1616, %v1608
    %v1945 = vpack.c.b16 %v1617, %v1609
    %v1946 = vpack.c.b16 %v1618, %v1610
    %v1947 = vpack.c.b16 %v1619, %v1611
    %v1948 = vpack.c.b16 %v1628, %v1620
    %v1949 = vpack.c.b16 %v1629, %v1621
    %v1950 = vpack.c.b16 %v1630, %v1622
    %v1951 = vpack.c.b16 %v1631, %v1623
    %v1952 = vpack.c.b16 %v1632, %v1624
    %v1953 = vpack.c.b16 %v1633, %v1625
    %v1954 = vpack.c.b16 %v1634, %v1626
    %v1955 = vpack.c.b16 %v1635, %v1627
    %v1956 = vpack.c.b16 %v1644, %v1636
    %v1957 = vpack.c.b16 %v1645, %v1637
    %v1958 = vpack.c.b16 %v1646, %v1638
    %v1959 = vpack.c.b16 %v1647, %v1639
    %v1960 = vpack.c.b16 %v1648, %v1640
    %v1961 = vpack.c.b16 %v1649, %v1641
    %v1962 = vpack.c.b16 %v1650, %v1642
    %v1963 = vpack.c.b16 %v1651, %v1643
    %v1964 = vpack.c.b16 %v1660, %v1652
    %v1965 = vpack.c.b16 %v1661, %v1653
    %v1966 = vpack.c.b16 %v1662, %v1654
    %v1967 = vpack.c.b16 %v1663, %v1655
    %v1968 = vpack.c.b16 %v1664, %v1656
    %v1969 = vpack.c.b16 %v1665, %v1657
    %v1970 = vpack.c.b16 %v1666, %v1658
    %v1971 = vpack.c.b16 %v1667, %v1659
    %v1972 = vpack.c.b16 %v1676, %v1668
    %v1973 = vpack.c.b16 %v1677, %v1669
    %v1974 = vpack.c.b16 %v1678, %v1670
    %v1975 = vpack.c.b16 %v1679, %v1671
    %v1976 = vpack.c.b16 %v1680, %v1672
    %v1977 = vpack.c.b16 %v1681, %v1673
    %v1978 = vpack.c.b16 %v1682, %v1674
    %v1979 = vpack.c.b16 %v1683, %v1675
    %v1980 = vpack.c.b16 %v1692, %v1684
    %v1981 = vpack.c.b16 %v1693, %v1685
    %v1982 = vpack.c.b16 %v1694, %v1686
    %v1983 = vpack.c.b16 %v1695, %v1687
    %v1984 = vpack.c.b16 %v1696, %v1688
    %v1985 = vpack.c.b16 %v1697, %v1689
    %v1986 = vpack.c.b16 %v1698, %v1690
    %v1987 = vpack.c.b16 %v1699, %v1691
    %v1988 = vpack.c.b16 %v1708, %v1700
    %v1989 = vpack.c.b16 %v1709, %v1701
    %v1990 = vpack.c.b16 %v1710, %v1702
    %v1991 = vpack.c.b16 %v1711, %v1703
    %v1992 = vpack.c.b16 %v1712, %v1704
    %v1993 = vpack.c.b16 %v1713, %v1705
    %v1994 = vpack.c.b16 %v1714, %v1706
    %v1995 = vpack.c.b16 %v1715, %v1707
    %v1996 = vpack.c.b16 %v1724, %v1716
    %v1997 = vpack.c.b16 %v1725, %v1717
    %v1998 = vpack.c.b16 %v1726, %v1718
    %v1999 = vpack.c.b16 %v1727, %v1719
    %v2000 = vpack.c.b16 %v1728, %v1720
    %v2001 = vpack.c.b16 %v1729, %v1721
    %v2002 = vpack.c.b16 %v1730, %v1722
    %v2003 = vpack.c.b16 %v1731, %v1723
    %v2004 = vpack.c.b16 %v1740, %v1732
    %v2005 = vpack.c.b16 %v1741, %v1733
    %v2006 = vpack.c.b16 %v1742, %v1734
    %v2007 = vpack.c.b16 %v1743, %v1735
    %v2008 = vpack.c.b16 %v1744, %v1736
    %v2009 = vpack.c.b16 %v1745, %v1737
    %v2010 = vpack.c.b16 %v1746, %v1738
    %v2011 = vpack.c.b16 %v1747, %v1739
    %v2012 = vpack.c.b16 %v1756, %v1748
    %v2013 = vpack.c.b16 %v1757, %v1749
    %v2014 = vpack.c.b16 %v1758, %v1750
    %v2015 = vpack.c.b16 %v1759, %v1751
    %v2016 = vpack.c.b16 %v1760, %v1752
    %v2017 = vpack.c.b16 %v1761, %v1753
    %v2018 = vpack.c.b16 %v1762, %v1754
    %v2019 = vpack.c.b16 %v1763, %v1755
    %2276 = vmatpush.bf16.msra.mxu0 %v1820
    %2277 = vmatpush.bf16.msra.mxu0 %v1812
    %2278 = vmatpush.bf16.msra.mxu0 %v1804
    %2279 = vmatpush.bf16.msra.mxu0 %v1796
    %2280 = vmatpush.bf16.msra.mxu0 %v1788
    %2281 = vmatpush.bf16.msra.mxu0 %v1780
    %2282 = vmatpush.bf16.msra.mxu0 %v1772
    %2283 = vmatpush.bf16.msra.mxu0 %v1764
    %2284 = vmatmul.bf16.gmra.mxu0 %v718
    %v2285 = vpop.f32.mrf.mxu0
    %v2286 = vadd.f32 %v980, %v2285
    %v2287 = vpop.f32.mrf.mxu0
    %2288 = vdwg.mxu0
    %2289 = vmatpush.bf16.msra.mxu0 %v1884
    %2290 = vmatpush.bf16.msra.mxu0 %v1876
    %2291 = vmatpush.bf16.msra.mxu0 %v1868
    %2292 = vmatpush.bf16.msra.mxu0 %v1860
    %2293 = vmatpush.bf16.msra.mxu0 %v1852
    %2294 = vmatpush.bf16.msra.mxu0 %v1844
    %2295 = vmatpush.bf16.msra.mxu0 %v1836
    %2296 = vmatpush.bf16.msra.mxu0 %v1828
    %2297 = vmatmul.bf16.gmra.mxu0 %v719
    %v2298 = vpop.f32.mrf.mxu0
    %v2299 = vadd.f32 %v2286, %v2298
    %v2300 = vpop.f32.mrf.mxu0
    %2301 = vdwg.mxu0
    %2302 = vmatpush.bf16.msra.mxu0 %v1948
    %2303 = vmatpush.bf16.msra.mxu0 %v1940
    %2304 = vmatpush.bf16.msra.mxu0 %v1932
    %2305 = vmatpush.bf16.msra.mxu0 %v1924
    %2306 = vmatpush.bf16.msra.mxu0 %v1916
    %2307 = vmatpush.bf16.msra.mxu0 %v1908
    %2308 = vmatpush.bf16.msra.mxu0 %v1900
    %2309 = vmatpush.bf16.msra.mxu0 %v1892
    %2310 = vmatmul.bf16.gmra.mxu0 %v720
    %v2311 = vpop.f32.mrf.mxu0
    %v2312 = vadd.f32 %v2299, %v2311
    %v2313 = vpop.f32.mrf.mxu0
    %2314 = vdwg.mxu0
    %2315 = vmatpush.bf16.msra.mxu0 %v2012
    %2316 = vmatpush.bf16.msra.mxu0 %v2004
    %2317 = vmatpush.bf16.msra.mxu0 %v1996
    %2318 = vmatpush.bf16.msra.mxu0 %v1988
    %2319 = vmatpush.bf16.msra.mxu0 %v1980
    %2320 = vmatpush.bf16.msra.mxu0 %v1972
    %2321 = vmatpush.bf16.msra.mxu0 %v1964
    %2322 = vmatpush.bf16.msra.mxu0 %v1956
    %2323 = vmatmul.bf16.gmra.mxu0 %v721
    %v2324 = vpop.f32.mrf.mxu0
    %v2325 = vadd.f32 %v2312, %v2324
    %v2326 = vpop.f32.mrf.mxu0
    %2327 = vdwg.mxu0
    %2328 = vmatpush.bf16.msra.mxu0 %v1821
    %2329 = vmatpush.bf16.msra.mxu0 %v1813
    %2330 = vmatpush.bf16.msra.mxu0 %v1805
    %2331 = vmatpush.bf16.msra.mxu0 %v1797
    %2332 = vmatpush.bf16.msra.mxu0 %v1789
    %2333 = vmatpush.bf16.msra.mxu0 %v1781
    %2334 = vmatpush.bf16.msra.mxu0 %v1773
    %2335 = vmatpush.bf16.msra.mxu0 %v1765
    %2336 = vmatmul.bf16.gmra.mxu0 %v718
    %v2337 = vpop.f32.mrf.mxu0
    %v2338 = vadd.f32 %v981, %v2337
    %v2339 = vpop.f32.mrf.mxu0
    %2340 = vdwg.mxu0
    %2341 = vmatpush.bf16.msra.mxu0 %v1885
    %2342 = vmatpush.bf16.msra.mxu0 %v1877
    %2343 = vmatpush.bf16.msra.mxu0 %v1869
    %2344 = vmatpush.bf16.msra.mxu0 %v1861
    %2345 = vmatpush.bf16.msra.mxu0 %v1853
    %2346 = vmatpush.bf16.msra.mxu0 %v1845
    %2347 = vmatpush.bf16.msra.mxu0 %v1837
    %2348 = vmatpush.bf16.msra.mxu0 %v1829
    %2349 = vmatmul.bf16.gmra.mxu0 %v719
    %v2350 = vpop.f32.mrf.mxu0
    %v2351 = vadd.f32 %v2338, %v2350
    %v2352 = vpop.f32.mrf.mxu0
    %2353 = vdwg.mxu0
    %2354 = vmatpush.bf16.msra.mxu0 %v1949
    %2355 = vmatpush.bf16.msra.mxu0 %v1941
    %2356 = vmatpush.bf16.msra.mxu0 %v1933
    %2357 = vmatpush.bf16.msra.mxu0 %v1925
    %2358 = vmatpush.bf16.msra.mxu0 %v1917
    %2359 = vmatpush.bf16.msra.mxu0 %v1909
    %2360 = vmatpush.bf16.msra.mxu0 %v1901
    %2361 = vmatpush.bf16.msra.mxu0 %v1893
    %2362 = vmatmul.bf16.gmra.mxu0 %v720
    %v2363 = vpop.f32.mrf.mxu0
    %v2364 = vadd.f32 %v2351, %v2363
    %v2365 = vpop.f32.mrf.mxu0
    %2366 = vdwg.mxu0
    %2367 = vmatpush.bf16.msra.mxu0 %v2013
    %2368 = vmatpush.bf16.msra.mxu0 %v2005
    %2369 = vmatpush.bf16.msra.mxu0 %v1997
    %2370 = vmatpush.bf16.msra.mxu0 %v1989
    %2371 = vmatpush.bf16.msra.mxu0 %v1981
    %2372 = vmatpush.bf16.msra.mxu0 %v1973
    %2373 = vmatpush.bf16.msra.mxu0 %v1965
    %2374 = vmatpush.bf16.msra.mxu0 %v1957
    %2375 = vmatmul.bf16.gmra.mxu0 %v721
    %v2376 = vpop.f32.mrf.mxu0
    %v2377 = vadd.f32 %v2364, %v2376
    %v2378 = vpop.f32.mrf.mxu0
    %2379 = vdwg.mxu0
    %2380 = vmatpush.bf16.msra.mxu0 %v1822
    %2381 = vmatpush.bf16.msra.mxu0 %v1814
    %2382 = vmatpush.bf16.msra.mxu0 %v1806
    %2383 = vmatpush.bf16.msra.mxu0 %v1798
    %2384 = vmatpush.bf16.msra.mxu0 %v1790
    %2385 = vmatpush.bf16.msra.mxu0 %v1782
    %2386 = vmatpush.bf16.msra.mxu0 %v1774
    %2387 = vmatpush.bf16.msra.mxu0 %v1766
    %2388 = vmatmul.bf16.gmra.mxu0 %v718
    %v2389 = vpop.f32.mrf.mxu0
    %v2390 = vadd.f32 %v982, %v2389
    %v2391 = vpop.f32.mrf.mxu0
    %2392 = vdwg.mxu0
    %2393 = vmatpush.bf16.msra.mxu0 %v1886
    %2394 = vmatpush.bf16.msra.mxu0 %v1878
    %2395 = vmatpush.bf16.msra.mxu0 %v1870
    %2396 = vmatpush.bf16.msra.mxu0 %v1862
    %2397 = vmatpush.bf16.msra.mxu0 %v1854
    %2398 = vmatpush.bf16.msra.mxu0 %v1846
    %2399 = vmatpush.bf16.msra.mxu0 %v1838
    %2400 = vmatpush.bf16.msra.mxu0 %v1830
    %2401 = vmatmul.bf16.gmra.mxu0 %v719
    %v2402 = vpop.f32.mrf.mxu0
    %v2403 = vadd.f32 %v2390, %v2402
    %v2404 = vpop.f32.mrf.mxu0
    %2405 = vdwg.mxu0
    %2406 = vmatpush.bf16.msra.mxu0 %v1950
    %2407 = vmatpush.bf16.msra.mxu0 %v1942
    %2408 = vmatpush.bf16.msra.mxu0 %v1934
    %2409 = vmatpush.bf16.msra.mxu0 %v1926
    %2410 = vmatpush.bf16.msra.mxu0 %v1918
    %2411 = vmatpush.bf16.msra.mxu0 %v1910
    %2412 = vmatpush.bf16.msra.mxu0 %v1902
    %2413 = vmatpush.bf16.msra.mxu0 %v1894
    %2414 = vmatmul.bf16.gmra.mxu0 %v720
    %v2415 = vpop.f32.mrf.mxu0
    %v2416 = vadd.f32 %v2403, %v2415
    %v2417 = vpop.f32.mrf.mxu0
    %2418 = vdwg.mxu0
    %2419 = vmatpush.bf16.msra.mxu0 %v2014
    %2420 = vmatpush.bf16.msra.mxu0 %v2006
    %2421 = vmatpush.bf16.msra.mxu0 %v1998
    %2422 = vmatpush.bf16.msra.mxu0 %v1990
    %2423 = vmatpush.bf16.msra.mxu0 %v1982
    %2424 = vmatpush.bf16.msra.mxu0 %v1974
    %2425 = vmatpush.bf16.msra.mxu0 %v1966
    %2426 = vmatpush.bf16.msra.mxu0 %v1958
    %2427 = vmatmul.bf16.gmra.mxu0 %v721
    %v2428 = vpop.f32.mrf.mxu0
    %v2429 = vadd.f32 %v2416, %v2428
    %v2430 = vpop.f32.mrf.mxu0
    %2431 = vdwg.mxu0
    %2432 = vmatpush.bf16.msra.mxu0 %v1823
    %2433 = vmatpush.bf16.msra.mxu0 %v1815
    %2434 = vmatpush.bf16.msra.mxu0 %v1807
    %2435 = vmatpush.bf16.msra.mxu0 %v1799
    %2436 = vmatpush.bf16.msra.mxu0 %v1791
    %2437 = vmatpush.bf16.msra.mxu0 %v1783
    %2438 = vmatpush.bf16.msra.mxu0 %v1775
    %2439 = vmatpush.bf16.msra.mxu0 %v1767
    %2440 = vmatmul.bf16.gmra.mxu0 %v718
    %v2441 = vpop.f32.mrf.mxu0
    %v2442 = vadd.f32 %v983, %v2441
    %v2443 = vpop.f32.mrf.mxu0
    %2444 = vdwg.mxu0
    %2445 = vmatpush.bf16.msra.mxu0 %v1887
    %2446 = vmatpush.bf16.msra.mxu0 %v1879
    %2447 = vmatpush.bf16.msra.mxu0 %v1871
    %2448 = vmatpush.bf16.msra.mxu0 %v1863
    %2449 = vmatpush.bf16.msra.mxu0 %v1855
    %2450 = vmatpush.bf16.msra.mxu0 %v1847
    %2451 = vmatpush.bf16.msra.mxu0 %v1839
    %2452 = vmatpush.bf16.msra.mxu0 %v1831
    %2453 = vmatmul.bf16.gmra.mxu0 %v719
    %v2454 = vpop.f32.mrf.mxu0
    %v2455 = vadd.f32 %v2442, %v2454
    %v2456 = vpop.f32.mrf.mxu0
    %2457 = vdwg.mxu0
    %2458 = vmatpush.bf16.msra.mxu0 %v1951
    %2459 = vmatpush.bf16.msra.mxu0 %v1943
    %2460 = vmatpush.bf16.msra.mxu0 %v1935
    %2461 = vmatpush.bf16.msra.mxu0 %v1927
    %2462 = vmatpush.bf16.msra.mxu0 %v1919
    %2463 = vmatpush.bf16.msra.mxu0 %v1911
    %2464 = vmatpush.bf16.msra.mxu0 %v1903
    %2465 = vmatpush.bf16.msra.mxu0 %v1895
    %2466 = vmatmul.bf16.gmra.mxu0 %v720
    %v2467 = vpop.f32.mrf.mxu0
    %v2468 = vadd.f32 %v2455, %v2467
    %v2469 = vpop.f32.mrf.mxu0
    %2470 = vdwg.mxu0
    %2471 = vmatpush.bf16.msra.mxu0 %v2015
    %2472 = vmatpush.bf16.msra.mxu0 %v2007
    %2473 = vmatpush.bf16.msra.mxu0 %v1999
    %2474 = vmatpush.bf16.msra.mxu0 %v1991
    %2475 = vmatpush.bf16.msra.mxu0 %v1983
    %2476 = vmatpush.bf16.msra.mxu0 %v1975
    %2477 = vmatpush.bf16.msra.mxu0 %v1967
    %2478 = vmatpush.bf16.msra.mxu0 %v1959
    %2479 = vmatmul.bf16.gmra.mxu0 %v721
    %v2480 = vpop.f32.mrf.mxu0
    %v2481 = vadd.f32 %v2468, %v2480
    %v2482 = vpop.f32.mrf.mxu0
    %2483 = vdwg.mxu0
    %2484 = vmatpush.bf16.msra.mxu0 %v1824
    %2485 = vmatpush.bf16.msra.mxu0 %v1816
    %2486 = vmatpush.bf16.msra.mxu0 %v1808
    %2487 = vmatpush.bf16.msra.mxu0 %v1800
    %2488 = vmatpush.bf16.msra.mxu0 %v1792
    %2489 = vmatpush.bf16.msra.mxu0 %v1784
    %2490 = vmatpush.bf16.msra.mxu0 %v1776
    %2491 = vmatpush.bf16.msra.mxu0 %v1768
    %2492 = vmatmul.bf16.gmra.mxu0 %v718
    %v2493 = vpop.f32.mrf.mxu0
    %v2494 = vadd.f32 %v984, %v2493
    %v2495 = vpop.f32.mrf.mxu0
    %2496 = vdwg.mxu0
    %2497 = vmatpush.bf16.msra.mxu0 %v1888
    %2498 = vmatpush.bf16.msra.mxu0 %v1880
    %2499 = vmatpush.bf16.msra.mxu0 %v1872
    %2500 = vmatpush.bf16.msra.mxu0 %v1864
    %2501 = vmatpush.bf16.msra.mxu0 %v1856
    %2502 = vmatpush.bf16.msra.mxu0 %v1848
    %2503 = vmatpush.bf16.msra.mxu0 %v1840
    %2504 = vmatpush.bf16.msra.mxu0 %v1832
    %2505 = vmatmul.bf16.gmra.mxu0 %v719
    %v2506 = vpop.f32.mrf.mxu0
    %v2507 = vadd.f32 %v2494, %v2506
    %v2508 = vpop.f32.mrf.mxu0
    %2509 = vdwg.mxu0
    %2510 = vmatpush.bf16.msra.mxu0 %v1952
    %2511 = vmatpush.bf16.msra.mxu0 %v1944
    %2512 = vmatpush.bf16.msra.mxu0 %v1936
    %2513 = vmatpush.bf16.msra.mxu0 %v1928
    %2514 = vmatpush.bf16.msra.mxu0 %v1920
    %2515 = vmatpush.bf16.msra.mxu0 %v1912
    %2516 = vmatpush.bf16.msra.mxu0 %v1904
    %2517 = vmatpush.bf16.msra.mxu0 %v1896
    %2518 = vmatmul.bf16.gmra.mxu0 %v720
    %v2519 = vpop.f32.mrf.mxu0
    %v2520 = vadd.f32 %v2507, %v2519
    %v2521 = vpop.f32.mrf.mxu0
    %2522 = vdwg.mxu0
    %2523 = vmatpush.bf16.msra.mxu0 %v2016
    %2524 = vmatpush.bf16.msra.mxu0 %v2008
    %2525 = vmatpush.bf16.msra.mxu0 %v2000
    %2526 = vmatpush.bf16.msra.mxu0 %v1992
    %2527 = vmatpush.bf16.msra.mxu0 %v1984
    %2528 = vmatpush.bf16.msra.mxu0 %v1976
    %2529 = vmatpush.bf16.msra.mxu0 %v1968
    %2530 = vmatpush.bf16.msra.mxu0 %v1960
    %2531 = vmatmul.bf16.gmra.mxu0 %v721
    %v2532 = vpop.f32.mrf.mxu0
    %v2533 = vadd.f32 %v2520, %v2532
    %v2534 = vpop.f32.mrf.mxu0
    %2535 = vdwg.mxu0
    %2536 = vmatpush.bf16.msra.mxu0 %v1825
    %2537 = vmatpush.bf16.msra.mxu0 %v1817
    %2538 = vmatpush.bf16.msra.mxu0 %v1809
    %2539 = vmatpush.bf16.msra.mxu0 %v1801
    %2540 = vmatpush.bf16.msra.mxu0 %v1793
    %2541 = vmatpush.bf16.msra.mxu0 %v1785
    %2542 = vmatpush.bf16.msra.mxu0 %v1777
    %2543 = vmatpush.bf16.msra.mxu0 %v1769
    %2544 = vmatmul.bf16.gmra.mxu0 %v718
    %v2545 = vpop.f32.mrf.mxu0
    %v2546 = vadd.f32 %v985, %v2545
    %v2547 = vpop.f32.mrf.mxu0
    %2548 = vdwg.mxu0
    %2549 = vmatpush.bf16.msra.mxu0 %v1889
    %2550 = vmatpush.bf16.msra.mxu0 %v1881
    %2551 = vmatpush.bf16.msra.mxu0 %v1873
    %2552 = vmatpush.bf16.msra.mxu0 %v1865
    %2553 = vmatpush.bf16.msra.mxu0 %v1857
    %2554 = vmatpush.bf16.msra.mxu0 %v1849
    %2555 = vmatpush.bf16.msra.mxu0 %v1841
    %2556 = vmatpush.bf16.msra.mxu0 %v1833
    %2557 = vmatmul.bf16.gmra.mxu0 %v719
    %v2558 = vpop.f32.mrf.mxu0
    %v2559 = vadd.f32 %v2546, %v2558
    %v2560 = vpop.f32.mrf.mxu0
    %2561 = vdwg.mxu0
    %2562 = vmatpush.bf16.msra.mxu0 %v1953
    %2563 = vmatpush.bf16.msra.mxu0 %v1945
    %2564 = vmatpush.bf16.msra.mxu0 %v1937
    %2565 = vmatpush.bf16.msra.mxu0 %v1929
    %2566 = vmatpush.bf16.msra.mxu0 %v1921
    %2567 = vmatpush.bf16.msra.mxu0 %v1913
    %2568 = vmatpush.bf16.msra.mxu0 %v1905
    %2569 = vmatpush.bf16.msra.mxu0 %v1897
    %2570 = vmatmul.bf16.gmra.mxu0 %v720
    %v2571 = vpop.f32.mrf.mxu0
    %v2572 = vadd.f32 %v2559, %v2571
    %v2573 = vpop.f32.mrf.mxu0
    %2574 = vdwg.mxu0
    %2575 = vmatpush.bf16.msra.mxu0 %v2017
    %2576 = vmatpush.bf16.msra.mxu0 %v2009
    %2577 = vmatpush.bf16.msra.mxu0 %v2001
    %2578 = vmatpush.bf16.msra.mxu0 %v1993
    %2579 = vmatpush.bf16.msra.mxu0 %v1985
    %2580 = vmatpush.bf16.msra.mxu0 %v1977
    %2581 = vmatpush.bf16.msra.mxu0 %v1969
    %2582 = vmatpush.bf16.msra.mxu0 %v1961
    %2583 = vmatmul.bf16.gmra.mxu0 %v721
    %v2584 = vpop.f32.mrf.mxu0
    %v2585 = vadd.f32 %v2572, %v2584
    %v2586 = vpop.f32.mrf.mxu0
    %2587 = vdwg.mxu0
    %2588 = vmatpush.bf16.msra.mxu0 %v1826
    %2589 = vmatpush.bf16.msra.mxu0 %v1818
    %2590 = vmatpush.bf16.msra.mxu0 %v1810
    %2591 = vmatpush.bf16.msra.mxu0 %v1802
    %2592 = vmatpush.bf16.msra.mxu0 %v1794
    %2593 = vmatpush.bf16.msra.mxu0 %v1786
    %2594 = vmatpush.bf16.msra.mxu0 %v1778
    %2595 = vmatpush.bf16.msra.mxu0 %v1770
    %2596 = vmatmul.bf16.gmra.mxu0 %v718
    %v2597 = vpop.f32.mrf.mxu0
    %v2598 = vadd.f32 %v986, %v2597
    %v2599 = vpop.f32.mrf.mxu0
    %2600 = vdwg.mxu0
    %2601 = vmatpush.bf16.msra.mxu0 %v1890
    %2602 = vmatpush.bf16.msra.mxu0 %v1882
    %2603 = vmatpush.bf16.msra.mxu0 %v1874
    %2604 = vmatpush.bf16.msra.mxu0 %v1866
    %2605 = vmatpush.bf16.msra.mxu0 %v1858
    %2606 = vmatpush.bf16.msra.mxu0 %v1850
    %2607 = vmatpush.bf16.msra.mxu0 %v1842
    %2608 = vmatpush.bf16.msra.mxu0 %v1834
    %2609 = vmatmul.bf16.gmra.mxu0 %v719
    %v2610 = vpop.f32.mrf.mxu0
    %v2611 = vadd.f32 %v2598, %v2610
    %v2612 = vpop.f32.mrf.mxu0
    %2613 = vdwg.mxu0
    %2614 = vmatpush.bf16.msra.mxu0 %v1954
    %2615 = vmatpush.bf16.msra.mxu0 %v1946
    %2616 = vmatpush.bf16.msra.mxu0 %v1938
    %2617 = vmatpush.bf16.msra.mxu0 %v1930
    %2618 = vmatpush.bf16.msra.mxu0 %v1922
    %2619 = vmatpush.bf16.msra.mxu0 %v1914
    %2620 = vmatpush.bf16.msra.mxu0 %v1906
    %2621 = vmatpush.bf16.msra.mxu0 %v1898
    %2622 = vmatmul.bf16.gmra.mxu0 %v720
    %v2623 = vpop.f32.mrf.mxu0
    %v2624 = vadd.f32 %v2611, %v2623
    %v2625 = vpop.f32.mrf.mxu0
    %2626 = vdwg.mxu0
    %2627 = vmatpush.bf16.msra.mxu0 %v2018
    %2628 = vmatpush.bf16.msra.mxu0 %v2010
    %2629 = vmatpush.bf16.msra.mxu0 %v2002
    %2630 = vmatpush.bf16.msra.mxu0 %v1994
    %2631 = vmatpush.bf16.msra.mxu0 %v1986
    %2632 = vmatpush.bf16.msra.mxu0 %v1978
    %2633 = vmatpush.bf16.msra.mxu0 %v1970
    %2634 = vmatpush.bf16.msra.mxu0 %v1962
    %2635 = vmatmul.bf16.gmra.mxu0 %v721
    %v2636 = vpop.f32.mrf.mxu0
    %v2637 = vadd.f32 %v2624, %v2636
    %v2638 = vpop.f32.mrf.mxu0
    %2639 = vdwg.mxu0
    %2640 = vmatpush.bf16.msra.mxu0 %v1827
    %2641 = vmatpush.bf16.msra.mxu0 %v1819
    %2642 = vmatpush.bf16.msra.mxu0 %v1811
    %2643 = vmatpush.bf16.msra.mxu0 %v1803
    %2644 = vmatpush.bf16.msra.mxu0 %v1795
    %2645 = vmatpush.bf16.msra.mxu0 %v1787
    %2646 = vmatpush.bf16.msra.mxu0 %v1779
    %2647 = vmatpush.bf16.msra.mxu0 %v1771
    %2648 = vmatmul.bf16.gmra.mxu0 %v718
    %v2649 = vpop.f32.mrf.mxu0
    %v2650 = vadd.f32 %v987, %v2649
    %v2651 = vpop.f32.mrf.mxu0
    %2652 = vdwg.mxu0
    %2653 = vmatpush.bf16.msra.mxu0 %v1891
    %2654 = vmatpush.bf16.msra.mxu0 %v1883
    %2655 = vmatpush.bf16.msra.mxu0 %v1875
    %2656 = vmatpush.bf16.msra.mxu0 %v1867
    %2657 = vmatpush.bf16.msra.mxu0 %v1859
    %2658 = vmatpush.bf16.msra.mxu0 %v1851
    %2659 = vmatpush.bf16.msra.mxu0 %v1843
    %2660 = vmatpush.bf16.msra.mxu0 %v1835
    %2661 = vmatmul.bf16.gmra.mxu0 %v719
    %v2662 = vpop.f32.mrf.mxu0
    %v2663 = vadd.f32 %v2650, %v2662
    %v2664 = vpop.f32.mrf.mxu0
    %2665 = vdwg.mxu0
    %2666 = vmatpush.bf16.msra.mxu0 %v1955
    %2667 = vmatpush.bf16.msra.mxu0 %v1947
    %2668 = vmatpush.bf16.msra.mxu0 %v1939
    %2669 = vmatpush.bf16.msra.mxu0 %v1931
    %2670 = vmatpush.bf16.msra.mxu0 %v1923
    %2671 = vmatpush.bf16.msra.mxu0 %v1915
    %2672 = vmatpush.bf16.msra.mxu0 %v1907
    %2673 = vmatpush.bf16.msra.mxu0 %v1899
    %2674 = vmatmul.bf16.gmra.mxu0 %v720
    %v2675 = vpop.f32.mrf.mxu0
    %v2676 = vadd.f32 %v2663, %v2675
    %v2677 = vpop.f32.mrf.mxu0
    %2678 = vdwg.mxu0
    %2679 = vmatpush.bf16.msra.mxu0 %v2019
    %2680 = vmatpush.bf16.msra.mxu0 %v2011
    %2681 = vmatpush.bf16.msra.mxu0 %v2003
    %2682 = vmatpush.bf16.msra.mxu0 %v1995
    %2683 = vmatpush.bf16.msra.mxu0 %v1987
    %2684 = vmatpush.bf16.msra.mxu0 %v1979
    %2685 = vmatpush.bf16.msra.mxu0 %v1971
    %2686 = vmatpush.bf16.msra.mxu0 %v1963
    %2687 = vmatmul.bf16.gmra.mxu0 %v721
    %v2688 = vpop.f32.mrf.mxu0
    %v2689 = vadd.f32 %v2676, %v2688
    %v2690 = vpop.f32.mrf.mxu0
    %2691 = vdwg.mxu0
    %v2692 = vmax.f32 %v2325, 0.0
    %v2693 = vmax.f32 %v2377, 0.0
    %v2694 = vmax.f32 %v2429, 0.0
    %v2695 = vmax.f32 %v2481, 0.0
    %v2696 = vmax.f32 %v2533, 0.0
    %v2697 = vmax.f32 %v2585, 0.0
    %v2698 = vmax.f32 %v2637, 0.0
    %v2699 = vmax.f32 %v2689, 0.0
    %v2700 = vpack.c.bf16 %v2692, %v2692
    %v2701 = vpack.c.bf16 %v2693, %v2693
    %v2702 = vpack.c.bf16 %v2694, %v2694
    %v2703 = vpack.c.bf16 %v2695, %v2695
    %v2704 = vpack.c.bf16 %v2696, %v2696
    %v2705 = vpack.c.bf16 %v2697, %v2697
    %v2706 = vpack.c.bf16 %v2698, %v2698
    %v2707 = vpack.c.bf16 %v2699, %v2699
    %v2708 = vld [vmem:[#allocation14] sm:$0xff]
    %v2709 = vld [vmem:[#allocation14 + $0x8] sm:$0xff]
    %v2710 = vld [vmem:[#allocation14 + $0x10] sm:$0xff]
    %v2711 = vld [vmem:[#allocation14 + $0x18] sm:$0xff]
    %v2712 = vld [vmem:[#allocation14 + $0x20] sm:$0xff]
    %v2713 = vld [vmem:[#allocation14 + $0x28] sm:$0xff]
    %v2714 = vld [vmem:[#allocation14 + $0x30] sm:$0xff]
    %v2715 = vld [vmem:[#allocation14 + $0x38] sm:$0xff]
    %v2716 = vld [vmem:[#allocation14 + $0x40] sm:$0xff]
    %v2717 = vld [vmem:[#allocation14 + $0x48] sm:$0xff]
    %v2718 = vld [vmem:[#allocation14 + $0x50] sm:$0xff]
    %v2719 = vld [vmem:[#allocation14 + $0x58] sm:$0xff]
    %v2720 = vld [vmem:[#allocation14 + $0x60] sm:$0xff]
    %v2721 = vld [vmem:[#allocation14 + $0x68] sm:$0xff]
    %v2722 = vld [vmem:[#allocation14 + $0x70] sm:$0xff]
    %v2723 = vld [vmem:[#allocation14 + $0x78] sm:$0xff]
    %v2724 = vld [vmem:[#allocation14 + $0x80] sm:$0xff]
    %v2725 = vld [vmem:[#allocation14 + $0x88] sm:$0xff]
    %v2726 = vld [vmem:[#allocation14 + $0x90] sm:$0xff]
    %v2727 = vld [vmem:[#allocation14 + $0x98] sm:$0xff]
    %v2728 = vld [vmem:[#allocation14 + $0xa0] sm:$0xff]
    %v2729 = vld [vmem:[#allocation14 + $0xa8] sm:$0xff]
    %v2730 = vld [vmem:[#allocation14 + $0xb0] sm:$0xff]
    %v2731 = vld [vmem:[#allocation14 + $0xb8] sm:$0xff]
    %v2732 = vld [vmem:[#allocation14 + $0xc0] sm:$0xff]
    %v2733 = vld [vmem:[#allocation14 + $0xc8] sm:$0xff]
    %v2734 = vld [vmem:[#allocation14 + $0xd0] sm:$0xff]
    %v2735 = vld [vmem:[#allocation14 + $0xd8] sm:$0xff]
    %v2736 = vld [vmem:[#allocation14 + $0xe0] sm:$0xff]
    %v2737 = vld [vmem:[#allocation14 + $0xe8] sm:$0xff]
    %v2738 = vld [vmem:[#allocation14 + $0xf0] sm:$0xff]
    %v2739 = vld [vmem:[#allocation14 + $0xf8] sm:$0xff]
    %v2740 = vld [vmem:[#allocation14 + $0x100] sm:$0xff]
    %v2741 = vld [vmem:[#allocation14 + $0x108] sm:$0xff]
    %v2742 = vld [vmem:[#allocation14 + $0x110] sm:$0xff]
    %v2743 = vld [vmem:[#allocation14 + $0x118] sm:$0xff]
    %v2744 = vld [vmem:[#allocation14 + $0x120] sm:$0xff]
    %v2745 = vld [vmem:[#allocation14 + $0x128] sm:$0xff]
    %v2746 = vld [vmem:[#allocation14 + $0x130] sm:$0xff]
    %v2747 = vld [vmem:[#allocation14 + $0x138] sm:$0xff]
    %v2748 = vld [vmem:[#allocation14 + $0x140] sm:$0xff]
    %v2749 = vld [vmem:[#allocation14 + $0x148] sm:$0xff]
    %v2750 = vld [vmem:[#allocation14 + $0x150] sm:$0xff]
    %v2751 = vld [vmem:[#allocation14 + $0x158] sm:$0xff]
    %v2752 = vld [vmem:[#allocation14 + $0x160] sm:$0xff]
    %v2753 = vld [vmem:[#allocation14 + $0x168] sm:$0xff]
    %v2754 = vld [vmem:[#allocation14 + $0x170] sm:$0xff]
    %v2755 = vld [vmem:[#allocation14 + $0x178] sm:$0xff]
    %v2756 = vld [vmem:[#allocation14 + $0x180] sm:$0xff]
    %v2757 = vld [vmem:[#allocation14 + $0x188] sm:$0xff]
    %v2758 = vld [vmem:[#allocation14 + $0x190] sm:$0xff]
    %v2759 = vld [vmem:[#allocation14 + $0x198] sm:$0xff]
    %v2760 = vld [vmem:[#allocation14 + $0x1a0] sm:$0xff]
    %v2761 = vld [vmem:[#allocation14 + $0x1a8] sm:$0xff]
    %v2762 = vld [vmem:[#allocation14 + $0x1b0] sm:$0xff]
    %v2763 = vld [vmem:[#allocation14 + $0x1b8] sm:$0xff]
    %v2764 = vld [vmem:[#allocation14 + $0x1c0] sm:$0xff]
    %v2765 = vld [vmem:[#allocation14 + $0x1c8] sm:$0xff]
    %v2766 = vld [vmem:[#allocation14 + $0x1d0] sm:$0xff]
    %v2767 = vld [vmem:[#allocation14 + $0x1d8] sm:$0xff]
    %v2768 = vld [vmem:[#allocation14 + $0x1e0] sm:$0xff]
    %v2769 = vld [vmem:[#allocation14 + $0x1e8] sm:$0xff]
    %v2770 = vld [vmem:[#allocation14 + $0x1f0] sm:$0xff]
    %v2771 = vld [vmem:[#allocation14 + $0x1f8] sm:$0xff]
    %v2772 = vld [vmem:[#allocation14 + $0x200] sm:$0xff]
    %v2773 = vld [vmem:[#allocation14 + $0x208] sm:$0xff]
    %v2774 = vld [vmem:[#allocation14 + $0x210] sm:$0xff]
    %v2775 = vld [vmem:[#allocation14 + $0x218] sm:$0xff]
    %v2776 = vld [vmem:[#allocation14 + $0x220] sm:$0xff]
    %v2777 = vld [vmem:[#allocation14 + $0x228] sm:$0xff]
    %v2778 = vld [vmem:[#allocation14 + $0x230] sm:$0xff]
    %v2779 = vld [vmem:[#allocation14 + $0x238] sm:$0xff]
    %v2780 = vld [vmem:[#allocation14 + $0x240] sm:$0xff]
    %v2781 = vld [vmem:[#allocation14 + $0x248] sm:$0xff]
    %v2782 = vld [vmem:[#allocation14 + $0x250] sm:$0xff]
    %v2783 = vld [vmem:[#allocation14 + $0x258] sm:$0xff]
    %v2784 = vld [vmem:[#allocation14 + $0x260] sm:$0xff]
    %v2785 = vld [vmem:[#allocation14 + $0x268] sm:$0xff]
    %v2786 = vld [vmem:[#allocation14 + $0x270] sm:$0xff]
    %v2787 = vld [vmem:[#allocation14 + $0x278] sm:$0xff]
    %v2788 = vld [vmem:[#allocation14 + $0x280] sm:$0xff]
    %v2789 = vld [vmem:[#allocation14 + $0x288] sm:$0xff]
    %v2790 = vld [vmem:[#allocation14 + $0x290] sm:$0xff]
    %v2791 = vld [vmem:[#allocation14 + $0x298] sm:$0xff]
    %v2792 = vld [vmem:[#allocation14 + $0x2a0] sm:$0xff]
    %v2793 = vld [vmem:[#allocation14 + $0x2a8] sm:$0xff]
    %v2794 = vld [vmem:[#allocation14 + $0x2b0] sm:$0xff]
    %v2795 = vld [vmem:[#allocation14 + $0x2b8] sm:$0xff]
    %v2796 = vld [vmem:[#allocation14 + $0x2c0] sm:$0xff]
    %v2797 = vld [vmem:[#allocation14 + $0x2c8] sm:$0xff]
    %v2798 = vld [vmem:[#allocation14 + $0x2d0] sm:$0xff]
    %v2799 = vld [vmem:[#allocation14 + $0x2d8] sm:$0xff]
    %v2800 = vld [vmem:[#allocation14 + $0x2e0] sm:$0xff]
    %v2801 = vld [vmem:[#allocation14 + $0x2e8] sm:$0xff]
    %v2802 = vld [vmem:[#allocation14 + $0x2f0] sm:$0xff]
    %v2803 = vld [vmem:[#allocation14 + $0x2f8] sm:$0xff]
    %v2804 = vld [vmem:[#allocation14 + $0x300] sm:$0xff]
    %v2805 = vld [vmem:[#allocation14 + $0x308] sm:$0xff]
    %v2806 = vld [vmem:[#allocation14 + $0x310] sm:$0xff]
    %v2807 = vld [vmem:[#allocation14 + $0x318] sm:$0xff]
    %v2808 = vld [vmem:[#allocation14 + $0x320] sm:$0xff]
    %v2809 = vld [vmem:[#allocation14 + $0x328] sm:$0xff]
    %v2810 = vld [vmem:[#allocation14 + $0x330] sm:$0xff]
    %v2811 = vld [vmem:[#allocation14 + $0x338] sm:$0xff]
    %v2812 = vld [vmem:[#allocation14 + $0x340] sm:$0xff]
    %v2813 = vld [vmem:[#allocation14 + $0x348] sm:$0xff]
    %v2814 = vld [vmem:[#allocation14 + $0x350] sm:$0xff]
    %v2815 = vld [vmem:[#allocation14 + $0x358] sm:$0xff]
    %v2816 = vld [vmem:[#allocation14 + $0x360] sm:$0xff]
    %v2817 = vld [vmem:[#allocation14 + $0x368] sm:$0xff]
    %v2818 = vld [vmem:[#allocation14 + $0x370] sm:$0xff]
    %v2819 = vld [vmem:[#allocation14 + $0x378] sm:$0xff]
    %v2820 = vld [vmem:[#allocation14 + $0x380] sm:$0xff]
    %v2821 = vld [vmem:[#allocation14 + $0x388] sm:$0xff]
    %v2822 = vld [vmem:[#allocation14 + $0x390] sm:$0xff]
    %v2823 = vld [vmem:[#allocation14 + $0x398] sm:$0xff]
    %v2824 = vld [vmem:[#allocation14 + $0x3a0] sm:$0xff]
    %v2825 = vld [vmem:[#allocation14 + $0x3a8] sm:$0xff]
    %v2826 = vld [vmem:[#allocation14 + $0x3b0] sm:$0xff]
    %v2827 = vld [vmem:[#allocation14 + $0x3b8] sm:$0xff]
    %v2828 = vld [vmem:[#allocation14 + $0x3c0] sm:$0xff]
    %v2829 = vld [vmem:[#allocation14 + $0x3c8] sm:$0xff]
    %v2830 = vld [vmem:[#allocation14 + $0x3d0] sm:$0xff]
    %v2831 = vld [vmem:[#allocation14 + $0x3d8] sm:$0xff]
    %v2832 = vld [vmem:[#allocation14 + $0x3e0] sm:$0xff]
    %v2833 = vld [vmem:[#allocation14 + $0x3e8] sm:$0xff]
    %v2834 = vld [vmem:[#allocation14 + $0x3f0] sm:$0xff]
    %v2835 = vld [vmem:[#allocation14 + $0x3f8] sm:$0xff]
    %v2836 = vld [vmem:[%s8] sm:$0x3]
    %v2838 = vperm.slane %v2836, 0
    %v2839 = vperm.slane %v2836, 1
    %v2970 = vunpack.c.l.b16 %v2708
    %v2971 = vunpack.c.h.b16 %v2708
    %v2972 = vunpack.c.l.b16 %v2709
    %v2973 = vunpack.c.h.b16 %v2709
    %v2974 = vunpack.c.l.b16 %v2710
    %v2975 = vunpack.c.h.b16 %v2710
    %v2976 = vunpack.c.l.b16 %v2711
    %v2977 = vunpack.c.h.b16 %v2711
    %v2978 = vunpack.c.l.b16 %v2712
    %v2979 = vunpack.c.h.b16 %v2712
    %v2980 = vunpack.c.l.b16 %v2713
    %v2981 = vunpack.c.h.b16 %v2713
    %v2982 = vunpack.c.l.b16 %v2714
    %v2983 = vunpack.c.h.b16 %v2714
    %v2984 = vunpack.c.l.b16 %v2715
    %v2985 = vunpack.c.h.b16 %v2715
    %v2986 = vunpack.c.l.b16 %v2716
    %v2987 = vunpack.c.h.b16 %v2716
    %v2988 = vunpack.c.l.b16 %v2717
    %v2989 = vunpack.c.h.b16 %v2717
    %v2990 = vunpack.c.l.b16 %v2718
    %v2991 = vunpack.c.h.b16 %v2718
    %v2992 = vunpack.c.l.b16 %v2719
    %v2993 = vunpack.c.h.b16 %v2719
    %v2994 = vunpack.c.l.b16 %v2720
    %v2995 = vunpack.c.h.b16 %v2720
    %v2996 = vunpack.c.l.b16 %v2721
    %v2997 = vunpack.c.h.b16 %v2721
    %v2998 = vunpack.c.l.b16 %v2722
    %v2999 = vunpack.c.h.b16 %v2722
    %v3000 = vunpack.c.l.b16 %v2723
    %v3001 = vunpack.c.h.b16 %v2723
    %v3002 = vunpack.c.l.b16 %v2724
    %v3003 = vunpack.c.h.b16 %v2724
    %v3004 = vunpack.c.l.b16 %v2725
    %v3005 = vunpack.c.h.b16 %v2725
    %v3006 = vunpack.c.l.b16 %v2726
    %v3007 = vunpack.c.h.b16 %v2726
    %v3008 = vunpack.c.l.b16 %v2727
    %v3009 = vunpack.c.h.b16 %v2727
    %v3010 = vunpack.c.l.b16 %v2728
    %v3011 = vunpack.c.h.b16 %v2728
    %v3012 = vunpack.c.l.b16 %v2729
    %v3013 = vunpack.c.h.b16 %v2729
    %v3014 = vunpack.c.l.b16 %v2730
    %v3015 = vunpack.c.h.b16 %v2730
    %v3016 = vunpack.c.l.b16 %v2731
    %v3017 = vunpack.c.h.b16 %v2731
    %v3018 = vunpack.c.l.b16 %v2732
    %v3019 = vunpack.c.h.b16 %v2732
    %v3020 = vunpack.c.l.b16 %v2733
    %v3021 = vunpack.c.h.b16 %v2733
    %v3022 = vunpack.c.l.b16 %v2734
    %v3023 = vunpack.c.h.b16 %v2734
    %v3024 = vunpack.c.l.b16 %v2735
    %v3025 = vunpack.c.h.b16 %v2735
    %v3026 = vunpack.c.l.b16 %v2736
    %v3027 = vunpack.c.h.b16 %v2736
    %v3028 = vunpack.c.l.b16 %v2737
    %v3029 = vunpack.c.h.b16 %v2737
    %v3030 = vunpack.c.l.b16 %v2738
    %v3031 = vunpack.c.h.b16 %v2738
    %v3032 = vunpack.c.l.b16 %v2739
    %v3033 = vunpack.c.h.b16 %v2739
    %v3034 = vunpack.c.l.b16 %v2740
    %v3035 = vunpack.c.h.b16 %v2740
    %v3036 = vunpack.c.l.b16 %v2741
    %v3037 = vunpack.c.h.b16 %v2741
    %v3038 = vunpack.c.l.b16 %v2742
    %v3039 = vunpack.c.h.b16 %v2742
    %v3040 = vunpack.c.l.b16 %v2743
    %v3041 = vunpack.c.h.b16 %v2743
    %v3042 = vunpack.c.l.b16 %v2744
    %v3043 = vunpack.c.h.b16 %v2744
    %v3044 = vunpack.c.l.b16 %v2745
    %v3045 = vunpack.c.h.b16 %v2745
    %v3046 = vunpack.c.l.b16 %v2746
    %v3047 = vunpack.c.h.b16 %v2746
    %v3048 = vunpack.c.l.b16 %v2747
    %v3049 = vunpack.c.h.b16 %v2747
    %v3050 = vunpack.c.l.b16 %v2748
    %v3051 = vunpack.c.h.b16 %v2748
    %v3052 = vunpack.c.l.b16 %v2749
    %v3053 = vunpack.c.h.b16 %v2749
    %v3054 = vunpack.c.l.b16 %v2750
    %v3055 = vunpack.c.h.b16 %v2750
    %v3056 = vunpack.c.l.b16 %v2751
    %v3057 = vunpack.c.h.b16 %v2751
    %v3058 = vunpack.c.l.b16 %v2752
    %v3059 = vunpack.c.h.b16 %v2752
    %v3060 = vunpack.c.l.b16 %v2753
    %v3061 = vunpack.c.h.b16 %v2753
    %v3062 = vunpack.c.l.b16 %v2754
    %v3063 = vunpack.c.h.b16 %v2754
    %v3064 = vunpack.c.l.b16 %v2755
    %v3065 = vunpack.c.h.b16 %v2755
    %v3066 = vunpack.c.l.b16 %v2756
    %v3067 = vunpack.c.h.b16 %v2756
    %v3068 = vunpack.c.l.b16 %v2757
    %v3069 = vunpack.c.h.b16 %v2757
    %v3070 = vunpack.c.l.b16 %v2758
    %v3071 = vunpack.c.h.b16 %v2758
    %v3072 = vunpack.c.l.b16 %v2759
    %v3073 = vunpack.c.h.b16 %v2759
    %v3074 = vunpack.c.l.b16 %v2760
    %v3075 = vunpack.c.h.b16 %v2760
    %v3076 = vunpack.c.l.b16 %v2761
    %v3077 = vunpack.c.h.b16 %v2761
    %v3078 = vunpack.c.l.b16 %v2762
    %v3079 = vunpack.c.h.b16 %v2762
    %v3080 = vunpack.c.l.b16 %v2763
    %v3081 = vunpack.c.h.b16 %v2763
    %v3082 = vunpack.c.l.b16 %v2764
    %v3083 = vunpack.c.h.b16 %v2764
    %v3084 = vunpack.c.l.b16 %v2765
    %v3085 = vunpack.c.h.b16 %v2765
    %v3086 = vunpack.c.l.b16 %v2766
    %v3087 = vunpack.c.h.b16 %v2766
    %v3088 = vunpack.c.l.b16 %v2767
    %v3089 = vunpack.c.h.b16 %v2767
    %v3090 = vunpack.c.l.b16 %v2768
    %v3091 = vunpack.c.h.b16 %v2768
    %v3092 = vunpack.c.l.b16 %v2769
    %v3093 = vunpack.c.h.b16 %v2769
    %v3094 = vunpack.c.l.b16 %v2770
    %v3095 = vunpack.c.h.b16 %v2770
    %v3096 = vunpack.c.l.b16 %v2771
    %v3097 = vunpack.c.h.b16 %v2771
    %v3098 = vunpack.c.l.b16 %v2772
    %v3099 = vunpack.c.h.b16 %v2772
    %v3100 = vunpack.c.l.b16 %v2773
    %v3101 = vunpack.c.h.b16 %v2773
    %v3102 = vunpack.c.l.b16 %v2774
    %v3103 = vunpack.c.h.b16 %v2774
    %v3104 = vunpack.c.l.b16 %v2775
    %v3105 = vunpack.c.h.b16 %v2775
    %v3106 = vunpack.c.l.b16 %v2776
    %v3107 = vunpack.c.h.b16 %v2776
    %v3108 = vunpack.c.l.b16 %v2777
    %v3109 = vunpack.c.h.b16 %v2777
    %v3110 = vunpack.c.l.b16 %v2778
    %v3111 = vunpack.c.h.b16 %v2778
    %v3112 = vunpack.c.l.b16 %v2779
    %v3113 = vunpack.c.h.b16 %v2779
    %v3114 = vunpack.c.l.b16 %v2780
    %v3115 = vunpack.c.h.b16 %v2780
    %v3116 = vunpack.c.l.b16 %v2781
    %v3117 = vunpack.c.h.b16 %v2781
    %v3118 = vunpack.c.l.b16 %v2782
    %v3119 = vunpack.c.h.b16 %v2782
    %v3120 = vunpack.c.l.b16 %v2783
    %v3121 = vunpack.c.h.b16 %v2783
    %v3122 = vunpack.c.l.b16 %v2784
    %v3123 = vunpack.c.h.b16 %v2784
    %v3124 = vunpack.c.l.b16 %v2785
    %v3125 = vunpack.c.h.b16 %v2785
    %v3126 = vunpack.c.l.b16 %v2786
    %v3127 = vunpack.c.h.b16 %v2786
    %v3128 = vunpack.c.l.b16 %v2787
    %v3129 = vunpack.c.h.b16 %v2787
    %v3130 = vunpack.c.l.b16 %v2788
    %v3131 = vunpack.c.h.b16 %v2788
    %v3132 = vunpack.c.l.b16 %v2789
    %v3133 = vunpack.c.h.b16 %v2789
    %v3134 = vunpack.c.l.b16 %v2790
    %v3135 = vunpack.c.h.b16 %v2790
    %v3136 = vunpack.c.l.b16 %v2791
    %v3137 = vunpack.c.h.b16 %v2791
    %v3138 = vunpack.c.l.b16 %v2792
    %v3139 = vunpack.c.h.b16 %v2792
    %v3140 = vunpack.c.l.b16 %v2793
    %v3141 = vunpack.c.h.b16 %v2793
    %v3142 = vunpack.c.l.b16 %v2794
    %v3143 = vunpack.c.h.b16 %v2794
    %v3144 = vunpack.c.l.b16 %v2795
    %v3145 = vunpack.c.h.b16 %v2795
    %v3146 = vunpack.c.l.b16 %v2796
    %v3147 = vunpack.c.h.b16 %v2796
    %v3148 = vunpack.c.l.b16 %v2797
    %v3149 = vunpack.c.h.b16 %v2797
    %v3150 = vunpack.c.l.b16 %v2798
    %v3151 = vunpack.c.h.b16 %v2798
    %v3152 = vunpack.c.l.b16 %v2799
    %v3153 = vunpack.c.h.b16 %v2799
    %v3154 = vunpack.c.l.b16 %v2800
    %v3155 = vunpack.c.h.b16 %v2800
    %v3156 = vunpack.c.l.b16 %v2801
    %v3157 = vunpack.c.h.b16 %v2801
    %v3158 = vunpack.c.l.b16 %v2802
    %v3159 = vunpack.c.h.b16 %v2802
    %v3160 = vunpack.c.l.b16 %v2803
    %v3161 = vunpack.c.h.b16 %v2803
    %v3162 = vunpack.c.l.b16 %v2804
    %v3163 = vunpack.c.h.b16 %v2804
    %v3164 = vunpack.c.l.b16 %v2805
    %v3165 = vunpack.c.h.b16 %v2805
    %v3166 = vunpack.c.l.b16 %v2806
    %v3167 = vunpack.c.h.b16 %v2806
    %v3168 = vunpack.c.l.b16 %v2807
    %v3169 = vunpack.c.h.b16 %v2807
    %v3170 = vunpack.c.l.b16 %v2808
    %v3171 = vunpack.c.h.b16 %v2808
    %v3172 = vunpack.c.l.b16 %v2809
    %v3173 = vunpack.c.h.b16 %v2809
    %v3174 = vunpack.c.l.b16 %v2810
    %v3175 = vunpack.c.h.b16 %v2810
    %v3176 = vunpack.c.l.b16 %v2811
    %v3177 = vunpack.c.h.b16 %v2811
    %v3178 = vunpack.c.l.b16 %v2812
    %v3179 = vunpack.c.h.b16 %v2812
    %v3180 = vunpack.c.l.b16 %v2813
    %v3181 = vunpack.c.h.b16 %v2813
    %v3182 = vunpack.c.l.b16 %v2814
    %v3183 = vunpack.c.h.b16 %v2814
    %v3184 = vunpack.c.l.b16 %v2815
    %v3185 = vunpack.c.h.b16 %v2815
    %v3186 = vunpack.c.l.b16 %v2816
    %v3187 = vunpack.c.h.b16 %v2816
    %v3188 = vunpack.c.l.b16 %v2817
    %v3189 = vunpack.c.h.b16 %v2817
    %v3190 = vunpack.c.l.b16 %v2818
    %v3191 = vunpack.c.h.b16 %v2818
    %v3192 = vunpack.c.l.b16 %v2819
    %v3193 = vunpack.c.h.b16 %v2819
    %v3194 = vunpack.c.l.b16 %v2820
    %v3195 = vunpack.c.h.b16 %v2820
    %v3196 = vunpack.c.l.b16 %v2821
    %v3197 = vunpack.c.h.b16 %v2821
    %v3198 = vunpack.c.l.b16 %v2822
    %v3199 = vunpack.c.h.b16 %v2822
    %v3200 = vunpack.c.l.b16 %v2823
    %v3201 = vunpack.c.h.b16 %v2823
    %v3202 = vunpack.c.l.b16 %v2824
    %v3203 = vunpack.c.h.b16 %v2824
    %v3204 = vunpack.c.l.b16 %v2825
    %v3205 = vunpack.c.h.b16 %v2825
    %v3206 = vunpack.c.l.b16 %v2826
    %v3207 = vunpack.c.h.b16 %v2826
    %v3208 = vunpack.c.l.b16 %v2827
    %v3209 = vunpack.c.h.b16 %v2827
    %v3210 = vunpack.c.l.b16 %v2828
    %v3211 = vunpack.c.h.b16 %v2828
    %v3212 = vunpack.c.l.b16 %v2829
    %v3213 = vunpack.c.h.b16 %v2829
    %v3214 = vunpack.c.l.b16 %v2830
    %v3215 = vunpack.c.h.b16 %v2830
    %v3216 = vunpack.c.l.b16 %v2831
    %v3217 = vunpack.c.h.b16 %v2831
    %v3218 = vunpack.c.l.b16 %v2832
    %v3219 = vunpack.c.h.b16 %v2832
    %v3220 = vunpack.c.l.b16 %v2833
    %v3221 = vunpack.c.h.b16 %v2833
    %v3222 = vunpack.c.l.b16 %v2834
    %v3223 = vunpack.c.h.b16 %v2834
    %v3224 = vunpack.c.l.b16 %v2835
    %v3225 = vunpack.c.h.b16 %v2835
    %v3226 = vpack.c.b16 %v2972, %v2970
    %v3227 = vpack.c.b16 %v2973, %v2971
    %v3228 = vpack.c.b16 %v2976, %v2974
    %v3229 = vpack.c.b16 %v2977, %v2975
    %v3230 = vpack.c.b16 %v2980, %v2978
    %v3231 = vpack.c.b16 %v2981, %v2979
    %v3232 = vpack.c.b16 %v2984, %v2982
    %v3233 = vpack.c.b16 %v2985, %v2983
    %v3234 = vpack.c.b16 %v2988, %v2986
    %v3235 = vpack.c.b16 %v2989, %v2987
    %v3236 = vpack.c.b16 %v2992, %v2990
    %v3237 = vpack.c.b16 %v2993, %v2991
    %v3238 = vpack.c.b16 %v2996, %v2994
    %v3239 = vpack.c.b16 %v2997, %v2995
    %v3240 = vpack.c.b16 %v3000, %v2998
    %v3241 = vpack.c.b16 %v3001, %v2999
    %v3242 = vpack.c.b16 %v3004, %v3002
    %v3243 = vpack.c.b16 %v3005, %v3003
    %v3244 = vpack.c.b16 %v3008, %v3006
    %v3245 = vpack.c.b16 %v3009, %v3007
    %v3246 = vpack.c.b16 %v3012, %v3010
    %v3247 = vpack.c.b16 %v3013, %v3011
    %v3248 = vpack.c.b16 %v3016, %v3014
    %v3249 = vpack.c.b16 %v3017, %v3015
    %v3250 = vpack.c.b16 %v3020, %v3018
    %v3251 = vpack.c.b16 %v3021, %v3019
    %v3252 = vpack.c.b16 %v3024, %v3022
    %v3253 = vpack.c.b16 %v3025, %v3023
    %v3254 = vpack.c.b16 %v3028, %v3026
    %v3255 = vpack.c.b16 %v3029, %v3027
    %v3256 = vpack.c.b16 %v3032, %v3030
    %v3257 = vpack.c.b16 %v3033, %v3031
    %v3258 = vpack.c.b16 %v3036, %v3034
    %v3259 = vpack.c.b16 %v3037, %v3035
    %v3260 = vpack.c.b16 %v3040, %v3038
    %v3261 = vpack.c.b16 %v3041, %v3039
    %v3262 = vpack.c.b16 %v3044, %v3042
    %v3263 = vpack.c.b16 %v3045, %v3043
    %v3264 = vpack.c.b16 %v3048, %v3046
    %v3265 = vpack.c.b16 %v3049, %v3047
    %v3266 = vpack.c.b16 %v3052, %v3050
    %v3267 = vpack.c.b16 %v3053, %v3051
    %v3268 = vpack.c.b16 %v3056, %v3054
    %v3269 = vpack.c.b16 %v3057, %v3055
    %v3270 = vpack.c.b16 %v3060, %v3058
    %v3271 = vpack.c.b16 %v3061, %v3059
    %v3272 = vpack.c.b16 %v3064, %v3062
    %v3273 = vpack.c.b16 %v3065, %v3063
    %v3274 = vpack.c.b16 %v3068, %v3066
    %v3275 = vpack.c.b16 %v3069, %v3067
    %v3276 = vpack.c.b16 %v3072, %v3070
    %v3277 = vpack.c.b16 %v3073, %v3071
    %v3278 = vpack.c.b16 %v3076, %v3074
    %v3279 = vpack.c.b16 %v3077, %v3075
    %v3280 = vpack.c.b16 %v3080, %v3078
    %v3281 = vpack.c.b16 %v3081, %v3079
    %v3282 = vpack.c.b16 %v3084, %v3082
    %v3283 = vpack.c.b16 %v3085, %v3083
    %v3284 = vpack.c.b16 %v3088, %v3086
    %v3285 = vpack.c.b16 %v3089, %v3087
    %v3286 = vpack.c.b16 %v3092, %v3090
    %v3287 = vpack.c.b16 %v3093, %v3091
    %v3288 = vpack.c.b16 %v3096, %v3094
    %v3289 = vpack.c.b16 %v3097, %v3095
    %v3290 = vpack.c.b16 %v3100, %v3098
    %v3291 = vpack.c.b16 %v3101, %v3099
    %v3292 = vpack.c.b16 %v3104, %v3102
    %v3293 = vpack.c.b16 %v3105, %v3103
    %v3294 = vpack.c.b16 %v3108, %v3106
    %v3295 = vpack.c.b16 %v3109, %v3107
    %v3296 = vpack.c.b16 %v3112, %v3110
    %v3297 = vpack.c.b16 %v3113, %v3111
    %v3298 = vpack.c.b16 %v3116, %v3114
    %v3299 = vpack.c.b16 %v3117, %v3115
    %v3300 = vpack.c.b16 %v3120, %v3118
    %v3301 = vpack.c.b16 %v3121, %v3119
    %v3302 = vpack.c.b16 %v3124, %v3122
    %v3303 = vpack.c.b16 %v3125, %v3123
    %v3304 = vpack.c.b16 %v3128, %v3126
    %v3305 = vpack.c.b16 %v3129, %v3127
    %v3306 = vpack.c.b16 %v3132, %v3130
    %v3307 = vpack.c.b16 %v3133, %v3131
    %v3308 = vpack.c.b16 %v3136, %v3134
    %v3309 = vpack.c.b16 %v3137, %v3135
    %v3310 = vpack.c.b16 %v3140, %v3138
    %v3311 = vpack.c.b16 %v3141, %v3139
    %v3312 = vpack.c.b16 %v3144, %v3142
    %v3313 = vpack.c.b16 %v3145, %v3143
    %v3314 = vpack.c.b16 %v3148, %v3146
    %v3315 = vpack.c.b16 %v3149, %v3147
    %v3316 = vpack.c.b16 %v3152, %v3150
    %v3317 = vpack.c.b16 %v3153, %v3151
    %v3318 = vpack.c.b16 %v3156, %v3154
    %v3319 = vpack.c.b16 %v3157, %v3155
    %v3320 = vpack.c.b16 %v3160, %v3158
    %v3321 = vpack.c.b16 %v3161, %v3159
    %v3322 = vpack.c.b16 %v3164, %v3162
    %v3323 = vpack.c.b16 %v3165, %v3163
    %v3324 = vpack.c.b16 %v3168, %v3166
    %v3325 = vpack.c.b16 %v3169, %v3167
    %v3326 = vpack.c.b16 %v3172, %v3170
    %v3327 = vpack.c.b16 %v3173, %v3171
    %v3328 = vpack.c.b16 %v3176, %v3174
    %v3329 = vpack.c.b16 %v3177, %v3175
    %v3330 = vpack.c.b16 %v3180, %v3178
    %v3331 = vpack.c.b16 %v3181, %v3179
    %v3332 = vpack.c.b16 %v3184, %v3182
    %v3333 = vpack.c.b16 %v3185, %v3183
    %v3334 = vpack.c.b16 %v3188, %v3186
    %v3335 = vpack.c.b16 %v3189, %v3187
    %v3336 = vpack.c.b16 %v3192, %v3190
    %v3337 = vpack.c.b16 %v3193, %v3191
    %v3338 = vpack.c.b16 %v3196, %v3194
    %v3339 = vpack.c.b16 %v3197, %v3195
    %v3340 = vpack.c.b16 %v3200, %v3198
    %v3341 = vpack.c.b16 %v3201, %v3199
    %v3342 = vpack.c.b16 %v3204, %v3202
    %v3343 = vpack.c.b16 %v3205, %v3203
    %v3344 = vpack.c.b16 %v3208, %v3206
    %v3345 = vpack.c.b16 %v3209, %v3207
    %v3346 = vpack.c.b16 %v3212, %v3210
    %v3347 = vpack.c.b16 %v3213, %v3211
    %v3348 = vpack.c.b16 %v3216, %v3214
    %v3349 = vpack.c.b16 %v3217, %v3215
    %v3350 = vpack.c.b16 %v3220, %v3218
    %v3351 = vpack.c.b16 %v3221, %v3219
    %v3352 = vpack.c.b16 %v3224, %v3222
    %v3353 = vpack.c.b16 %v3225, %v3223
    %3482 = vmatpush.bf16.msra.mxu0 %v3240
    %3483 = vmatpush.bf16.msra.mxu0 %v3238
    %3484 = vmatpush.bf16.msra.mxu0 %v3236
    %3485 = vmatpush.bf16.msra.mxu0 %v3234
    %3486 = vmatpush.bf16.msra.mxu0 %v3232
    %3487 = vmatpush.bf16.msra.mxu0 %v3230
    %3488 = vmatpush.bf16.msra.mxu0 %v3228
    %3489 = vmatpush.bf16.msra.mxu0 %v3226
    %3490 = vmatmul.bf16.gmra.mxu0 %v2700
    %v3491 = vpop.f32.mrf.mxu0
    %v3492 = vadd.f32 %v2838, %v3491
    %v3493 = vpop.f32.mrf.mxu0
    %3494 = vdwg.mxu0
    %3495 = vmatpush.bf16.msra.mxu0 %v3256
    %3496 = vmatpush.bf16.msra.mxu0 %v3254
    %3497 = vmatpush.bf16.msra.mxu0 %v3252
    %3498 = vmatpush.bf16.msra.mxu0 %v3250
    %3499 = vmatpush.bf16.msra.mxu0 %v3248
    %3500 = vmatpush.bf16.msra.mxu0 %v3246
    %3501 = vmatpush.bf16.msra.mxu0 %v3244
    %3502 = vmatpush.bf16.msra.mxu0 %v3242
    %3503 = vmatmul.bf16.gmra.mxu0 %v2701
    %v3504 = vpop.f32.mrf.mxu0
    %v3505 = vadd.f32 %v3492, %v3504
    %v3506 = vpop.f32.mrf.mxu0
    %3507 = vdwg.mxu0
    %3508 = vmatpush.bf16.msra.mxu0 %v3272
    %3509 = vmatpush.bf16.msra.mxu0 %v3270
    %3510 = vmatpush.bf16.msra.mxu0 %v3268
    %3511 = vmatpush.bf16.msra.mxu0 %v3266
    %3512 = vmatpush.bf16.msra.mxu0 %v3264
    %3513 = vmatpush.bf16.msra.mxu0 %v3262
    %3514 = vmatpush.bf16.msra.mxu0 %v3260
    %3515 = vmatpush.bf16.msra.mxu0 %v3258
    %3516 = vmatmul.bf16.gmra.mxu0 %v2702
    %v3517 = vpop.f32.mrf.mxu0
    %v3518 = vadd.f32 %v3505, %v3517
    %v3519 = vpop.f32.mrf.mxu0
    %3520 = vdwg.mxu0
    %3521 = vmatpush.bf16.msra.mxu0 %v3288
    %3522 = vmatpush.bf16.msra.mxu0 %v3286
    %3523 = vmatpush.bf16.msra.mxu0 %v3284
    %3524 = vmatpush.bf16.msra.mxu0 %v3282
    %3525 = vmatpush.bf16.msra.mxu0 %v3280
    %3526 = vmatpush.bf16.msra.mxu0 %v3278
    %3527 = vmatpush.bf16.msra.mxu0 %v3276
    %3528 = vmatpush.bf16.msra.mxu0 %v3274
    %3529 = vmatmul.bf16.gmra.mxu0 %v2703
    %v3530 = vpop.f32.mrf.mxu0
    %v3531 = vadd.f32 %v3518, %v3530
    %v3532 = vpop.f32.mrf.mxu0
    %3533 = vdwg.mxu0
    %3534 = vmatpush.bf16.msra.mxu0 %v3304
    %3535 = vmatpush.bf16.msra.mxu0 %v3302
    %3536 = vmatpush.bf16.msra.mxu0 %v3300
    %3537 = vmatpush.bf16.msra.mxu0 %v3298
    %3538 = vmatpush.bf16.msra.mxu0 %v3296
    %3539 = vmatpush.bf16.msra.mxu0 %v3294
    %3540 = vmatpush.bf16.msra.mxu0 %v3292
    %3541 = vmatpush.bf16.msra.mxu0 %v3290
    %3542 = vmatmul.bf16.gmra.mxu0 %v2704
    %v3543 = vpop.f32.mrf.mxu0
    %v3544 = vadd.f32 %v3531, %v3543
    %v3545 = vpop.f32.mrf.mxu0
    %3546 = vdwg.mxu0
    %3547 = vmatpush.bf16.msra.mxu0 %v3320
    %3548 = vmatpush.bf16.msra.mxu0 %v3318
    %3549 = vmatpush.bf16.msra.mxu0 %v3316
    %3550 = vmatpush.bf16.msra.mxu0 %v3314
    %3551 = vmatpush.bf16.msra.mxu0 %v3312
    %3552 = vmatpush.bf16.msra.mxu0 %v3310
    %3553 = vmatpush.bf16.msra.mxu0 %v3308
    %3554 = vmatpush.bf16.msra.mxu0 %v3306
    %3555 = vmatmul.bf16.gmra.mxu0 %v2705
    %v3556 = vpop.f32.mrf.mxu0
    %v3557 = vadd.f32 %v3544, %v3556
    %v3558 = vpop.f32.mrf.mxu0
    %3559 = vdwg.mxu0
    %3560 = vmatpush.bf16.msra.mxu0 %v3336
    %3561 = vmatpush.bf16.msra.mxu0 %v3334
    %3562 = vmatpush.bf16.msra.mxu0 %v3332
    %3563 = vmatpush.bf16.msra.mxu0 %v3330
    %3564 = vmatpush.bf16.msra.mxu0 %v3328
    %3565 = vmatpush.bf16.msra.mxu0 %v3326
    %3566 = vmatpush.bf16.msra.mxu0 %v3324
    %3567 = vmatpush.bf16.msra.mxu0 %v3322
    %3568 = vmatmul.bf16.gmra.mxu0 %v2706
    %v3569 = vpop.f32.mrf.mxu0
    %v3570 = vadd.f32 %v3557, %v3569
    %v3571 = vpop.f32.mrf.mxu0
    %3572 = vdwg.mxu0
    %3573 = vmatpush.bf16.msra.mxu0 %v3352
    %3574 = vmatpush.bf16.msra.mxu0 %v3350
    %3575 = vmatpush.bf16.msra.mxu0 %v3348
    %3576 = vmatpush.bf16.msra.mxu0 %v3346
    %3577 = vmatpush.bf16.msra.mxu0 %v3344
    %3578 = vmatpush.bf16.msra.mxu0 %v3342
    %3579 = vmatpush.bf16.msra.mxu0 %v3340
    %3580 = vmatpush.bf16.msra.mxu0 %v3338
    %3581 = vmatmul.bf16.gmra.mxu0 %v2707
    %v3582 = vpop.f32.mrf.mxu0
    %v3583 = vadd.f32 %v3570, %v3582
    %v3584 = vpop.f32.mrf.mxu0
    %3585 = vdwg.mxu0
    %3586 = vmatpush.bf16.msra.mxu0 %v3241
    %3587 = vmatpush.bf16.msra.mxu0 %v3239
    %3588 = vmatpush.bf16.msra.mxu0 %v3237
    %3589 = vmatpush.bf16.msra.mxu0 %v3235
    %3590 = vmatpush.bf16.msra.mxu0 %v3233
    %3591 = vmatpush.bf16.msra.mxu0 %v3231
    %3592 = vmatpush.bf16.msra.mxu0 %v3229
    %3593 = vmatpush.bf16.msra.mxu0 %v3227
    %3594 = vmatmul.bf16.gmra.mxu0 %v2700
    %v3595 = vpop.f32.mrf.mxu0
    %v3596 = vadd.f32 %v2839, %v3595
    %v3597 = vpop.f32.mrf.mxu0
    %3598 = vdwg.mxu0
    %3599 = vmatpush.bf16.msra.mxu0 %v3257
    %3600 = vmatpush.bf16.msra.mxu0 %v3255
    %3601 = vmatpush.bf16.msra.mxu0 %v3253
    %3602 = vmatpush.bf16.msra.mxu0 %v3251
    %3603 = vmatpush.bf16.msra.mxu0 %v3249
    %3604 = vmatpush.bf16.msra.mxu0 %v3247
    %3605 = vmatpush.bf16.msra.mxu0 %v3245
    %3606 = vmatpush.bf16.msra.mxu0 %v3243
    %3607 = vmatmul.bf16.gmra.mxu0 %v2701
    %v3608 = vpop.f32.mrf.mxu0
    %v3609 = vadd.f32 %v3596, %v3608
    %v3610 = vpop.f32.mrf.mxu0
    %3611 = vdwg.mxu0
    %3612 = vmatpush.bf16.msra.mxu0 %v3273
    %3613 = vmatpush.bf16.msra.mxu0 %v3271
    %3614 = vmatpush.bf16.msra.mxu0 %v3269
    %3615 = vmatpush.bf16.msra.mxu0 %v3267
    %3616 = vmatpush.bf16.msra.mxu0 %v3265
    %3617 = vmatpush.bf16.msra.mxu0 %v3263
    %3618 = vmatpush.bf16.msra.mxu0 %v3261
    %3619 = vmatpush.bf16.msra.mxu0 %v3259
    %3620 = vmatmul.bf16.gmra.mxu0 %v2702
    %v3621 = vpop.f32.mrf.mxu0
    %v3622 = vadd.f32 %v3609, %v3621
    %v3623 = vpop.f32.mrf.mxu0
    %3624 = vdwg.mxu0
    %3625 = vmatpush.bf16.msra.mxu0 %v3289
    %3626 = vmatpush.bf16.msra.mxu0 %v3287
    %3627 = vmatpush.bf16.msra.mxu0 %v3285
    %3628 = vmatpush.bf16.msra.mxu0 %v3283
    %3629 = vmatpush.bf16.msra.mxu0 %v3281
    %3630 = vmatpush.bf16.msra.mxu0 %v3279
    %3631 = vmatpush.bf16.msra.mxu0 %v3277
    %3632 = vmatpush.bf16.msra.mxu0 %v3275
    %3633 = vmatmul.bf16.gmra.mxu0 %v2703
    %v3634 = vpop.f32.mrf.mxu0
    %v3635 = vadd.f32 %v3622, %v3634
    %v3636 = vpop.f32.mrf.mxu0
    %3637 = vdwg.mxu0
    %3638 = vmatpush.bf16.msra.mxu0 %v3305
    %3639 = vmatpush.bf16.msra.mxu0 %v3303
    %3640 = vmatpush.bf16.msra.mxu0 %v3301
    %3641 = vmatpush.bf16.msra.mxu0 %v3299
    %3642 = vmatpush.bf16.msra.mxu0 %v3297
    %3643 = vmatpush.bf16.msra.mxu0 %v3295
    %3644 = vmatpush.bf16.msra.mxu0 %v3293
    %3645 = vmatpush.bf16.msra.mxu0 %v3291
    %3646 = vmatmul.bf16.gmra.mxu0 %v2704
    %v3647 = vpop.f32.mrf.mxu0
    %v3648 = vadd.f32 %v3635, %v3647
    %v3649 = vpop.f32.mrf.mxu0
    %3650 = vdwg.mxu0
    %3651 = vmatpush.bf16.msra.mxu0 %v3321
    %3652 = vmatpush.bf16.msra.mxu0 %v3319
    %3653 = vmatpush.bf16.msra.mxu0 %v3317
    %3654 = vmatpush.bf16.msra.mxu0 %v3315
    %3655 = vmatpush.bf16.msra.mxu0 %v3313
    %3656 = vmatpush.bf16.msra.mxu0 %v3311
    %3657 = vmatpush.bf16.msra.mxu0 %v3309
    %3658 = vmatpush.bf16.msra.mxu0 %v3307
    %3659 = vmatmul.bf16.gmra.mxu0 %v2705
    %v3660 = vpop.f32.mrf.mxu0
    %v3661 = vadd.f32 %v3648, %v3660
    %v3662 = vpop.f32.mrf.mxu0
    %3663 = vdwg.mxu0
    %3664 = vmatpush.bf16.msra.mxu0 %v3337
    %3665 = vmatpush.bf16.msra.mxu0 %v3335
    %3666 = vmatpush.bf16.msra.mxu0 %v3333
    %3667 = vmatpush.bf16.msra.mxu0 %v3331
    %3668 = vmatpush.bf16.msra.mxu0 %v3329
    %3669 = vmatpush.bf16.msra.mxu0 %v3327
    %3670 = vmatpush.bf16.msra.mxu0 %v3325
    %3671 = vmatpush.bf16.msra.mxu0 %v3323
    %3672 = vmatmul.bf16.gmra.mxu0 %v2706
    %v3673 = vpop.f32.mrf.mxu0
    %v3674 = vadd.f32 %v3661, %v3673
    %v3675 = vpop.f32.mrf.mxu0
    %3676 = vdwg.mxu0
    %3677 = vmatpush.bf16.msra.mxu0 %v3353
    %3678 = vmatpush.bf16.msra.mxu0 %v3351
    %3679 = vmatpush.bf16.msra.mxu0 %v3349
    %3680 = vmatpush.bf16.msra.mxu0 %v3347
    %3681 = vmatpush.bf16.msra.mxu0 %v3345
    %3682 = vmatpush.bf16.msra.mxu0 %v3343
    %3683 = vmatpush.bf16.msra.mxu0 %v3341
    %3684 = vmatpush.bf16.msra.mxu0 %v3339
    %3685 = vmatmul.bf16.gmra.mxu0 %v2707
    %v3686 = vpop.f32.mrf.mxu0
    %v3687 = vadd.f32 %v3674, %v3686
    %v3688 = vpop.f32.mrf.mxu0
    %3689 = vdwg.mxu0
    %v3690 = vmul.f32 %v3583, 0.5
    %v3691 = vmul.f32 %v3687, 0.5
    %v3692 = vtanh.pop %v3690
    %v3693 = vtanh.pop %v3691
    %v3694 = vadd.f32 %v3692, 1.0
    %v3695 = vadd.f32 %v3693, 1.0
    %v3696 = vmul.f32 %v3694, 0.5
    %v3697 = vmul.f32 %v3695, 0.5
    %3698 = vst [vmem:[#allocation16] sm:$0xff] %v3696
    %3699 = vst [vmem:[#allocation16 + $0x8] sm:$0xff] %v3697
    // Predicated region
    $region70: #{tpu_custom_call.1} parent=1 // pred_check
      _
    $region71: #{tpu_custom_call.1} parent=1 // pred_check_branch
      %3701 = sbr.rel (0) target = $region73
    $region72: #{tpu_custom_call.1} parent=1 // pred_region
      %3703 = vsyncadd [#allocation4], 0
      %s3705 = sshll.u32 [#allocation16], 4
      %s3706 = int_to_ptr.vmem [resolvable:$true] %s3705
      %s3707 = sshll.u32 %s9, 4
      %s3708 = int_to_ptr.hbm [resolvable:$true] %s3707
      %3710 = dma.vmem_to_hbm [thread:$0]  %s3706, 256, %s3708, [#allocation4]
    $region73: #{tpu_custom_call.1} parent=1 // pred_fallthru
      _
    // Predicated region
    $region74: #{tpu_custom_call.1} parent=1 // pred_check
      _
    $region75: #{tpu_custom_call.1} parent=1 // pred_check_branch
      %3712 = sbr.rel (0) target = $region77
    $region76: #{tpu_custom_call.1} parent=1 // pred_region
      %3714 = dma.done [#allocation4], 256
    $region77: #{tpu_custom_call.1} parent=1 // pred_fallthru
      _
    %3715 = vsyncpa [#allocation3], 1
    %3716 = vsyncpa [#allocation6], 1
    %3717 = vsyncpa [#allocation9], 1
    %3718 = vsyncpa [#allocation12], 1
    %3719 = vsyncpa [#allocation15], 1
    %3720 = vsyncpa [#allocation4], 1

</llo_original>
